<compile_context>
chip_gen: v5e
topology: v5e:2x2
jax: 0.10.0
libtpu: 0.0.40
codegen_flags: <defaults>
</compile_context>

<pallas_src>
import jax
import jax.numpy as jnp
from jax import lax
from jax.experimental import pallas as pl
from jax.experimental.pallas import tpu as pltpu

FEAT_C = 1024              # GoogLeNet inception5b output channels
N_CLASSES = 1000           # GoogLeNet fc: nn.Linear(1024, 1000)
N_CLASSES_PAD = 1024       # lane-dense padded class axis (multiple of 128)
MAX_BATCH_TILE = 128       # upper bound on rows per grid step
MAX_FEAT_BLOCK_BYTES = 8 << 20   # per-buffer bf16 feature-block budget


def head_l2_kernel(feat_ref, w_ref, b_ref, o_ref):
    """Fused: global-avg-pool -> Linear(1024,1000)+bias -> L2 normalize (dim 1).

    feat_ref: [TB, HW, C]  bf16 VMEM   (C on lanes)
    w_ref   : [C, CP]      bf16 VMEM   (CP = 1024, zero-padded cols)
    b_ref   : [1, CP]      f32  VMEM   (zero-padded tail)
    o_ref   : [TB, CP]     f32  VMEM
    """
    # AdaptiveAvgPool2d(1): mean over spatial, accumulated in f32
    # (sublane reduce; C=1024 stays on the lane axis).
    pooled = jnp.mean(feat_ref[...].astype(jnp.float32), axis=1)      # [TB, C]
    # MXU matmul in bf16 with f32 accumulation.
    logits = jnp.dot(pooled.astype(jnp.bfloat16), w_ref[...],
                     preferred_element_type=jnp.float32)              # [TB, CP]
    logits = logits + b_ref[...]                                      # bias
    # output /= output.pow(2).sum(1, keepdim=True).sqrt()
    # Padded class columns are exactly zero, so the norm is unchanged.  As in
    # the PyTorch reference there is no epsilon (an all-zero row would NaN);
    # padded batch rows carry the (nonzero) bias, so they stay finite.
    sumsq = jnp.sum(logits * logits, axis=-1, keepdims=True)          # [TB, 1]
    o_ref[...] = logits * lax.rsqrt(sumsq)


def _round_up(x, m):
    return ((x + m - 1) // m) * m


def _pick_batch_tile(n, hw):
    """Batch-tile: big enough to amortize per-step overhead and fill the MXU
    LHS, small enough to (a) keep >= 2 grid steps (both v7x TensorCores busy
    under "parallel") and (b) keep the double-buffered bf16 feature block
    inside the VMEM budget on every TPU generation."""
    n8 = _round_up(max(n, 1), 8)
    half = max(8, _round_up(n8, 16) // 2)          # multiple of 8, ~n_pad/2
    tile = min(MAX_BATCH_TILE, half)
    per_row_bytes = hw * FEAT_C * 2                # one bf16 feature row
    max_rows = max(8, ((MAX_FEAT_BLOCK_BYTES // per_row_bytes) // 8) * 8)
    return min(tile, max_rows)


def embeddingnet_l2_head(features_nhwc, w, b, *, trim_classes=True):
    """features_nhwc: [N, H, W, 1024] channels-last feature map (any float
    dtype; pass bf16 so the in-wrapper cast is a no-op).
    w: [1024, 1000] fc weight (pre-transposed, i.e. logits = x @ w + b);
    b: [1000].

    Returns the PyTorch-shaped [N, 1000] embedding if trim_classes=True, else
    the lane-dense zero-padded [N, 1024] unit-norm embedding (skips the
    strided class-dim slice for lane-dense consumers)."""
    n, h, ww, c = features_nhwc.shape
    assert c == FEAT_C
    hw = h * ww

    # Channels-last -> [N, HW, C] is a free contiguous reshape (no transpose).
    feat = features_nhwc.reshape(n, hw, c)
    if feat.dtype != jnp.bfloat16:
        feat = feat.astype(jnp.bfloat16)   # cast once; ideally done by producer

    tile = _pick_batch_tile(n, hw)
    # Pad to a whole number of tiles with at least 2 grid steps (v7x megacore).
    n_pad = max(_round_up(n, tile), 2 * tile)
    if n_pad != n:
        feat = jnp.pad(feat, ((0, n_pad - n), (0, 0), (0, 0)))

    # Zero-pad class axis 1000 -> 1024; weight to bf16 for the MXU (once here).
    pad_c = N_CLASSES_PAD - N_CLASSES
    w_p = jnp.pad(w.astype(jnp.float32), ((0, 0), (0, pad_c))).astype(jnp.bfloat16)
    b_p = jnp.pad(b.astype(jnp.float32), (0, pad_c)).reshape(1, N_CLASSES_PAD)

    grid = (n_pad // tile,)

    # Explicit VMEM budget: double-buffered feature/weight/output blocks plus
    # headroom.  Floor of 32 MiB (above v5e's 16 MiB default scoped limit),
    # cap of 48 MiB (safe under v7x's 64 MiB physical VMEM).
    feat_block = tile * hw * FEAT_C * 2
    w_block = FEAT_C * N_CLASSES_PAD * 2
    out_block = tile * N_CLASSES_PAD * 4
    vmem_limit = 2 * (feat_block + w_block + out_block) + (8 << 20)
    vmem_limit = min(max(vmem_limit, 32 << 20), 48 << 20)

    out = pl.pallas_call(
        head_l2_kernel,
        out_shape=jax.ShapeDtypeStruct((n_pad, N_CLASSES_PAD), jnp.float32),
        grid=grid,
        in_specs=[
            pl.BlockSpec((tile, hw, FEAT_C), lambda i: (i, 0, 0)),
            # Grid-invariant blocks: fetched once, resident across the grid.
            pl.BlockSpec((FEAT_C, N_CLASSES_PAD), lambda i: (0, 0)),
            pl.BlockSpec((1, N_CLASSES_PAD), lambda i: (0, 0)),
        ],
        out_specs=pl.BlockSpec((tile, N_CLASSES_PAD), lambda i: (i, 0)),
        compiler_params=pltpu.CompilerParams(
            dimension_semantics=("parallel",),
            vmem_limit_bytes=vmem_limit),
    )(feat, w_p, b_p)

    if trim_classes:
        return out[:n, :N_CLASSES]
    return out[:n]


def reference(features_nhwc, w, b):
    """Pure-JAX f32 reference of the same head + L2 normalization."""
    n, h, ww, c = features_nhwc.shape
    pooled = jnp.mean(
        features_nhwc.reshape(n, h * ww, c).astype(jnp.float32), axis=1)
    logits = pooled @ w + b
    return logits / jnp.sqrt(jnp.sum(logits * logits, axis=1, keepdims=True))


if __name__ == "__main__":
    key = jax.random.PRNGKey(0)
    k_feat, k_w, k_b = jax.random.split(key, 3)

    # Small, module-consistent shapes: batch=2, 1024-channel channels-last
    # feature map, 4x4 spatial (what inception5b yields for a small image).
    N, H, W = 2, 4, 4
    features = jax.random.normal(k_feat, (N, H, W, FEAT_C), dtype=jnp.float32)

    # Deterministic synthetic parameters for the fc (1024 -> 1000).
    w = jax.random.normal(k_w, (FEAT_C, N_CLASSES), dtype=jnp.float32) * 0.02
    b = jax.random.normal(k_b, (N_CLASSES,), dtype=jnp.float32) * 0.01

    out = embeddingnet_l2_head(features, w, b)                     # [N, 1000]
    out = jax.block_until_ready(out)
    out_padded = embeddingnet_l2_head(features, w, b, trim_classes=False)
    out_padded = jax.block_until_ready(out_padded)

    ref = reference(features, w, b)
    assert out.shape == (N, N_CLASSES)
    assert out_padded.shape == (N, N_CLASSES_PAD)
    assert bool(jnp.all(jnp.isfinite(out)))
    # Padded class columns are exactly zero (lane-dense output, norm unchanged).
    assert bool(jnp.all(out_padded[:, N_CLASSES:] == 0.0))
    # Unit L2 norm along dim 1 (normalization is f32 in-kernel).
    norms = jnp.sqrt(jnp.sum(out * out, axis=1))
    assert bool(jnp.allclose(norms, 1.0, atol=1e-5))
    # Close to the f32 reference (bf16 features + bf16 fc weight on the MXU).
    assert bool(jnp.allclose(out, ref, atol=5e-3, rtol=5e-2))

    print("KERNEL_OK")
</pallas_src>

<mosaic_0001>
module attributes {stable_mosaic.version = 11 : i64} {
  func.func @head_l2_kernel(%arg0: i32, %arg1: memref<8x16x1024xbf16, #tpu.memory_space<vmem>>, %arg2: memref<1024x1024xbf16, #tpu.memory_space<vmem>>, %arg3: memref<1x1024xf32, #tpu.memory_space<vmem>>, %arg4: memref<8x1024xf32, #tpu.memory_space<vmem>>) attributes {dimension_semantics = [#tpu.dimension_semantics<parallel>], iteration_bounds = array<i64: 2>, scalar_prefetch = 0 : i64, scratch_operands = 0 : i64, tpu.core_type = #tpu.core_type<tc>, window_params = [{transform_indices = @transform_0, window_bounds = array<i64: 8, 16, 1024>}, {pipeline_mode = #tpu.pipeline_mode<synchronous>, transform_indices = @transform_1, window_bounds = array<i64: 1024, 1024>}, {pipeline_mode = #tpu.pipeline_mode<synchronous>, transform_indices = @transform_2, window_bounds = array<i64: 1, 1024>}, {transform_indices = @transform_3, window_bounds = array<i64: 8, 1024>}]} {
    %c0 = arith.constant 0 : index
    %c0_0 = arith.constant 0 : index
    %c0_1 = arith.constant 0 : index
    %0 = vector.load %arg1[%c0, %c0_0, %c0_1] : memref<8x16x1024xbf16, #tpu.memory_space<vmem>>, vector<8x16x1024xbf16>
    %1 = arith.extf %0 : vector<8x16x1024xbf16> to vector<8x16x1024xf32>
    %cst = arith.constant dense<0.000000e+00> : vector<8x1024xf32>
    %2 = vector.multi_reduction <add>, %1, %cst [1] : vector<8x16x1024xf32> to vector<8x1024xf32>
    %cst_2 = arith.constant 1.600000e+01 : f32
    %3 = vector.broadcast %cst_2 : f32 to vector<8x1024xf32>
    %4 = arith.divf %2, %3 : vector<8x1024xf32>
    %5 = arith.truncf %4 : vector<8x1024xf32> to vector<8x1024xbf16>
    %c0_3 = arith.constant 0 : index
    %c0_4 = arith.constant 0 : index
    %6 = vector.load %arg2[%c0_3, %c0_4] : memref<1024x1024xbf16, #tpu.memory_space<vmem>>, vector<1024x1024xbf16>
    %cst_5 = arith.constant dense<0.000000e+00> : vector<8x1024xf32>
    %7 = tpu.matmul %5, %6, %cst_5 {dimension_numbers = #tpu.dot_dimension_numbers<[1], [0], [0], [1], [0, 0, 1, 1], [], []>} : vector<8x1024xbf16>, vector<1024x1024xbf16>, vector<8x1024xf32> -> vector<8x1024xf32>
    %c0_6 = arith.constant 0 : index
    %c0_7 = arith.constant 0 : index
    %8 = vector.load %arg3[%c0_6, %c0_7] : memref<1x1024xf32, #tpu.memory_space<vmem>>, vector<1x1024xf32>
    %9 = vector.broadcast %8 : vector<1x1024xf32> to vector<8x1024xf32>
    %10 = arith.addf %7, %9 : vector<8x1024xf32>
    %11 = arith.mulf %10, %10 : vector<8x1024xf32>
    %cst_8 = arith.constant dense<0.000000e+00> : vector<8xf32>
    %12 = vector.multi_reduction <add>, %11, %cst_8 [1] : vector<8x1024xf32> to vector<8xf32>
    %13 = vector.shape_cast %12 : vector<8xf32> to vector<8x1xf32>
    %14 = math.rsqrt %13 : vector<8x1xf32>
    %15 = vector.broadcast %14 : vector<8x1xf32> to vector<8x1024xf32>
    %16 = arith.mulf %10, %15 : vector<8x1024xf32>
    %c0_9 = arith.constant 0 : index
    %c0_10 = arith.constant 0 : index
    %17 = vector.load %arg4[%c0_9, %c0_10] : memref<8x1024xf32, #tpu.memory_space<vmem>>, vector<8x1024xf32>
    tpu.vector_store %arg4[%c0_9, %c0_10], %16 {strides = array<i32>} : memref<8x1024xf32, #tpu.memory_space<vmem>>, vector<8x1024xf32>,
    return
  }
  func.func @transform_0(%arg0: i32) -> (i32, i32, i32) {
    %c0_i32 = arith.constant 0 : i32
    %c0_i32_0 = arith.constant 0 : i32
    %c0_i32_1 = arith.constant 0 : i32
    return %arg0, %c0_i32, %c0_i32_0 : i32, i32, i32
  }
  func.func @transform_1(%arg0: i32) -> (i32, i32) {
    %c0_i32 = arith.constant 0 : i32
    %c0_i32_0 = arith.constant 0 : i32
    %c0_i32_1 = arith.constant 0 : i32
    return %c0_i32, %c0_i32_0 : i32, i32
  }
  func.func @transform_2(%arg0: i32) -> (i32, i32) {
    %c0_i32 = arith.constant 0 : i32
    %c0_i32_0 = arith.constant 0 : i32
    %c0_i32_1 = arith.constant 0 : i32
    return %c0_i32, %c0_i32_0 : i32, i32
  }
  func.func @transform_3(%arg0: i32) -> (i32, i32) {
    %c0_i32 = arith.constant 0 : i32
    %c0_i32_0 = arith.constant 0 : i32
    return %arg0, %c0_i32 : i32, i32
  }
}

</mosaic_0001>

<llo_original>
// kernel: tpu_custom_call.1
$region0: #{tpu_custom_call.1}
  #allocation0 [shape = 'u32[]', space=smem, size = 0x4, offset = 0x4, fixed_abs, tag = 'smem constant byte address 0x4 - core index']
  #allocation1 [shape = 'u32[72,128]{1,0:T(1,128)}', space=vmem, size = 0x9000, scoped, tag = 'internal scratch']
  %s0 = inlined_call_operand.hbm [shape: bf16[16,16,1024], index: 0, kind: input, shape index: {}]
  %s1 = inlined_call_operand.hbm [shape: bf16[1024,1024], index: 1, kind: input, shape index: {}]
  %s2 = inlined_call_operand.hbm [shape: f32[1,1024], index: 2, kind: input, shape index: {}]
  %s3 = inlined_call_operand.hbm [shape: f32[16,1024], index: 3, kind: output, shape index: {}]
  %s4 = sld [smem:[#allocation0]]
  $region57: #{tpu_custom_call.1} parent=0
    _
  %s6 = ssub.s32 1, %s4
  %s7 = scalar_select 0, %s6, %s4
  $region1: #{tpu_custom_call.1} parent=0
    #allocation2 [shape = 'u8[524288]{0}', space=vmem, size = 0x80000, scoped, tag = 'input window, operand 0']
    #allocation3 [shape = 's32[2]{0}', space=sflag, size = 0x8, scoped, tag = 'scoped memory for tpu_custom_call.1']
    #allocation4 [shape = 's32[2]{0}', space=sflag, size = 0x8, scoped, tag = 'scoped memory for tpu_custom_call.1']
    #allocation5 [shape = 'u8[2097152]{0}', space=vmem, size = 0x200000, scoped, tag = 'input window, operand 1, single buffered']
    #allocation6 [shape = 's32[1]{0}', space=sflag, size = 0x4, scoped, tag = 'scoped memory for tpu_custom_call.1']
    #allocation7 [shape = 'u8[4096]{0}', space=vmem, size = 0x1000, scoped, tag = 'input window, operand 2, single buffered']
    #allocation8 [shape = 'u8[65536]{0}', space=vmem, size = 0x10000, scoped, tag = 'output window, operand 0']
    %8 = vsyncpa [#allocation3], 0
    %s9 = scalar_lea.sflag [#allocation3], 1
    %10 = vsyncpa %s9, 0
    %11 = vsyncpa [#allocation6], 0
    %12 = vsyncpa [#allocation4], 0
    %s13 = scalar_lea.sflag [#allocation4], 1
    %14 = vsyncpa %s13, 0
    loop: start=0, step=1, limit=4
    $region2: #{tpu_custom_call.1} parent=1 // loop_pre_header
      _
    $region3: #{tpu_custom_call.1} parent=1 // loop_header
      %s16 = sphi 0, %s20
      %p17 = scmp.ge.s32.totalorder %s16, 4
      %s26 = sphi 0, %s28
      %s29 = sphi 0, %s26
      %s30 = sphi 0, %s29
      %s46 = sphi 0, %s30
      %s50 = sphi 0, %s50
      %s52 = sphi 0, %s50
      %s53 = sphi 0, %s52
      %s67 = sphi 0, %s53
      %s71 = sphi 0, %s71
      %s73 = sphi 0, %s71
      %s74 = sphi 0, %s73
      %s88 = sphi 0, %s74
      %s94 = sphi 0, %s96
      %s97 = sphi 0, %s94
      %s98 = sphi 0, %s97
      %s114 = sphi 0, %s98
    $region4: #{tpu_custom_call.1} parent=1 // loop_header_branch
      %19 = sbr.rel (%p17) target = $region8
    $region5: #{tpu_custom_call.1} parent=1 // loop_body
      %s21 = ssub.s32 %s16, 1
      %s22 = ssub.s32 %s16, 2
      %s23 = sadd.s32 %s16, 1
      %s24 = ssub.s32 %s16, %s23
      %p25 = scmp.eq.s32.totalorder %s24, 0
      %s27 = sadd.s32 %s26, 1
      %s28 = scalar_select %p25, %s26, %s27
      %p31 = pneg %p25
      %p32 = scmp.eq.s32.totalorder %s16, 1
      %p33 = por %p31, %p32
      %p34 = scmp.ne.s32.totalorder %s26, %s29
      %p35 = scmp.eq.s32.totalorder %s16, 0
      %p36 = por %p34, %p35
      %p37 = scmp.ne.s32.totalorder %s26, %s29
      %p38 = scmp.eq.s32.totalorder %s21, 1
      %p39 = por %p37, %p38
      %p40 = scmp.ne.s32.totalorder %s29, %s30
      %p41 = scmp.eq.s32.totalorder %s21, 0
      %p42 = por %p40, %p41
      %p43 = scmp.ne.s32.totalorder %s29, %s30
      %p44 = scmp.eq.s32.totalorder %s22, 1
      %p45 = por %p43, %p44
      %p47 = scmp.ne.s32.totalorder %s30, %s46
      %p48 = scmp.eq.s32.totalorder %s22, 0
      %p49 = por %p47, %p48
      %s51 = sadd.s32 %s50, 1
      %p54 = scmp.eq.s32.totalorder %s16, 1
      %p55 = scmp.ne.s32.totalorder %s50, %s52
      %p56 = scmp.eq.s32.totalorder %s16, 0
      %p57 = por %p55, %p56
      %p58 = scmp.ne.s32.totalorder %s50, %s52
      %p59 = scmp.eq.s32.totalorder %s21, 1
      %p60 = por %p58, %p59
      %p61 = scmp.ne.s32.totalorder %s52, %s53
      %p62 = scmp.eq.s32.totalorder %s21, 0
      %p63 = por %p61, %p62
      %p64 = scmp.ne.s32.totalorder %s52, %s53
      %p65 = scmp.eq.s32.totalorder %s22, 1
      %p66 = por %p64, %p65
      %p68 = scmp.ne.s32.totalorder %s53, %s67
      %p69 = scmp.eq.s32.totalorder %s22, 0
      %p70 = por %p68, %p69
      %s72 = sadd.s32 %s71, 1
      %p75 = scmp.eq.s32.totalorder %s16, 1
      %p76 = scmp.ne.s32.totalorder %s71, %s73
      %p77 = scmp.eq.s32.totalorder %s16, 0
      %p78 = por %p76, %p77
      %p79 = scmp.ne.s32.totalorder %s71, %s73
      %p80 = scmp.eq.s32.totalorder %s21, 1
      %p81 = por %p79, %p80
      %p82 = scmp.ne.s32.totalorder %s73, %s74
      %p83 = scmp.eq.s32.totalorder %s21, 0
      %p84 = por %p82, %p83
      %p85 = scmp.ne.s32.totalorder %s73, %s74
      %p86 = scmp.eq.s32.totalorder %s22, 1
      %p87 = por %p85, %p86
      %p89 = scmp.ne.s32.totalorder %s74, %s88
      %p90 = scmp.eq.s32.totalorder %s22, 0
      %p91 = por %p89, %p90
      %s92 = ssub.s32 %s16, %s23
      %p93 = scmp.eq.s32.totalorder %s92, 0
      %s95 = sadd.s32 %s94, 1
      %s96 = scalar_select %p93, %s94, %s95
      %p99 = pneg %p93
      %p100 = scmp.eq.s32.totalorder %s16, 1
      %p101 = por %p99, %p100
      %p102 = scmp.ne.s32.totalorder %s94, %s97
      %p103 = scmp.eq.s32.totalorder %s16, 0
      %p104 = por %p102, %p103
      %p105 = scmp.ne.s32.totalorder %s94, %s97
      %p106 = scmp.eq.s32.totalorder %s21, 1
      %p107 = por %p105, %p106
      %p108 = scmp.ne.s32.totalorder %s97, %s98
      %p109 = scmp.eq.s32.totalorder %s21, 0
      %p110 = por %p108, %p109
      %p111 = scmp.ne.s32.totalorder %s97, %s98
      %p112 = scmp.eq.s32.totalorder %s22, 1
      %p113 = por %p111, %p112
      %p115 = scmp.ne.s32.totalorder %s98, %s114
      %p116 = scmp.eq.s32.totalorder %s22, 0
      %p117 = por %p115, %p116
      %p118 = scmp.le.s32.totalorder 1, %s16
      %p119 = scmp.lt.s32.totalorder %s16, 3
      %p120 = pnand %p118, %p119
      %p121 = pneg %p120
      // Predicated region
      $region9: #{tpu_custom_call.1} parent=5 // pred_check
        _
      $region10: #{tpu_custom_call.1} parent=5 // pred_check_branch
        %123 = sbr.rel (%p120) target = $region12
      $region11: #{tpu_custom_call.1} parent=5 // pred_region
        %s124 = ssub.s32 %s16, 1
        // Predicated region
        $region13: #{tpu_custom_call.1} parent=11 // pred_check
          %p125 = pneg %p63
        $region14: #{tpu_custom_call.1} parent=11 // pred_check_branch
          %127 = sbr.rel (%p125) target = $region16
        $region15: #{tpu_custom_call.1} parent=11 // pred_region
          %129 = vsyncadd [#allocation6], 0
          %s130 = sshll.u32 %s1, 4
          %s131 = int_to_ptr.hbm [resolvable:$true] %s130
          %s132 = sshll.u32 [#allocation5], 4
          %s133 = int_to_ptr.vmem [resolvable:$true] %s132
          %138 = dma.hbm_to_vmem [thread:$0]  %s131, 65536, %s133, [#allocation6], 512, 512, 32
        $region16: #{tpu_custom_call.1} parent=11 // pred_fallthru
          _
        // Predicated region
        $region17: #{tpu_custom_call.1} parent=11 // pred_check
          %p139 = pneg %p84
        $region18: #{tpu_custom_call.1} parent=11 // pred_check_branch
          %141 = sbr.rel (%p139) target = $region20
        $region19: #{tpu_custom_call.1} parent=11 // pred_region
          %143 = vsyncadd [#allocation6], 0
          %s145 = sshll.u32 %s2, 4
          %s146 = int_to_ptr.hbm [resolvable:$true] %s145
          %s147 = sshll.u32 [#allocation7], 4
          %s148 = int_to_ptr.vmem [resolvable:$true] %s147
          %150 = dma.hbm_to_vmem [thread:$0]  %s146, 128, %s148, [#allocation6]
        $region20: #{tpu_custom_call.1} parent=11 // pred_fallthru
          _
      $region12: #{tpu_custom_call.1} parent=5 // pred_fallthru
        _
      %p151 = scmp.lt.s32.totalorder %s16, 2
      // Predicated region
      $region21: #{tpu_custom_call.1} parent=5 // pred_check
        %p152 = pneg %p151
      $region22: #{tpu_custom_call.1} parent=5 // pred_check_branch
        %154 = sbr.rel (%p152) target = $region24
      $region23: #{tpu_custom_call.1} parent=5 // pred_region
        // Predicated region
        $region25: #{tpu_custom_call.1} parent=23 // pred_check
          %p155 = pneg %p36
        $region26: #{tpu_custom_call.1} parent=23 // pred_check_branch
          %157 = sbr.rel (%p155) target = $region28
        $region27: #{tpu_custom_call.1} parent=23 // pred_region
          %s158 = sand.u32 %s26, 1
          %s159 = scalar_lea.sflag [#allocation3], %s158
          %s160 = sand.u32 %s26, 1
          %s161 = smul.addr %s160, 512
          %s162 = scalar_lea.vmem [#allocation2], %s161
          %s163 = smul.u32 8, %s16
          %165 = vsyncadd %s159, 0
          %s166 = smul.addr %s163, 16
          %s167 = smul.addr %s166, 4
          %s168 = scalar_lea.hbm %s0, %s167
          %s169 = sshll.u32 %s168, 4
          %s170 = int_to_ptr.hbm [resolvable:$true] %s169
          %s171 = sshll.u32 %s162, 4
          %s172 = int_to_ptr.vmem [resolvable:$true] %s171
          %177 = dma.hbm_to_vmem [thread:$0]  %s170, 8192, %s172, %s159, 512, 512, 32
        $region28: #{tpu_custom_call.1} parent=23 // pred_fallthru
          _
      $region24: #{tpu_custom_call.1} parent=5 // pred_fallthru
        _
      %p178 = scmp.le.s32.totalorder 1, %s16
      %p179 = scmp.lt.s32.totalorder %s16, 3
      %p180 = pnand %p178, %p179
      %p181 = pneg %p180
      // Predicated region
      $region29: #{tpu_custom_call.1} parent=5 // pred_check
        _
      $region30: #{tpu_custom_call.1} parent=5 // pred_check_branch
        %183 = sbr.rel (%p180) target = $region32
      $region31: #{tpu_custom_call.1} parent=5 // pred_region
        %s184 = ssub.s32 %s16, 1
        %s185 = sand.u32 %s29, 1
        %s186 = scalar_lea.sflag [#allocation3], %s185
        %s187 = sand.u32 %s29, 1
        %s188 = smul.addr %s187, 512
        %s189 = scalar_lea.vmem [#allocation2], %s188
        // Predicated region
        $region33: #{tpu_custom_call.1} parent=31 // pred_check
          %p190 = pneg %p42
        $region34: #{tpu_custom_call.1} parent=31 // pred_check_branch
          %192 = sbr.rel (%p190) target = $region36
        $region35: #{tpu_custom_call.1} parent=31 // pred_region
          %194 = dma.done %s186, 8192
        $region36: #{tpu_custom_call.1} parent=31 // pred_fallthru
          _
        // Predicated region
        $region37: #{tpu_custom_call.1} parent=31 // pred_check
          %p195 = pneg %p63
        $region38: #{tpu_custom_call.1} parent=31 // pred_check_branch
          %197 = sbr.rel (%p195) target = $region40
        $region39: #{tpu_custom_call.1} parent=31 // pred_region
          %199 = dma.done [#allocation6], 65536
        $region40: #{tpu_custom_call.1} parent=31 // pred_fallthru
          _
        // Predicated region
        $region41: #{tpu_custom_call.1} parent=31 // pred_check
          %p200 = pneg %p84
        $region42: #{tpu_custom_call.1} parent=31 // pred_check_branch
          %202 = sbr.rel (%p200) target = $region44
        $region43: #{tpu_custom_call.1} parent=31 // pred_region
          %204 = dma.done [#allocation6], 128
        $region44: #{tpu_custom_call.1} parent=31 // pred_fallthru
          _
        %s205 = sand.u32 %s29, 1
        %s206 = scalar_lea.sflag [#allocation3], %s205
        %s207 = sand.u32 %s29, 1
        %s208 = smul.addr %s207, 512
        %s209 = scalar_lea.vmem [#allocation2], %s208
        %p210 = pneg %p42
        %p211 = pneg %p39
        %p212 = pneg %p63
        %p213 = pneg %p60
        %p214 = pneg %p84
        %p215 = pneg %p81
        %p216 = pneg %p110
        %p217 = pneg %p107
        %s218 = sand.u32 %s97, 1
        %s219 = scalar_lea.sflag [#allocation4], %s218
        %s220 = sand.u32 %s97, 1
        %s221 = smul.addr %s220, 64
        %s222 = scalar_lea.vmem [#allocation8], %s221
        %s223 = smul.u32 8, %s21
        %v224 = vld [vmem:[%s189] sm:$0xff]
        %v225 = vld [vmem:[%s189 + $0x8] sm:$0xff]
        %v226 = vld [vmem:[%s189 + $0x10] sm:$0xff]
        %v227 = vld [vmem:[%s189 + $0x18] sm:$0xff]
        %v228 = vld [vmem:[%s189 + $0x20] sm:$0xff]
        %v229 = vld [vmem:[%s189 + $0x28] sm:$0xff]
        %v230 = vld [vmem:[%s189 + $0x30] sm:$0xff]
        %v231 = vld [vmem:[%s189 + $0x38] sm:$0xff]
        %v232 = vld [vmem:[%s189 + $0x40] sm:$0xff]
        %v233 = vld [vmem:[%s189 + $0x48] sm:$0xff]
        %v234 = vld [vmem:[%s189 + $0x50] sm:$0xff]
        %v235 = vld [vmem:[%s189 + $0x58] sm:$0xff]
        %v236 = vld [vmem:[%s189 + $0x60] sm:$0xff]
        %v237 = vld [vmem:[%s189 + $0x68] sm:$0xff]
        %v238 = vld [vmem:[%s189 + $0x70] sm:$0xff]
        %v239 = vld [vmem:[%s189 + $0x78] sm:$0xff]
        %v240 = vld [vmem:[%s189 + $0x80] sm:$0xff]
        %v241 = vld [vmem:[%s189 + $0x88] sm:$0xff]
        %v242 = vld [vmem:[%s189 + $0x90] sm:$0xff]
        %v243 = vld [vmem:[%s189 + $0x98] sm:$0xff]
        %v244 = vld [vmem:[%s189 + $0xa0] sm:$0xff]
        %v245 = vld [vmem:[%s189 + $0xa8] sm:$0xff]
        %v246 = vld [vmem:[%s189 + $0xb0] sm:$0xff]
        %v247 = vld [vmem:[%s189 + $0xb8] sm:$0xff]
        %v248 = vld [vmem:[%s189 + $0xc0] sm:$0xff]
        %v249 = vld [vmem:[%s189 + $0xc8] sm:$0xff]
        %v250 = vld [vmem:[%s189 + $0xd0] sm:$0xff]
        %v251 = vld [vmem:[%s189 + $0xd8] sm:$0xff]
        %v252 = vld [vmem:[%s189 + $0xe0] sm:$0xff]
        %v253 = vld [vmem:[%s189 + $0xe8] sm:$0xff]
        %v254 = vld [vmem:[%s189 + $0xf0] sm:$0xff]
        %v255 = vld [vmem:[%s189 + $0xf8] sm:$0xff]
        %v256 = vld [vmem:[%s189 + $0x100] sm:$0xff]
        %v257 = vld [vmem:[%s189 + $0x108] sm:$0xff]
        %v258 = vld [vmem:[%s189 + $0x110] sm:$0xff]
        %v259 = vld [vmem:[%s189 + $0x118] sm:$0xff]
        %v260 = vld [vmem:[%s189 + $0x120] sm:$0xff]
        %v261 = vld [vmem:[%s189 + $0x128] sm:$0xff]
        %v262 = vld [vmem:[%s189 + $0x130] sm:$0xff]
        %v263 = vld [vmem:[%s189 + $0x138] sm:$0xff]
        %v264 = vld [vmem:[%s189 + $0x140] sm:$0xff]
        %v265 = vld [vmem:[%s189 + $0x148] sm:$0xff]
        %v266 = vld [vmem:[%s189 + $0x150] sm:$0xff]
        %v267 = vld [vmem:[%s189 + $0x158] sm:$0xff]
        %v268 = vld [vmem:[%s189 + $0x160] sm:$0xff]
        %v269 = vld [vmem:[%s189 + $0x168] sm:$0xff]
        %v270 = vld [vmem:[%s189 + $0x170] sm:$0xff]
        %v271 = vld [vmem:[%s189 + $0x178] sm:$0xff]
        %v272 = vld [vmem:[%s189 + $0x180] sm:$0xff]
        %v273 = vld [vmem:[%s189 + $0x188] sm:$0xff]
        %v274 = vld [vmem:[%s189 + $0x190] sm:$0xff]
        %v275 = vld [vmem:[%s189 + $0x198] sm:$0xff]
        %v276 = vld [vmem:[%s189 + $0x1a0] sm:$0xff]
        %v277 = vld [vmem:[%s189 + $0x1a8] sm:$0xff]
        %v278 = vld [vmem:[%s189 + $0x1b0] sm:$0xff]
        %v279 = vld [vmem:[%s189 + $0x1b8] sm:$0xff]
        %v280 = vld [vmem:[%s189 + $0x1c0] sm:$0xff]
        %v281 = vld [vmem:[%s189 + $0x1c8] sm:$0xff]
        %v282 = vld [vmem:[%s189 + $0x1d0] sm:$0xff]
        %v283 = vld [vmem:[%s189 + $0x1d8] sm:$0xff]
        %v284 = vld [vmem:[%s189 + $0x1e0] sm:$0xff]
        %v285 = vld [vmem:[%s189 + $0x1e8] sm:$0xff]
        %v286 = vld [vmem:[%s189 + $0x1f0] sm:$0xff]
        %v287 = vld [vmem:[%s189 + $0x1f8] sm:$0xff]
        %v288 = vunpack.c.l.bf16 %v224
        %v289 = vunpack.c.h.bf16 %v224
        %v290 = vunpack.c.l.bf16 %v225
        %v291 = vunpack.c.h.bf16 %v225
        %v292 = vunpack.c.l.bf16 %v226
        %v293 = vunpack.c.h.bf16 %v226
        %v294 = vunpack.c.l.bf16 %v227
        %v295 = vunpack.c.h.bf16 %v227
        %v296 = vunpack.c.l.bf16 %v228
        %v297 = vunpack.c.h.bf16 %v228
        %v298 = vunpack.c.l.bf16 %v229
        %v299 = vunpack.c.h.bf16 %v229
        %v300 = vunpack.c.l.bf16 %v230
        %v301 = vunpack.c.h.bf16 %v230
        %v302 = vunpack.c.l.bf16 %v231
        %v303 = vunpack.c.h.bf16 %v231
        %v304 = vunpack.c.l.bf16 %v232
        %v305 = vunpack.c.h.bf16 %v232
        %v306 = vunpack.c.l.bf16 %v233
        %v307 = vunpack.c.h.bf16 %v233
        %v308 = vunpack.c.l.bf16 %v234
        %v309 = vunpack.c.h.bf16 %v234
        %v310 = vunpack.c.l.bf16 %v235
        %v311 = vunpack.c.h.bf16 %v235
        %v312 = vunpack.c.l.bf16 %v236
        %v313 = vunpack.c.h.bf16 %v236
        %v314 = vunpack.c.l.bf16 %v237
        %v315 = vunpack.c.h.bf16 %v237
        %v316 = vunpack.c.l.bf16 %v238
        %v317 = vunpack.c.h.bf16 %v238
        %v318 = vunpack.c.l.bf16 %v239
        %v319 = vunpack.c.h.bf16 %v239
        %v320 = vunpack.c.l.bf16 %v240
        %v321 = vunpack.c.h.bf16 %v240
        %v322 = vunpack.c.l.bf16 %v241
        %v323 = vunpack.c.h.bf16 %v241
        %v324 = vunpack.c.l.bf16 %v242
        %v325 = vunpack.c.h.bf16 %v242
        %v326 = vunpack.c.l.bf16 %v243
        %v327 = vunpack.c.h.bf16 %v243
        %v328 = vunpack.c.l.bf16 %v244
        %v329 = vunpack.c.h.bf16 %v244
        %v330 = vunpack.c.l.bf16 %v245
        %v331 = vunpack.c.h.bf16 %v245
        %v332 = vunpack.c.l.bf16 %v246
        %v333 = vunpack.c.h.bf16 %v246
        %v334 = vunpack.c.l.bf16 %v247
        %v335 = vunpack.c.h.bf16 %v247
        %v336 = vunpack.c.l.bf16 %v248
        %v337 = vunpack.c.h.bf16 %v248
        %v338 = vunpack.c.l.bf16 %v249
        %v339 = vunpack.c.h.bf16 %v249
        %v340 = vunpack.c.l.bf16 %v250
        %v341 = vunpack.c.h.bf16 %v250
        %v342 = vunpack.c.l.bf16 %v251
        %v343 = vunpack.c.h.bf16 %v251
        %v344 = vunpack.c.l.bf16 %v252
        %v345 = vunpack.c.h.bf16 %v252
        %v346 = vunpack.c.l.bf16 %v253
        %v347 = vunpack.c.h.bf16 %v253
        %v348 = vunpack.c.l.bf16 %v254
        %v349 = vunpack.c.h.bf16 %v254
        %v350 = vunpack.c.l.bf16 %v255
        %v351 = vunpack.c.h.bf16 %v255
        %v352 = vunpack.c.l.bf16 %v256
        %v353 = vunpack.c.h.bf16 %v256
        %v354 = vunpack.c.l.bf16 %v257
        %v355 = vunpack.c.h.bf16 %v257
        %v356 = vunpack.c.l.bf16 %v258
        %v357 = vunpack.c.h.bf16 %v258
        %v358 = vunpack.c.l.bf16 %v259
        %v359 = vunpack.c.h.bf16 %v259
        %v360 = vunpack.c.l.bf16 %v260
        %v361 = vunpack.c.h.bf16 %v260
        %v362 = vunpack.c.l.bf16 %v261
        %v363 = vunpack.c.h.bf16 %v261
        %v364 = vunpack.c.l.bf16 %v262
        %v365 = vunpack.c.h.bf16 %v262
        %v366 = vunpack.c.l.bf16 %v263
        %v367 = vunpack.c.h.bf16 %v263
        %v368 = vunpack.c.l.bf16 %v264
        %v369 = vunpack.c.h.bf16 %v264
        %v370 = vunpack.c.l.bf16 %v265
        %v371 = vunpack.c.h.bf16 %v265
        %v372 = vunpack.c.l.bf16 %v266
        %v373 = vunpack.c.h.bf16 %v266
        %v374 = vunpack.c.l.bf16 %v267
        %v375 = vunpack.c.h.bf16 %v267
        %v376 = vunpack.c.l.bf16 %v268
        %v377 = vunpack.c.h.bf16 %v268
        %v378 = vunpack.c.l.bf16 %v269
        %v379 = vunpack.c.h.bf16 %v269
        %v380 = vunpack.c.l.bf16 %v270
        %v381 = vunpack.c.h.bf16 %v270
        %v382 = vunpack.c.l.bf16 %v271
        %v383 = vunpack.c.h.bf16 %v271
        %v384 = vunpack.c.l.bf16 %v272
        %v385 = vunpack.c.h.bf16 %v272
        %v386 = vunpack.c.l.bf16 %v273
        %v387 = vunpack.c.h.bf16 %v273
        %v388 = vunpack.c.l.bf16 %v274
        %v389 = vunpack.c.h.bf16 %v274
        %v390 = vunpack.c.l.bf16 %v275
        %v391 = vunpack.c.h.bf16 %v275
        %v392 = vunpack.c.l.bf16 %v276
        %v393 = vunpack.c.h.bf16 %v276
        %v394 = vunpack.c.l.bf16 %v277
        %v395 = vunpack.c.h.bf16 %v277
        %v396 = vunpack.c.l.bf16 %v278
        %v397 = vunpack.c.h.bf16 %v278
        %v398 = vunpack.c.l.bf16 %v279
        %v399 = vunpack.c.h.bf16 %v279
        %v400 = vunpack.c.l.bf16 %v280
        %v401 = vunpack.c.h.bf16 %v280
        %v402 = vunpack.c.l.bf16 %v281
        %v403 = vunpack.c.h.bf16 %v281
        %v404 = vunpack.c.l.bf16 %v282
        %v405 = vunpack.c.h.bf16 %v282
        %v406 = vunpack.c.l.bf16 %v283
        %v407 = vunpack.c.h.bf16 %v283
        %v408 = vunpack.c.l.bf16 %v284
        %v409 = vunpack.c.h.bf16 %v284
        %v410 = vunpack.c.l.bf16 %v285
        %v411 = vunpack.c.h.bf16 %v285
        %v412 = vunpack.c.l.bf16 %v286
        %v413 = vunpack.c.h.bf16 %v286
        %v414 = vunpack.c.l.bf16 %v287
        %v415 = vunpack.c.h.bf16 %v287
        %v416 = vadd.f32 %v288, %v296
        %v417 = vrot.slane %v416, 4
        %v418 = vadd.f32 %v416, %v417
        %v419 = vrot.slane %v418, 2
        %v420 = vadd.f32 %v418, %v419
        %v421 = vrot.slane %v420, 1
        %v422 = vadd.f32 %v420, %v421
        %v423 = vadd.f32 %v289, %v297
        %v424 = vrot.slane %v423, 4
        %v425 = vadd.f32 %v423, %v424
        %v426 = vrot.slane %v425, 2
        %v427 = vadd.f32 %v425, %v426
        %v428 = vrot.slane %v427, 1
        %v429 = vadd.f32 %v427, %v428
        %v430 = vadd.f32 %v290, %v298
        %v431 = vrot.slane %v430, 4
        %v432 = vadd.f32 %v430, %v431
        %v433 = vrot.slane %v432, 2
        %v434 = vadd.f32 %v432, %v433
        %v435 = vrot.slane %v434, 1
        %v436 = vadd.f32 %v434, %v435
        %v437 = vadd.f32 %v291, %v299
        %v438 = vrot.slane %v437, 4
        %v439 = vadd.f32 %v437, %v438
        %v440 = vrot.slane %v439, 2
        %v441 = vadd.f32 %v439, %v440
        %v442 = vrot.slane %v441, 1
        %v443 = vadd.f32 %v441, %v442
        %v444 = vadd.f32 %v292, %v300
        %v445 = vrot.slane %v444, 4
        %v446 = vadd.f32 %v444, %v445
        %v447 = vrot.slane %v446, 2
        %v448 = vadd.f32 %v446, %v447
        %v449 = vrot.slane %v448, 1
        %v450 = vadd.f32 %v448, %v449
        %v451 = vadd.f32 %v293, %v301
        %v452 = vrot.slane %v451, 4
        %v453 = vadd.f32 %v451, %v452
        %v454 = vrot.slane %v453, 2
        %v455 = vadd.f32 %v453, %v454
        %v456 = vrot.slane %v455, 1
        %v457 = vadd.f32 %v455, %v456
        %v458 = vadd.f32 %v294, %v302
        %v459 = vrot.slane %v458, 4
        %v460 = vadd.f32 %v458, %v459
        %v461 = vrot.slane %v460, 2
        %v462 = vadd.f32 %v460, %v461
        %v463 = vrot.slane %v462, 1
        %v464 = vadd.f32 %v462, %v463
        %v465 = vadd.f32 %v295, %v303
        %v466 = vrot.slane %v465, 4
        %v467 = vadd.f32 %v465, %v466
        %v468 = vrot.slane %v467, 2
        %v469 = vadd.f32 %v467, %v468
        %v470 = vrot.slane %v469, 1
        %v471 = vadd.f32 %v469, %v470
        %v472 = vadd.f32 %v304, %v312
        %v473 = vrot.slane %v472, 4
        %v474 = vadd.f32 %v472, %v473
        %v475 = vrot.slane %v474, 2
        %v476 = vadd.f32 %v474, %v475
        %v477 = vrot.slane %v476, 1
        %v478 = vadd.f32 %v476, %v477
        %v479 = vadd.f32 %v305, %v313
        %v480 = vrot.slane %v479, 4
        %v481 = vadd.f32 %v479, %v480
        %v482 = vrot.slane %v481, 2
        %v483 = vadd.f32 %v481, %v482
        %v484 = vrot.slane %v483, 1
        %v485 = vadd.f32 %v483, %v484
        %v486 = vadd.f32 %v306, %v314
        %v487 = vrot.slane %v486, 4
        %v488 = vadd.f32 %v486, %v487
        %v489 = vrot.slane %v488, 2
        %v490 = vadd.f32 %v488, %v489
        %v491 = vrot.slane %v490, 1
        %v492 = vadd.f32 %v490, %v491
        %v493 = vadd.f32 %v307, %v315
        %v494 = vrot.slane %v493, 4
        %v495 = vadd.f32 %v493, %v494
        %v496 = vrot.slane %v495, 2
        %v497 = vadd.f32 %v495, %v496
        %v498 = vrot.slane %v497, 1
        %v499 = vadd.f32 %v497, %v498
        %v500 = vadd.f32 %v308, %v316
        %v501 = vrot.slane %v500, 4
        %v502 = vadd.f32 %v500, %v501
        %v503 = vrot.slane %v502, 2
        %v504 = vadd.f32 %v502, %v503
        %v505 = vrot.slane %v504, 1
        %v506 = vadd.f32 %v504, %v505
        %v507 = vadd.f32 %v309, %v317
        %v508 = vrot.slane %v507, 4
        %v509 = vadd.f32 %v507, %v508
        %v510 = vrot.slane %v509, 2
        %v511 = vadd.f32 %v509, %v510
        %v512 = vrot.slane %v511, 1
        %v513 = vadd.f32 %v511, %v512
        %v514 = vadd.f32 %v310, %v318
        %v515 = vrot.slane %v514, 4
        %v516 = vadd.f32 %v514, %v515
        %v517 = vrot.slane %v516, 2
        %v518 = vadd.f32 %v516, %v517
        %v519 = vrot.slane %v518, 1
        %v520 = vadd.f32 %v518, %v519
        %v521 = vadd.f32 %v311, %v319
        %v522 = vrot.slane %v521, 4
        %v523 = vadd.f32 %v521, %v522
        %v524 = vrot.slane %v523, 2
        %v525 = vadd.f32 %v523, %v524
        %v526 = vrot.slane %v525, 1
        %v527 = vadd.f32 %v525, %v526
        %v528 = vadd.f32 %v320, %v328
        %v529 = vrot.slane %v528, 4
        %v530 = vadd.f32 %v528, %v529
        %v531 = vrot.slane %v530, 2
        %v532 = vadd.f32 %v530, %v531
        %v533 = vrot.slane %v532, 1
        %v534 = vadd.f32 %v532, %v533
        %v535 = vadd.f32 %v321, %v329
        %v536 = vrot.slane %v535, 4
        %v537 = vadd.f32 %v535, %v536
        %v538 = vrot.slane %v537, 2
        %v539 = vadd.f32 %v537, %v538
        %v540 = vrot.slane %v539, 1
        %v541 = vadd.f32 %v539, %v540
        %v542 = vadd.f32 %v322, %v330
        %v543 = vrot.slane %v542, 4
        %v544 = vadd.f32 %v542, %v543
        %v545 = vrot.slane %v544, 2
        %v546 = vadd.f32 %v544, %v545
        %v547 = vrot.slane %v546, 1
        %v548 = vadd.f32 %v546, %v547
        %v549 = vadd.f32 %v323, %v331
        %v550 = vrot.slane %v549, 4
        %v551 = vadd.f32 %v549, %v550
        %v552 = vrot.slane %v551, 2
        %v553 = vadd.f32 %v551, %v552
        %v554 = vrot.slane %v553, 1
        %v555 = vadd.f32 %v553, %v554
        %v556 = vadd.f32 %v324, %v332
        %v557 = vrot.slane %v556, 4
        %v558 = vadd.f32 %v556, %v557
        %v559 = vrot.slane %v558, 2
        %v560 = vadd.f32 %v558, %v559
        %v561 = vrot.slane %v560, 1
        %v562 = vadd.f32 %v560, %v561
        %v563 = vadd.f32 %v325, %v333
        %v564 = vrot.slane %v563, 4
        %v565 = vadd.f32 %v563, %v564
        %v566 = vrot.slane %v565, 2
        %v567 = vadd.f32 %v565, %v566
        %v568 = vrot.slane %v567, 1
        %v569 = vadd.f32 %v567, %v568
        %v570 = vadd.f32 %v326, %v334
        %v571 = vrot.slane %v570, 4
        %v572 = vadd.f32 %v570, %v571
        %v573 = vrot.slane %v572, 2
        %v574 = vadd.f32 %v572, %v573
        %v575 = vrot.slane %v574, 1
        %v576 = vadd.f32 %v574, %v575
        %v577 = vadd.f32 %v327, %v335
        %v578 = vrot.slane %v577, 4
        %v579 = vadd.f32 %v577, %v578
        %v580 = vrot.slane %v579, 2
        %v581 = vadd.f32 %v579, %v580
        %v582 = vrot.slane %v581, 1
        %v583 = vadd.f32 %v581, %v582
        %v584 = vadd.f32 %v336, %v344
        %v585 = vrot.slane %v584, 4
        %v586 = vadd.f32 %v584, %v585
        %v587 = vrot.slane %v586, 2
        %v588 = vadd.f32 %v586, %v587
        %v589 = vrot.slane %v588, 1
        %v590 = vadd.f32 %v588, %v589
        %v591 = vadd.f32 %v337, %v345
        %v592 = vrot.slane %v591, 4
        %v593 = vadd.f32 %v591, %v592
        %v594 = vrot.slane %v593, 2
        %v595 = vadd.f32 %v593, %v594
        %v596 = vrot.slane %v595, 1
        %v597 = vadd.f32 %v595, %v596
        %v598 = vadd.f32 %v338, %v346
        %v599 = vrot.slane %v598, 4
        %v600 = vadd.f32 %v598, %v599
        %v601 = vrot.slane %v600, 2
        %v602 = vadd.f32 %v600, %v601
        %v603 = vrot.slane %v602, 1
        %v604 = vadd.f32 %v602, %v603
        %v605 = vadd.f32 %v339, %v347
        %v606 = vrot.slane %v605, 4
        %v607 = vadd.f32 %v605, %v606
        %v608 = vrot.slane %v607, 2
        %v609 = vadd.f32 %v607, %v608
        %v610 = vrot.slane %v609, 1
        %v611 = vadd.f32 %v609, %v610
        %v612 = vadd.f32 %v340, %v348
        %v613 = vrot.slane %v612, 4
        %v614 = vadd.f32 %v612, %v613
        %v615 = vrot.slane %v614, 2
        %v616 = vadd.f32 %v614, %v615
        %v617 = vrot.slane %v616, 1
        %v618 = vadd.f32 %v616, %v617
        %v619 = vadd.f32 %v341, %v349
        %v620 = vrot.slane %v619, 4
        %v621 = vadd.f32 %v619, %v620
        %v622 = vrot.slane %v621, 2
        %v623 = vadd.f32 %v621, %v622
        %v624 = vrot.slane %v623, 1
        %v625 = vadd.f32 %v623, %v624
        %v626 = vadd.f32 %v342, %v350
        %v627 = vrot.slane %v626, 4
        %v628 = vadd.f32 %v626, %v627
        %v629 = vrot.slane %v628, 2
        %v630 = vadd.f32 %v628, %v629
        %v631 = vrot.slane %v630, 1
        %v632 = vadd.f32 %v630, %v631
        %v633 = vadd.f32 %v343, %v351
        %v634 = vrot.slane %v633, 4
        %v635 = vadd.f32 %v633, %v634
        %v636 = vrot.slane %v635, 2
        %v637 = vadd.f32 %v635, %v636
        %v638 = vrot.slane %v637, 1
        %v639 = vadd.f32 %v637, %v638
        %v640 = vadd.f32 %v352, %v360
        %v641 = vrot.slane %v640, 4
        %v642 = vadd.f32 %v640, %v641
        %v643 = vrot.slane %v642, 2
        %v644 = vadd.f32 %v642, %v643
        %v645 = vrot.slane %v644, 1
        %v646 = vadd.f32 %v644, %v645
        %v647 = vadd.f32 %v353, %v361
        %v648 = vrot.slane %v647, 4
        %v649 = vadd.f32 %v647, %v648
        %v650 = vrot.slane %v649, 2
        %v651 = vadd.f32 %v649, %v650
        %v652 = vrot.slane %v651, 1
        %v653 = vadd.f32 %v651, %v652
        %v654 = vadd.f32 %v354, %v362
        %v655 = vrot.slane %v654, 4
        %v656 = vadd.f32 %v654, %v655
        %v657 = vrot.slane %v656, 2
        %v658 = vadd.f32 %v656, %v657
        %v659 = vrot.slane %v658, 1
        %v660 = vadd.f32 %v658, %v659
        %v661 = vadd.f32 %v355, %v363
        %v662 = vrot.slane %v661, 4
        %v663 = vadd.f32 %v661, %v662
        %v664 = vrot.slane %v663, 2
        %v665 = vadd.f32 %v663, %v664
        %v666 = vrot.slane %v665, 1
        %v667 = vadd.f32 %v665, %v666
        %v668 = vadd.f32 %v356, %v364
        %v669 = vrot.slane %v668, 4
        %v670 = vadd.f32 %v668, %v669
        %v671 = vrot.slane %v670, 2
        %v672 = vadd.f32 %v670, %v671
        %v673 = vrot.slane %v672, 1
        %v674 = vadd.f32 %v672, %v673
        %v675 = vadd.f32 %v357, %v365
        %v676 = vrot.slane %v675, 4
        %v677 = vadd.f32 %v675, %v676
        %v678 = vrot.slane %v677, 2
        %v679 = vadd.f32 %v677, %v678
        %v680 = vrot.slane %v679, 1
        %v681 = vadd.f32 %v679, %v680
        %v682 = vadd.f32 %v358, %v366
        %v683 = vrot.slane %v682, 4
        %v684 = vadd.f32 %v682, %v683
        %v685 = vrot.slane %v684, 2
        %v686 = vadd.f32 %v684, %v685
        %v687 = vrot.slane %v686, 1
        %v688 = vadd.f32 %v686, %v687
        %v689 = vadd.f32 %v359, %v367
        %v690 = vrot.slane %v689, 4
        %v691 = vadd.f32 %v689, %v690
        %v692 = vrot.slane %v691, 2
        %v693 = vadd.f32 %v691, %v692
        %v694 = vrot.slane %v693, 1
        %v695 = vadd.f32 %v693, %v694
        %v696 = vadd.f32 %v368, %v376
        %v697 = vrot.slane %v696, 4
        %v698 = vadd.f32 %v696, %v697
        %v699 = vrot.slane %v698, 2
        %v700 = vadd.f32 %v698, %v699
        %v701 = vrot.slane %v700, 1
        %v702 = vadd.f32 %v700, %v701
        %v703 = vadd.f32 %v369, %v377
        %v704 = vrot.slane %v703, 4
        %v705 = vadd.f32 %v703, %v704
        %v706 = vrot.slane %v705, 2
        %v707 = vadd.f32 %v705, %v706
        %v708 = vrot.slane %v707, 1
        %v709 = vadd.f32 %v707, %v708
        %v710 = vadd.f32 %v370, %v378
        %v711 = vrot.slane %v710, 4
        %v712 = vadd.f32 %v710, %v711
        %v713 = vrot.slane %v712, 2
        %v714 = vadd.f32 %v712, %v713
        %v715 = vrot.slane %v714, 1
        %v716 = vadd.f32 %v714, %v715
        %v717 = vadd.f32 %v371, %v379
        %v718 = vrot.slane %v717, 4
        %v719 = vadd.f32 %v717, %v718
        %v720 = vrot.slane %v719, 2
        %v721 = vadd.f32 %v719, %v720
        %v722 = vrot.slane %v721, 1
        %v723 = vadd.f32 %v721, %v722
        %v724 = vadd.f32 %v372, %v380
        %v725 = vrot.slane %v724, 4
        %v726 = vadd.f32 %v724, %v725
        %v727 = vrot.slane %v726, 2
        %v728 = vadd.f32 %v726, %v727
        %v729 = vrot.slane %v728, 1
        %v730 = vadd.f32 %v728, %v729
        %v731 = vadd.f32 %v373, %v381
        %v732 = vrot.slane %v731, 4
        %v733 = vadd.f32 %v731, %v732
        %v734 = vrot.slane %v733, 2
        %v735 = vadd.f32 %v733, %v734
        %v736 = vrot.slane %v735, 1
        %v737 = vadd.f32 %v735, %v736
        %v738 = vadd.f32 %v374, %v382
        %v739 = vrot.slane %v738, 4
        %v740 = vadd.f32 %v738, %v739
        %v741 = vrot.slane %v740, 2
        %v742 = vadd.f32 %v740, %v741
        %v743 = vrot.slane %v742, 1
        %v744 = vadd.f32 %v742, %v743
        %v745 = vadd.f32 %v375, %v383
        %v746 = vrot.slane %v745, 4
        %v747 = vadd.f32 %v745, %v746
        %v748 = vrot.slane %v747, 2
        %v749 = vadd.f32 %v747, %v748
        %v750 = vrot.slane %v749, 1
        %v751 = vadd.f32 %v749, %v750
        %v752 = vadd.f32 %v384, %v392
        %v753 = vrot.slane %v752, 4
        %v754 = vadd.f32 %v752, %v753
        %v755 = vrot.slane %v754, 2
        %v756 = vadd.f32 %v754, %v755
        %v757 = vrot.slane %v756, 1
        %v758 = vadd.f32 %v756, %v757
        %v759 = vadd.f32 %v385, %v393
        %v760 = vrot.slane %v759, 4
        %v761 = vadd.f32 %v759, %v760
        %v762 = vrot.slane %v761, 2
        %v763 = vadd.f32 %v761, %v762
        %v764 = vrot.slane %v763, 1
        %v765 = vadd.f32 %v763, %v764
        %v766 = vadd.f32 %v386, %v394
        %v767 = vrot.slane %v766, 4
        %v768 = vadd.f32 %v766, %v767
        %v769 = vrot.slane %v768, 2
        %v770 = vadd.f32 %v768, %v769
        %v771 = vrot.slane %v770, 1
        %v772 = vadd.f32 %v770, %v771
        %v773 = vadd.f32 %v387, %v395
        %v774 = vrot.slane %v773, 4
        %v775 = vadd.f32 %v773, %v774
        %v776 = vrot.slane %v775, 2
        %v777 = vadd.f32 %v775, %v776
        %v778 = vrot.slane %v777, 1
        %v779 = vadd.f32 %v777, %v778
        %v780 = vadd.f32 %v388, %v396
        %v781 = vrot.slane %v780, 4
        %v782 = vadd.f32 %v780, %v781
        %v783 = vrot.slane %v782, 2
        %v784 = vadd.f32 %v782, %v783
        %v785 = vrot.slane %v784, 1
        %v786 = vadd.f32 %v784, %v785
        %v787 = vadd.f32 %v389, %v397
        %v788 = vrot.slane %v787, 4
        %v789 = vadd.f32 %v787, %v788
        %v790 = vrot.slane %v789, 2
        %v791 = vadd.f32 %v789, %v790
        %v792 = vrot.slane %v791, 1
        %v793 = vadd.f32 %v791, %v792
        %v794 = vadd.f32 %v390, %v398
        %v795 = vrot.slane %v794, 4
        %v796 = vadd.f32 %v794, %v795
        %v797 = vrot.slane %v796, 2
        %v798 = vadd.f32 %v796, %v797
        %v799 = vrot.slane %v798, 1
        %v800 = vadd.f32 %v798, %v799
        %v801 = vadd.f32 %v391, %v399
        %v802 = vrot.slane %v801, 4
        %v803 = vadd.f32 %v801, %v802
        %v804 = vrot.slane %v803, 2
        %v805 = vadd.f32 %v803, %v804
        %v806 = vrot.slane %v805, 1
        %v807 = vadd.f32 %v805, %v806
        %v808 = vadd.f32 %v400, %v408
        %v809 = vrot.slane %v808, 4
        %v810 = vadd.f32 %v808, %v809
        %v811 = vrot.slane %v810, 2
        %v812 = vadd.f32 %v810, %v811
        %v813 = vrot.slane %v812, 1
        %v814 = vadd.f32 %v812, %v813
        %v815 = vadd.f32 %v401, %v409
        %v816 = vrot.slane %v815, 4
        %v817 = vadd.f32 %v815, %v816
        %v818 = vrot.slane %v817, 2
        %v819 = vadd.f32 %v817, %v818
        %v820 = vrot.slane %v819, 1
        %v821 = vadd.f32 %v819, %v820
        %v822 = vadd.f32 %v402, %v410
        %v823 = vrot.slane %v822, 4
        %v824 = vadd.f32 %v822, %v823
        %v825 = vrot.slane %v824, 2
        %v826 = vadd.f32 %v824, %v825
        %v827 = vrot.slane %v826, 1
        %v828 = vadd.f32 %v826, %v827
        %v829 = vadd.f32 %v403, %v411
        %v830 = vrot.slane %v829, 4
        %v831 = vadd.f32 %v829, %v830
        %v832 = vrot.slane %v831, 2
        %v833 = vadd.f32 %v831, %v832
        %v834 = vrot.slane %v833, 1
        %v835 = vadd.f32 %v833, %v834
        %v836 = vadd.f32 %v404, %v412
        %v837 = vrot.slane %v836, 4
        %v838 = vadd.f32 %v836, %v837
        %v839 = vrot.slane %v838, 2
        %v840 = vadd.f32 %v838, %v839
        %v841 = vrot.slane %v840, 1
        %v842 = vadd.f32 %v840, %v841
        %v843 = vadd.f32 %v405, %v413
        %v844 = vrot.slane %v843, 4
        %v845 = vadd.f32 %v843, %v844
        %v846 = vrot.slane %v845, 2
        %v847 = vadd.f32 %v845, %v846
        %v848 = vrot.slane %v847, 1
        %v849 = vadd.f32 %v847, %v848
        %v850 = vadd.f32 %v406, %v414
        %v851 = vrot.slane %v850, 4
        %v852 = vadd.f32 %v850, %v851
        %v853 = vrot.slane %v852, 2
        %v854 = vadd.f32 %v852, %v853
        %v855 = vrot.slane %v854, 1
        %v856 = vadd.f32 %v854, %v855
        %v857 = vadd.f32 %v407, %v415
        %v858 = vrot.slane %v857, 4
        %v859 = vadd.f32 %v857, %v858
        %v860 = vrot.slane %v859, 2
        %v861 = vadd.f32 %v859, %v860
        %v862 = vrot.slane %v861, 1
        %v863 = vadd.f32 %v861, %v862
        %v864 = vrcp.pop 16.0
        %v865 = vmul.f32 16.0, %v864
        %v866 = vsub.f32 1.0, %v865
        %v867 = vmul.f32 %v864, %v866
        %v868 = vadd.f32 %v864, %v867
        %vm869 = vweird.f32 %v864
        %v870 = vsel %vm869, %v864, %v868
        %v871 = vmul.f32 %v422, %v870
        %v872 = vmul.f32 %v429, %v870
        %v873 = vmul.f32 %v436, %v870
        %v874 = vmul.f32 %v443, %v870
        %v875 = vmul.f32 %v450, %v870
        %v876 = vmul.f32 %v457, %v870
        %v877 = vmul.f32 %v464, %v870
        %v878 = vmul.f32 %v471, %v870
        %v879 = vmul.f32 %v478, %v870
        %v880 = vmul.f32 %v485, %v870
        %v881 = vmul.f32 %v492, %v870
        %v882 = vmul.f32 %v499, %v870
        %v883 = vmul.f32 %v506, %v870
        %v884 = vmul.f32 %v513, %v870
        %v885 = vmul.f32 %v520, %v870
        %v886 = vmul.f32 %v527, %v870
        %v887 = vmul.f32 %v534, %v870
        %v888 = vmul.f32 %v541, %v870
        %v889 = vmul.f32 %v548, %v870
        %v890 = vmul.f32 %v555, %v870
        %v891 = vmul.f32 %v562, %v870
        %v892 = vmul.f32 %v569, %v870
        %v893 = vmul.f32 %v576, %v870
        %v894 = vmul.f32 %v583, %v870
        %v895 = vmul.f32 %v590, %v870
        %v896 = vmul.f32 %v597, %v870
        %v897 = vmul.f32 %v604, %v870
        %v898 = vmul.f32 %v611, %v870
        %v899 = vmul.f32 %v618, %v870
        %v900 = vmul.f32 %v625, %v870
        %v901 = vmul.f32 %v632, %v870
        %v902 = vmul.f32 %v639, %v870
        %v903 = vmul.f32 %v646, %v870
        %v904 = vmul.f32 %v653, %v870
        %v905 = vmul.f32 %v660, %v870
        %v906 = vmul.f32 %v667, %v870
        %v907 = vmul.f32 %v674, %v870
        %v908 = vmul.f32 %v681, %v870
        %v909 = vmul.f32 %v688, %v870
        %v910 = vmul.f32 %v695, %v870
        %v911 = vmul.f32 %v702, %v870
        %v912 = vmul.f32 %v709, %v870
        %v913 = vmul.f32 %v716, %v870
        %v914 = vmul.f32 %v723, %v870
        %v915 = vmul.f32 %v730, %v870
        %v916 = vmul.f32 %v737, %v870
        %v917 = vmul.f32 %v744, %v870
        %v918 = vmul.f32 %v751, %v870
        %v919 = vmul.f32 %v758, %v870
        %v920 = vmul.f32 %v765, %v870
        %v921 = vmul.f32 %v772, %v870
        %v922 = vmul.f32 %v779, %v870
        %v923 = vmul.f32 %v786, %v870
        %v924 = vmul.f32 %v793, %v870
        %v925 = vmul.f32 %v800, %v870
        %v926 = vmul.f32 %v807, %v870
        %v927 = vmul.f32 %v814, %v870
        %v928 = vmul.f32 %v821, %v870
        %v929 = vmul.f32 %v828, %v870
        %v930 = vmul.f32 %v835, %v870
        %v931 = vmul.f32 %v842, %v870
        %v932 = vmul.f32 %v849, %v870
        %v933 = vmul.f32 %v856, %v870
        %v934 = vmul.f32 %v863, %v870
        %v935 = vpack.c.bf16 %v871, %v871
        %v936 = vpack.c.bf16 %v872, %v872
        %v937 = vpack.c.bf16 %v873, %v873
        %v938 = vpack.c.bf16 %v874, %v874
        %v939 = vpack.c.bf16 %v875, %v875
        %v940 = vpack.c.bf16 %v876, %v876
        %v941 = vpack.c.bf16 %v877, %v877
        %v942 = vpack.c.bf16 %v878, %v878
        %v943 = vpack.c.bf16 %v879, %v879
        %v944 = vpack.c.bf16 %v880, %v880
        %v945 = vpack.c.bf16 %v881, %v881
        %v946 = vpack.c.bf16 %v882, %v882
        %v947 = vpack.c.bf16 %v883, %v883
        %v948 = vpack.c.bf16 %v884, %v884
        %v949 = vpack.c.bf16 %v885, %v885
        %v950 = vpack.c.bf16 %v886, %v886
        %v951 = vpack.c.bf16 %v887, %v887
        %v952 = vpack.c.bf16 %v888, %v888
        %v953 = vpack.c.bf16 %v889, %v889
        %v954 = vpack.c.bf16 %v890, %v890
        %v955 = vpack.c.bf16 %v891, %v891
        %v956 = vpack.c.bf16 %v892, %v892
        %v957 = vpack.c.bf16 %v893, %v893
        %v958 = vpack.c.bf16 %v894, %v894
        %v959 = vpack.c.bf16 %v895, %v895
        %v960 = vpack.c.bf16 %v896, %v896
        %v961 = vpack.c.bf16 %v897, %v897
        %v962 = vpack.c.bf16 %v898, %v898
        %v963 = vpack.c.bf16 %v899, %v899
        %v964 = vpack.c.bf16 %v900, %v900
        %v965 = vpack.c.bf16 %v901, %v901
        %v966 = vpack.c.bf16 %v902, %v902
        %v967 = vpack.c.bf16 %v903, %v903
        %v968 = vpack.c.bf16 %v904, %v904
        %v969 = vpack.c.bf16 %v905, %v905
        %v970 = vpack.c.bf16 %v906, %v906
        %v971 = vpack.c.bf16 %v907, %v907
        %v972 = vpack.c.bf16 %v908, %v908
        %v973 = vpack.c.bf16 %v909, %v909
        %v974 = vpack.c.bf16 %v910, %v910
        %v975 = vpack.c.bf16 %v911, %v911
        %v976 = vpack.c.bf16 %v912, %v912
        %v977 = vpack.c.bf16 %v913, %v913
        %v978 = vpack.c.bf16 %v914, %v914
        %v979 = vpack.c.bf16 %v915, %v915
        %v980 = vpack.c.bf16 %v916, %v916
        %v981 = vpack.c.bf16 %v917, %v917
        %v982 = vpack.c.bf16 %v918, %v918
        %v983 = vpack.c.bf16 %v919, %v919
        %v984 = vpack.c.bf16 %v920, %v920
        %v985 = vpack.c.bf16 %v921, %v921
        %v986 = vpack.c.bf16 %v922, %v922
        %v987 = vpack.c.bf16 %v923, %v923
        %v988 = vpack.c.bf16 %v924, %v924
        %v989 = vpack.c.bf16 %v925, %v925
        %v990 = vpack.c.bf16 %v926, %v926
        %v991 = vpack.c.bf16 %v927, %v927
        %v992 = vpack.c.bf16 %v928, %v928
        %v993 = vpack.c.bf16 %v929, %v929
        %v994 = vpack.c.bf16 %v930, %v930
        %v995 = vpack.c.bf16 %v931, %v931
        %v996 = vpack.c.bf16 %v932, %v932
        %v997 = vpack.c.bf16 %v933, %v933
        %v998 = vpack.c.bf16 %v934, %v934
        %v999 = vld [vmem:[#allocation5] sm:$0xff]
        %v1000 = vld [vmem:[#allocation5 + $0x8] sm:$0xff]
        %v1001 = vld [vmem:[#allocation5 + $0x10] sm:$0xff]
        %v1002 = vld [vmem:[#allocation5 + $0x18] sm:$0xff]
        %v1003 = vld [vmem:[#allocation5 + $0x20] sm:$0xff]
        %v1004 = vld [vmem:[#allocation5 + $0x28] sm:$0xff]
        %v1005 = vld [vmem:[#allocation5 + $0x30] sm:$0xff]
        %v1006 = vld [vmem:[#allocation5 + $0x38] sm:$0xff]
        %v1007 = vld [vmem:[#allocation5 + $0x40] sm:$0xff]
        %v1008 = vld [vmem:[#allocation5 + $0x48] sm:$0xff]
        %v1009 = vld [vmem:[#allocation5 + $0x50] sm:$0xff]
        %v1010 = vld [vmem:[#allocation5 + $0x58] sm:$0xff]
        %v1011 = vld [vmem:[#allocation5 + $0x60] sm:$0xff]
        %v1012 = vld [vmem:[#allocation5 + $0x68] sm:$0xff]
        %v1013 = vld [vmem:[#allocation5 + $0x70] sm:$0xff]
        %v1014 = vld [vmem:[#allocation5 + $0x78] sm:$0xff]
        %v1015 = vld [vmem:[#allocation5 + $0x80] sm:$0xff]
        %v1016 = vld [vmem:[#allocation5 + $0x88] sm:$0xff]
        %v1017 = vld [vmem:[#allocation5 + $0x90] sm:$0xff]
        %v1018 = vld [vmem:[#allocation5 + $0x98] sm:$0xff]
        %v1019 = vld [vmem:[#allocation5 + $0xa0] sm:$0xff]
        %v1020 = vld [vmem:[#allocation5 + $0xa8] sm:$0xff]
        %v1021 = vld [vmem:[#allocation5 + $0xb0] sm:$0xff]
        %v1022 = vld [vmem:[#allocation5 + $0xb8] sm:$0xff]
        %v1023 = vld [vmem:[#allocation5 + $0xc0] sm:$0xff]
        %v1024 = vld [vmem:[#allocation5 + $0xc8] sm:$0xff]
        %v1025 = vld [vmem:[#allocation5 + $0xd0] sm:$0xff]
        %v1026 = vld [vmem:[#allocation5 + $0xd8] sm:$0xff]
        %v1027 = vld [vmem:[#allocation5 + $0xe0] sm:$0xff]
        %v1028 = vld [vmem:[#allocation5 + $0xe8] sm:$0xff]
        %v1029 = vld [vmem:[#allocation5 + $0xf0] sm:$0xff]
        %v1030 = vld [vmem:[#allocation5 + $0xf8] sm:$0xff]
        %v1031 = vld [vmem:[#allocation5 + $0x100] sm:$0xff]
        %v1032 = vld [vmem:[#allocation5 + $0x108] sm:$0xff]
        %v1033 = vld [vmem:[#allocation5 + $0x110] sm:$0xff]
        %v1034 = vld [vmem:[#allocation5 + $0x118] sm:$0xff]
        %v1035 = vld [vmem:[#allocation5 + $0x120] sm:$0xff]
        %v1036 = vld [vmem:[#allocation5 + $0x128] sm:$0xff]
        %v1037 = vld [vmem:[#allocation5 + $0x130] sm:$0xff]
        %v1038 = vld [vmem:[#allocation5 + $0x138] sm:$0xff]
        %v1039 = vld [vmem:[#allocation5 + $0x140] sm:$0xff]
        %v1040 = vld [vmem:[#allocation5 + $0x148] sm:$0xff]
        %v1041 = vld [vmem:[#allocation5 + $0x150] sm:$0xff]
        %v1042 = vld [vmem:[#allocation5 + $0x158] sm:$0xff]
        %v1043 = vld [vmem:[#allocation5 + $0x160] sm:$0xff]
        %v1044 = vld [vmem:[#allocation5 + $0x168] sm:$0xff]
        %v1045 = vld [vmem:[#allocation5 + $0x170] sm:$0xff]
        %v1046 = vld [vmem:[#allocation5 + $0x178] sm:$0xff]
        %v1047 = vld [vmem:[#allocation5 + $0x180] sm:$0xff]
        %v1048 = vld [vmem:[#allocation5 + $0x188] sm:$0xff]
        %v1049 = vld [vmem:[#allocation5 + $0x190] sm:$0xff]
        %v1050 = vld [vmem:[#allocation5 + $0x198] sm:$0xff]
        %v1051 = vld [vmem:[#allocation5 + $0x1a0] sm:$0xff]
        %v1052 = vld [vmem:[#allocation5 + $0x1a8] sm:$0xff]
        %v1053 = vld [vmem:[#allocation5 + $0x1b0] sm:$0xff]
        %v1054 = vld [vmem:[#allocation5 + $0x1b8] sm:$0xff]
        %v1055 = vld [vmem:[#allocation5 + $0x1c0] sm:$0xff]
        %v1056 = vld [vmem:[#allocation5 + $0x1c8] sm:$0xff]
        %v1057 = vld [vmem:[#allocation5 + $0x1d0] sm:$0xff]
        %v1058 = vld [vmem:[#allocation5 + $0x1d8] sm:$0xff]
        %v1059 = vld [vmem:[#allocation5 + $0x1e0] sm:$0xff]
        %v1060 = vld [vmem:[#allocation5 + $0x1e8] sm:$0xff]
        %v1061 = vld [vmem:[#allocation5 + $0x1f0] sm:$0xff]
        %v1062 = vld [vmem:[#allocation5 + $0x1f8] sm:$0xff]
        %v1063 = vld [vmem:[#allocation5 + $0x200] sm:$0xff]
        %v1064 = vld [vmem:[#allocation5 + $0x208] sm:$0xff]
        %v1065 = vld [vmem:[#allocation5 + $0x210] sm:$0xff]
        %v1066 = vld [vmem:[#allocation5 + $0x218] sm:$0xff]
        %v1067 = vld [vmem:[#allocation5 + $0x220] sm:$0xff]
        %v1068 = vld [vmem:[#allocation5 + $0x228] sm:$0xff]
        %v1069 = vld [vmem:[#allocation5 + $0x230] sm:$0xff]
        %v1070 = vld [vmem:[#allocation5 + $0x238] sm:$0xff]
        %v1071 = vld [vmem:[#allocation5 + $0x240] sm:$0xff]
        %v1072 = vld [vmem:[#allocation5 + $0x248] sm:$0xff]
        %v1073 = vld [vmem:[#allocation5 + $0x250] sm:$0xff]
        %v1074 = vld [vmem:[#allocation5 + $0x258] sm:$0xff]
        %v1075 = vld [vmem:[#allocation5 + $0x260] sm:$0xff]
        %v1076 = vld [vmem:[#allocation5 + $0x268] sm:$0xff]
        %v1077 = vld [vmem:[#allocation5 + $0x270] sm:$0xff]
        %v1078 = vld [vmem:[#allocation5 + $0x278] sm:$0xff]
        %v1079 = vld [vmem:[#allocation5 + $0x280] sm:$0xff]
        %v1080 = vld [vmem:[#allocation5 + $0x288] sm:$0xff]
        %v1081 = vld [vmem:[#allocation5 + $0x290] sm:$0xff]
        %v1082 = vld [vmem:[#allocation5 + $0x298] sm:$0xff]
        %v1083 = vld [vmem:[#allocation5 + $0x2a0] sm:$0xff]
        %v1084 = vld [vmem:[#allocation5 + $0x2a8] sm:$0xff]
        %v1085 = vld [vmem:[#allocation5 + $0x2b0] sm:$0xff]
        %v1086 = vld [vmem:[#allocation5 + $0x2b8] sm:$0xff]
        %v1087 = vld [vmem:[#allocation5 + $0x2c0] sm:$0xff]
        %v1088 = vld [vmem:[#allocation5 + $0x2c8] sm:$0xff]
        %v1089 = vld [vmem:[#allocation5 + $0x2d0] sm:$0xff]
        %v1090 = vld [vmem:[#allocation5 + $0x2d8] sm:$0xff]
        %v1091 = vld [vmem:[#allocation5 + $0x2e0] sm:$0xff]
        %v1092 = vld [vmem:[#allocation5 + $0x2e8] sm:$0xff]
        %v1093 = vld [vmem:[#allocation5 + $0x2f0] sm:$0xff]
        %v1094 = vld [vmem:[#allocation5 + $0x2f8] sm:$0xff]
        %v1095 = vld [vmem:[#allocation5 + $0x300] sm:$0xff]
        %v1096 = vld [vmem:[#allocation5 + $0x308] sm:$0xff]
        %v1097 = vld [vmem:[#allocation5 + $0x310] sm:$0xff]
        %v1098 = vld [vmem:[#allocation5 + $0x318] sm:$0xff]
        %v1099 = vld [vmem:[#allocation5 + $0x320] sm:$0xff]
        %v1100 = vld [vmem:[#allocation5 + $0x328] sm:$0xff]
        %v1101 = vld [vmem:[#allocation5 + $0x330] sm:$0xff]
        %v1102 = vld [vmem:[#allocation5 + $0x338] sm:$0xff]
        %v1103 = vld [vmem:[#allocation5 + $0x340] sm:$0xff]
        %v1104 = vld [vmem:[#allocation5 + $0x348] sm:$0xff]
        %v1105 = vld [vmem:[#allocation5 + $0x350] sm:$0xff]
        %v1106 = vld [vmem:[#allocation5 + $0x358] sm:$0xff]
        %v1107 = vld [vmem:[#allocation5 + $0x360] sm:$0xff]
        %v1108 = vld [vmem:[#allocation5 + $0x368] sm:$0xff]
        %v1109 = vld [vmem:[#allocation5 + $0x370] sm:$0xff]
        %v1110 = vld [vmem:[#allocation5 + $0x378] sm:$0xff]
        %v1111 = vld [vmem:[#allocation5 + $0x380] sm:$0xff]
        %v1112 = vld [vmem:[#allocation5 + $0x388] sm:$0xff]
        %v1113 = vld [vmem:[#allocation5 + $0x390] sm:$0xff]
        %v1114 = vld [vmem:[#allocation5 + $0x398] sm:$0xff]
        %v1115 = vld [vmem:[#allocation5 + $0x3a0] sm:$0xff]
        %v1116 = vld [vmem:[#allocation5 + $0x3a8] sm:$0xff]
        %v1117 = vld [vmem:[#allocation5 + $0x3b0] sm:$0xff]
        %v1118 = vld [vmem:[#allocation5 + $0x3b8] sm:$0xff]
        %v1119 = vld [vmem:[#allocation5 + $0x3c0] sm:$0xff]
        %v1120 = vld [vmem:[#allocation5 + $0x3c8] sm:$0xff]
        %v1121 = vld [vmem:[#allocation5 + $0x3d0] sm:$0xff]
        %v1122 = vld [vmem:[#allocation5 + $0x3d8] sm:$0xff]
        %v1123 = vld [vmem:[#allocation5 + $0x3e0] sm:$0xff]
        %v1124 = vld [vmem:[#allocation5 + $0x3e8] sm:$0xff]
        %v1125 = vld [vmem:[#allocation5 + $0x3f0] sm:$0xff]
        %v1126 = vld [vmem:[#allocation5 + $0x3f8] sm:$0xff]
        %v1127 = vld [vmem:[#allocation5 + $0x400] sm:$0xff]
        %v1128 = vld [vmem:[#allocation5 + $0x408] sm:$0xff]
        %v1129 = vld [vmem:[#allocation5 + $0x410] sm:$0xff]
        %v1130 = vld [vmem:[#allocation5 + $0x418] sm:$0xff]
        %v1131 = vld [vmem:[#allocation5 + $0x420] sm:$0xff]
        %v1132 = vld [vmem:[#allocation5 + $0x428] sm:$0xff]
        %v1133 = vld [vmem:[#allocation5 + $0x430] sm:$0xff]
        %v1134 = vld [vmem:[#allocation5 + $0x438] sm:$0xff]
        %v1135 = vld [vmem:[#allocation5 + $0x440] sm:$0xff]
        %v1136 = vld [vmem:[#allocation5 + $0x448] sm:$0xff]
        %v1137 = vld [vmem:[#allocation5 + $0x450] sm:$0xff]
        %v1138 = vld [vmem:[#allocation5 + $0x458] sm:$0xff]
        %v1139 = vld [vmem:[#allocation5 + $0x460] sm:$0xff]
        %v1140 = vld [vmem:[#allocation5 + $0x468] sm:$0xff]
        %v1141 = vld [vmem:[#allocation5 + $0x470] sm:$0xff]
        %v1142 = vld [vmem:[#allocation5 + $0x478] sm:$0xff]
        %v1143 = vld [vmem:[#allocation5 + $0x480] sm:$0xff]
        %v1144 = vld [vmem:[#allocation5 + $0x488] sm:$0xff]
        %v1145 = vld [vmem:[#allocation5 + $0x490] sm:$0xff]
        %v1146 = vld [vmem:[#allocation5 + $0x498] sm:$0xff]
        %v1147 = vld [vmem:[#allocation5 + $0x4a0] sm:$0xff]
        %v1148 = vld [vmem:[#allocation5 + $0x4a8] sm:$0xff]
        %v1149 = vld [vmem:[#allocation5 + $0x4b0] sm:$0xff]
        %v1150 = vld [vmem:[#allocation5 + $0x4b8] sm:$0xff]
        %v1151 = vld [vmem:[#allocation5 + $0x4c0] sm:$0xff]
        %v1152 = vld [vmem:[#allocation5 + $0x4c8] sm:$0xff]
        %v1153 = vld [vmem:[#allocation5 + $0x4d0] sm:$0xff]
        %v1154 = vld [vmem:[#allocation5 + $0x4d8] sm:$0xff]
        %v1155 = vld [vmem:[#allocation5 + $0x4e0] sm:$0xff]
        %v1156 = vld [vmem:[#allocation5 + $0x4e8] sm:$0xff]
        %v1157 = vld [vmem:[#allocation5 + $0x4f0] sm:$0xff]
        %v1158 = vld [vmem:[#allocation5 + $0x4f8] sm:$0xff]
        %v1159 = vld [vmem:[#allocation5 + $0x500] sm:$0xff]
        %v1160 = vld [vmem:[#allocation5 + $0x508] sm:$0xff]
        %v1161 = vld [vmem:[#allocation5 + $0x510] sm:$0xff]
        %v1162 = vld [vmem:[#allocation5 + $0x518] sm:$0xff]
        %v1163 = vld [vmem:[#allocation5 + $0x520] sm:$0xff]
        %v1164 = vld [vmem:[#allocation5 + $0x528] sm:$0xff]
        %v1165 = vld [vmem:[#allocation5 + $0x530] sm:$0xff]
        %v1166 = vld [vmem:[#allocation5 + $0x538] sm:$0xff]
        %v1167 = vld [vmem:[#allocation5 + $0x540] sm:$0xff]
        %v1168 = vld [vmem:[#allocation5 + $0x548] sm:$0xff]
        %v1169 = vld [vmem:[#allocation5 + $0x550] sm:$0xff]
        %v1170 = vld [vmem:[#allocation5 + $0x558] sm:$0xff]
        %v1171 = vld [vmem:[#allocation5 + $0x560] sm:$0xff]
        %v1172 = vld [vmem:[#allocation5 + $0x568] sm:$0xff]
        %v1173 = vld [vmem:[#allocation5 + $0x570] sm:$0xff]
        %v1174 = vld [vmem:[#allocation5 + $0x578] sm:$0xff]
        %v1175 = vld [vmem:[#allocation5 + $0x580] sm:$0xff]
        %v1176 = vld [vmem:[#allocation5 + $0x588] sm:$0xff]
        %v1177 = vld [vmem:[#allocation5 + $0x590] sm:$0xff]
        %v1178 = vld [vmem:[#allocation5 + $0x598] sm:$0xff]
        %v1179 = vld [vmem:[#allocation5 + $0x5a0] sm:$0xff]
        %v1180 = vld [vmem:[#allocation5 + $0x5a8] sm:$0xff]
        %v1181 = vld [vmem:[#allocation5 + $0x5b0] sm:$0xff]
        %v1182 = vld [vmem:[#allocation5 + $0x5b8] sm:$0xff]
        %v1183 = vld [vmem:[#allocation5 + $0x5c0] sm:$0xff]
        %v1184 = vld [vmem:[#allocation5 + $0x5c8] sm:$0xff]
        %v1185 = vld [vmem:[#allocation5 + $0x5d0] sm:$0xff]
        %v1186 = vld [vmem:[#allocation5 + $0x5d8] sm:$0xff]
        %v1187 = vld [vmem:[#allocation5 + $0x5e0] sm:$0xff]
        %v1188 = vld [vmem:[#allocation5 + $0x5e8] sm:$0xff]
        %v1189 = vld [vmem:[#allocation5 + $0x5f0] sm:$0xff]
        %v1190 = vld [vmem:[#allocation5 + $0x5f8] sm:$0xff]
        %v1191 = vld [vmem:[#allocation5 + $0x600] sm:$0xff]
        %v1192 = vld [vmem:[#allocation5 + $0x608] sm:$0xff]
        %v1193 = vld [vmem:[#allocation5 + $0x610] sm:$0xff]
        %v1194 = vld [vmem:[#allocation5 + $0x618] sm:$0xff]
        %v1195 = vld [vmem:[#allocation5 + $0x620] sm:$0xff]
        %v1196 = vld [vmem:[#allocation5 + $0x628] sm:$0xff]
        %v1197 = vld [vmem:[#allocation5 + $0x630] sm:$0xff]
        %v1198 = vld [vmem:[#allocation5 + $0x638] sm:$0xff]
        %v1199 = vld [vmem:[#allocation5 + $0x640] sm:$0xff]
        %v1200 = vld [vmem:[#allocation5 + $0x648] sm:$0xff]
        %v1201 = vld [vmem:[#allocation5 + $0x650] sm:$0xff]
        %v1202 = vld [vmem:[#allocation5 + $0x658] sm:$0xff]
        %v1203 = vld [vmem:[#allocation5 + $0x660] sm:$0xff]
        %v1204 = vld [vmem:[#allocation5 + $0x668] sm:$0xff]
        %v1205 = vld [vmem:[#allocation5 + $0x670] sm:$0xff]
        %v1206 = vld [vmem:[#allocation5 + $0x678] sm:$0xff]
        %v1207 = vld [vmem:[#allocation5 + $0x680] sm:$0xff]
        %v1208 = vld [vmem:[#allocation5 + $0x688] sm:$0xff]
        %v1209 = vld [vmem:[#allocation5 + $0x690] sm:$0xff]
        %v1210 = vld [vmem:[#allocation5 + $0x698] sm:$0xff]
        %v1211 = vld [vmem:[#allocation5 + $0x6a0] sm:$0xff]
        %v1212 = vld [vmem:[#allocation5 + $0x6a8] sm:$0xff]
        %v1213 = vld [vmem:[#allocation5 + $0x6b0] sm:$0xff]
        %v1214 = vld [vmem:[#allocation5 + $0x6b8] sm:$0xff]
        %v1215 = vld [vmem:[#allocation5 + $0x6c0] sm:$0xff]
        %v1216 = vld [vmem:[#allocation5 + $0x6c8] sm:$0xff]
        %v1217 = vld [vmem:[#allocation5 + $0x6d0] sm:$0xff]
        %v1218 = vld [vmem:[#allocation5 + $0x6d8] sm:$0xff]
        %v1219 = vld [vmem:[#allocation5 + $0x6e0] sm:$0xff]
        %v1220 = vld [vmem:[#allocation5 + $0x6e8] sm:$0xff]
        %v1221 = vld [vmem:[#allocation5 + $0x6f0] sm:$0xff]
        %v1222 = vld [vmem:[#allocation5 + $0x6f8] sm:$0xff]
        %v1223 = vld [vmem:[#allocation5 + $0x700] sm:$0xff]
        %v1224 = vld [vmem:[#allocation5 + $0x708] sm:$0xff]
        %v1225 = vld [vmem:[#allocation5 + $0x710] sm:$0xff]
        %v1226 = vld [vmem:[#allocation5 + $0x718] sm:$0xff]
        %v1227 = vld [vmem:[#allocation5 + $0x720] sm:$0xff]
        %v1228 = vld [vmem:[#allocation5 + $0x728] sm:$0xff]
        %v1229 = vld [vmem:[#allocation5 + $0x730] sm:$0xff]
        %v1230 = vld [vmem:[#allocation5 + $0x738] sm:$0xff]
        %v1231 = vld [vmem:[#allocation5 + $0x740] sm:$0xff]
        %v1232 = vld [vmem:[#allocation5 + $0x748] sm:$0xff]
        %v1233 = vld [vmem:[#allocation5 + $0x750] sm:$0xff]
        %v1234 = vld [vmem:[#allocation5 + $0x758] sm:$0xff]
        %v1235 = vld [vmem:[#allocation5 + $0x760] sm:$0xff]
        %v1236 = vld [vmem:[#allocation5 + $0x768] sm:$0xff]
        %v1237 = vld [vmem:[#allocation5 + $0x770] sm:$0xff]
        %v1238 = vld [vmem:[#allocation5 + $0x778] sm:$0xff]
        %v1239 = vld [vmem:[#allocation5 + $0x780] sm:$0xff]
        %v1240 = vld [vmem:[#allocation5 + $0x788] sm:$0xff]
        %v1241 = vld [vmem:[#allocation5 + $0x790] sm:$0xff]
        %v1242 = vld [vmem:[#allocation5 + $0x798] sm:$0xff]
        %v1243 = vld [vmem:[#allocation5 + $0x7a0] sm:$0xff]
        %v1244 = vld [vmem:[#allocation5 + $0x7a8] sm:$0xff]
        %v1245 = vld [vmem:[#allocation5 + $0x7b0] sm:$0xff]
        %v1246 = vld [vmem:[#allocation5 + $0x7b8] sm:$0xff]
        %v1247 = vld [vmem:[#allocation5 + $0x7c0] sm:$0xff]
        %v1248 = vld [vmem:[#allocation5 + $0x7c8] sm:$0xff]
        %v1249 = vld [vmem:[#allocation5 + $0x7d0] sm:$0xff]
        %v1250 = vld [vmem:[#allocation5 + $0x7d8] sm:$0xff]
        %v1251 = vld [vmem:[#allocation5 + $0x7e0] sm:$0xff]
        %v1252 = vld [vmem:[#allocation5 + $0x7e8] sm:$0xff]
        %v1253 = vld [vmem:[#allocation5 + $0x7f0] sm:$0xff]
        %v1254 = vld [vmem:[#allocation5 + $0x7f8] sm:$0xff]
        %v1255 = vld [vmem:[#allocation5 + $0x800] sm:$0xff]
        %v1256 = vld [vmem:[#allocation5 + $0x808] sm:$0xff]
        %v1257 = vld [vmem:[#allocation5 + $0x810] sm:$0xff]
        %v1258 = vld [vmem:[#allocation5 + $0x818] sm:$0xff]
        %v1259 = vld [vmem:[#allocation5 + $0x820] sm:$0xff]
        %v1260 = vld [vmem:[#allocation5 + $0x828] sm:$0xff]
        %v1261 = vld [vmem:[#allocation5 + $0x830] sm:$0xff]
        %v1262 = vld [vmem:[#allocation5 + $0x838] sm:$0xff]
        %v1263 = vld [vmem:[#allocation5 + $0x840] sm:$0xff]
        %v1264 = vld [vmem:[#allocation5 + $0x848] sm:$0xff]
        %v1265 = vld [vmem:[#allocation5 + $0x850] sm:$0xff]
        %v1266 = vld [vmem:[#allocation5 + $0x858] sm:$0xff]
        %v1267 = vld [vmem:[#allocation5 + $0x860] sm:$0xff]
        %v1268 = vld [vmem:[#allocation5 + $0x868] sm:$0xff]
        %v1269 = vld [vmem:[#allocation5 + $0x870] sm:$0xff]
        %v1270 = vld [vmem:[#allocation5 + $0x878] sm:$0xff]
        %v1271 = vld [vmem:[#allocation5 + $0x880] sm:$0xff]
        %v1272 = vld [vmem:[#allocation5 + $0x888] sm:$0xff]
        %v1273 = vld [vmem:[#allocation5 + $0x890] sm:$0xff]
        %v1274 = vld [vmem:[#allocation5 + $0x898] sm:$0xff]
        %v1275 = vld [vmem:[#allocation5 + $0x8a0] sm:$0xff]
        %v1276 = vld [vmem:[#allocation5 + $0x8a8] sm:$0xff]
        %v1277 = vld [vmem:[#allocation5 + $0x8b0] sm:$0xff]
        %v1278 = vld [vmem:[#allocation5 + $0x8b8] sm:$0xff]
        %v1279 = vld [vmem:[#allocation5 + $0x8c0] sm:$0xff]
        %v1280 = vld [vmem:[#allocation5 + $0x8c8] sm:$0xff]
        %v1281 = vld [vmem:[#allocation5 + $0x8d0] sm:$0xff]
        %v1282 = vld [vmem:[#allocation5 + $0x8d8] sm:$0xff]
        %v1283 = vld [vmem:[#allocation5 + $0x8e0] sm:$0xff]
        %v1284 = vld [vmem:[#allocation5 + $0x8e8] sm:$0xff]
        %v1285 = vld [vmem:[#allocation5 + $0x8f0] sm:$0xff]
        %v1286 = vld [vmem:[#allocation5 + $0x8f8] sm:$0xff]
        %v1287 = vld [vmem:[#allocation5 + $0x900] sm:$0xff]
        %v1288 = vld [vmem:[#allocation5 + $0x908] sm:$0xff]
        %v1289 = vld [vmem:[#allocation5 + $0x910] sm:$0xff]
        %v1290 = vld [vmem:[#allocation5 + $0x918] sm:$0xff]
        %v1291 = vld [vmem:[#allocation5 + $0x920] sm:$0xff]
        %v1292 = vld [vmem:[#allocation5 + $0x928] sm:$0xff]
        %v1293 = vld [vmem:[#allocation5 + $0x930] sm:$0xff]
        %v1294 = vld [vmem:[#allocation5 + $0x938] sm:$0xff]
        %v1295 = vld [vmem:[#allocation5 + $0x940] sm:$0xff]
        %v1296 = vld [vmem:[#allocation5 + $0x948] sm:$0xff]
        %v1297 = vld [vmem:[#allocation5 + $0x950] sm:$0xff]
        %v1298 = vld [vmem:[#allocation5 + $0x958] sm:$0xff]
        %v1299 = vld [vmem:[#allocation5 + $0x960] sm:$0xff]
        %v1300 = vld [vmem:[#allocation5 + $0x968] sm:$0xff]
        %v1301 = vld [vmem:[#allocation5 + $0x970] sm:$0xff]
        %v1302 = vld [vmem:[#allocation5 + $0x978] sm:$0xff]
        %v1303 = vld [vmem:[#allocation5 + $0x980] sm:$0xff]
        %v1304 = vld [vmem:[#allocation5 + $0x988] sm:$0xff]
        %v1305 = vld [vmem:[#allocation5 + $0x990] sm:$0xff]
        %v1306 = vld [vmem:[#allocation5 + $0x998] sm:$0xff]
        %v1307 = vld [vmem:[#allocation5 + $0x9a0] sm:$0xff]
        %v1308 = vld [vmem:[#allocation5 + $0x9a8] sm:$0xff]
        %v1309 = vld [vmem:[#allocation5 + $0x9b0] sm:$0xff]
        %v1310 = vld [vmem:[#allocation5 + $0x9b8] sm:$0xff]
        %v1311 = vld [vmem:[#allocation5 + $0x9c0] sm:$0xff]
        %v1312 = vld [vmem:[#allocation5 + $0x9c8] sm:$0xff]
        %v1313 = vld [vmem:[#allocation5 + $0x9d0] sm:$0xff]
        %v1314 = vld [vmem:[#allocation5 + $0x9d8] sm:$0xff]
        %v1315 = vld [vmem:[#allocation5 + $0x9e0] sm:$0xff]
        %v1316 = vld [vmem:[#allocation5 + $0x9e8] sm:$0xff]
        %v1317 = vld [vmem:[#allocation5 + $0x9f0] sm:$0xff]
        %v1318 = vld [vmem:[#allocation5 + $0x9f8] sm:$0xff]
        %v1319 = vld [vmem:[#allocation5 + $0xa00] sm:$0xff]
        %v1320 = vld [vmem:[#allocation5 + $0xa08] sm:$0xff]
        %v1321 = vld [vmem:[#allocation5 + $0xa10] sm:$0xff]
        %v1322 = vld [vmem:[#allocation5 + $0xa18] sm:$0xff]
        %v1323 = vld [vmem:[#allocation5 + $0xa20] sm:$0xff]
        %v1324 = vld [vmem:[#allocation5 + $0xa28] sm:$0xff]
        %v1325 = vld [vmem:[#allocation5 + $0xa30] sm:$0xff]
        %v1326 = vld [vmem:[#allocation5 + $0xa38] sm:$0xff]
        %v1327 = vld [vmem:[#allocation5 + $0xa40] sm:$0xff]
        %v1328 = vld [vmem:[#allocation5 + $0xa48] sm:$0xff]
        %v1329 = vld [vmem:[#allocation5 + $0xa50] sm:$0xff]
        %v1330 = vld [vmem:[#allocation5 + $0xa58] sm:$0xff]
        %v1331 = vld [vmem:[#allocation5 + $0xa60] sm:$0xff]
        %v1332 = vld [vmem:[#allocation5 + $0xa68] sm:$0xff]
        %v1333 = vld [vmem:[#allocation5 + $0xa70] sm:$0xff]
        %v1334 = vld [vmem:[#allocation5 + $0xa78] sm:$0xff]
        %v1335 = vld [vmem:[#allocation5 + $0xa80] sm:$0xff]
        %v1336 = vld [vmem:[#allocation5 + $0xa88] sm:$0xff]
        %v1337 = vld [vmem:[#allocation5 + $0xa90] sm:$0xff]
        %v1338 = vld [vmem:[#allocation5 + $0xa98] sm:$0xff]
        %v1339 = vld [vmem:[#allocation5 + $0xaa0] sm:$0xff]
        %v1340 = vld [vmem:[#allocation5 + $0xaa8] sm:$0xff]
        %v1341 = vld [vmem:[#allocation5 + $0xab0] sm:$0xff]
        %v1342 = vld [vmem:[#allocation5 + $0xab8] sm:$0xff]
        %v1343 = vld [vmem:[#allocation5 + $0xac0] sm:$0xff]
        %v1344 = vld [vmem:[#allocation5 + $0xac8] sm:$0xff]
        %v1345 = vld [vmem:[#allocation5 + $0xad0] sm:$0xff]
        %v1346 = vld [vmem:[#allocation5 + $0xad8] sm:$0xff]
        %v1347 = vld [vmem:[#allocation5 + $0xae0] sm:$0xff]
        %v1348 = vld [vmem:[#allocation5 + $0xae8] sm:$0xff]
        %v1349 = vld [vmem:[#allocation5 + $0xaf0] sm:$0xff]
        %v1350 = vld [vmem:[#allocation5 + $0xaf8] sm:$0xff]
        %v1351 = vld [vmem:[#allocation5 + $0xb00] sm:$0xff]
        %v1352 = vld [vmem:[#allocation5 + $0xb08] sm:$0xff]
        %v1353 = vld [vmem:[#allocation5 + $0xb10] sm:$0xff]
        %v1354 = vld [vmem:[#allocation5 + $0xb18] sm:$0xff]
        %v1355 = vld [vmem:[#allocation5 + $0xb20] sm:$0xff]
        %v1356 = vld [vmem:[#allocation5 + $0xb28] sm:$0xff]
        %v1357 = vld [vmem:[#allocation5 + $0xb30] sm:$0xff]
        %v1358 = vld [vmem:[#allocation5 + $0xb38] sm:$0xff]
        %v1359 = vld [vmem:[#allocation5 + $0xb40] sm:$0xff]
        %v1360 = vld [vmem:[#allocation5 + $0xb48] sm:$0xff]
        %v1361 = vld [vmem:[#allocation5 + $0xb50] sm:$0xff]
        %v1362 = vld [vmem:[#allocation5 + $0xb58] sm:$0xff]
        %v1363 = vld [vmem:[#allocation5 + $0xb60] sm:$0xff]
        %v1364 = vld [vmem:[#allocation5 + $0xb68] sm:$0xff]
        %v1365 = vld [vmem:[#allocation5 + $0xb70] sm:$0xff]
        %v1366 = vld [vmem:[#allocation5 + $0xb78] sm:$0xff]
        %v1367 = vld [vmem:[#allocation5 + $0xb80] sm:$0xff]
        %v1368 = vld [vmem:[#allocation5 + $0xb88] sm:$0xff]
        %v1369 = vld [vmem:[#allocation5 + $0xb90] sm:$0xff]
        %v1370 = vld [vmem:[#allocation5 + $0xb98] sm:$0xff]
        %v1371 = vld [vmem:[#allocation5 + $0xba0] sm:$0xff]
        %v1372 = vld [vmem:[#allocation5 + $0xba8] sm:$0xff]
        %v1373 = vld [vmem:[#allocation5 + $0xbb0] sm:$0xff]
        %v1374 = vld [vmem:[#allocation5 + $0xbb8] sm:$0xff]
        %v1375 = vld [vmem:[#allocation5 + $0xbc0] sm:$0xff]
        %v1376 = vld [vmem:[#allocation5 + $0xbc8] sm:$0xff]
        %v1377 = vld [vmem:[#allocation5 + $0xbd0] sm:$0xff]
        %v1378 = vld [vmem:[#allocation5 + $0xbd8] sm:$0xff]
        %v1379 = vld [vmem:[#allocation5 + $0xbe0] sm:$0xff]
        %v1380 = vld [vmem:[#allocation5 + $0xbe8] sm:$0xff]
        %v1381 = vld [vmem:[#allocation5 + $0xbf0] sm:$0xff]
        %v1382 = vld [vmem:[#allocation5 + $0xbf8] sm:$0xff]
        %v1383 = vld [vmem:[#allocation5 + $0xc00] sm:$0xff]
        %v1384 = vld [vmem:[#allocation5 + $0xc08] sm:$0xff]
        %v1385 = vld [vmem:[#allocation5 + $0xc10] sm:$0xff]
        %v1386 = vld [vmem:[#allocation5 + $0xc18] sm:$0xff]
        %v1387 = vld [vmem:[#allocation5 + $0xc20] sm:$0xff]
        %v1388 = vld [vmem:[#allocation5 + $0xc28] sm:$0xff]
        %v1389 = vld [vmem:[#allocation5 + $0xc30] sm:$0xff]
        %v1390 = vld [vmem:[#allocation5 + $0xc38] sm:$0xff]
        %v1391 = vld [vmem:[#allocation5 + $0xc40] sm:$0xff]
        %v1392 = vld [vmem:[#allocation5 + $0xc48] sm:$0xff]
        %v1393 = vld [vmem:[#allocation5 + $0xc50] sm:$0xff]
        %v1394 = vld [vmem:[#allocation5 + $0xc58] sm:$0xff]
        %v1395 = vld [vmem:[#allocation5 + $0xc60] sm:$0xff]
        %v1396 = vld [vmem:[#allocation5 + $0xc68] sm:$0xff]
        %v1397 = vld [vmem:[#allocation5 + $0xc70] sm:$0xff]
        %v1398 = vld [vmem:[#allocation5 + $0xc78] sm:$0xff]
        %v1399 = vld [vmem:[#allocation5 + $0xc80] sm:$0xff]
        %v1400 = vld [vmem:[#allocation5 + $0xc88] sm:$0xff]
        %v1401 = vld [vmem:[#allocation5 + $0xc90] sm:$0xff]
        %v1402 = vld [vmem:[#allocation5 + $0xc98] sm:$0xff]
        %v1403 = vld [vmem:[#allocation5 + $0xca0] sm:$0xff]
        %v1404 = vld [vmem:[#allocation5 + $0xca8] sm:$0xff]
        %v1405 = vld [vmem:[#allocation5 + $0xcb0] sm:$0xff]
        %v1406 = vld [vmem:[#allocation5 + $0xcb8] sm:$0xff]
        %v1407 = vld [vmem:[#allocation5 + $0xcc0] sm:$0xff]
        %v1408 = vld [vmem:[#allocation5 + $0xcc8] sm:$0xff]
        %v1409 = vld [vmem:[#allocation5 + $0xcd0] sm:$0xff]
        %v1410 = vld [vmem:[#allocation5 + $0xcd8] sm:$0xff]
        %v1411 = vld [vmem:[#allocation5 + $0xce0] sm:$0xff]
        %v1412 = vld [vmem:[#allocation5 + $0xce8] sm:$0xff]
        %v1413 = vld [vmem:[#allocation5 + $0xcf0] sm:$0xff]
        %v1414 = vld [vmem:[#allocation5 + $0xcf8] sm:$0xff]
        %v1415 = vld [vmem:[#allocation5 + $0xd00] sm:$0xff]
        %v1416 = vld [vmem:[#allocation5 + $0xd08] sm:$0xff]
        %v1417 = vld [vmem:[#allocation5 + $0xd10] sm:$0xff]
        %v1418 = vld [vmem:[#allocation5 + $0xd18] sm:$0xff]
        %v1419 = vld [vmem:[#allocation5 + $0xd20] sm:$0xff]
        %v1420 = vld [vmem:[#allocation5 + $0xd28] sm:$0xff]
        %v1421 = vld [vmem:[#allocation5 + $0xd30] sm:$0xff]
        %v1422 = vld [vmem:[#allocation5 + $0xd38] sm:$0xff]
        %v1423 = vld [vmem:[#allocation5 + $0xd40] sm:$0xff]
        %v1424 = vld [vmem:[#allocation5 + $0xd48] sm:$0xff]
        %v1425 = vld [vmem:[#allocation5 + $0xd50] sm:$0xff]
        %v1426 = vld [vmem:[#allocation5 + $0xd58] sm:$0xff]
        %v1427 = vld [vmem:[#allocation5 + $0xd60] sm:$0xff]
        %v1428 = vld [vmem:[#allocation5 + $0xd68] sm:$0xff]
        %v1429 = vld [vmem:[#allocation5 + $0xd70] sm:$0xff]
        %v1430 = vld [vmem:[#allocation5 + $0xd78] sm:$0xff]
        %v1431 = vld [vmem:[#allocation5 + $0xd80] sm:$0xff]
        %v1432 = vld [vmem:[#allocation5 + $0xd88] sm:$0xff]
        %v1433 = vld [vmem:[#allocation5 + $0xd90] sm:$0xff]
        %v1434 = vld [vmem:[#allocation5 + $0xd98] sm:$0xff]
        %v1435 = vld [vmem:[#allocation5 + $0xda0] sm:$0xff]
        %v1436 = vld [vmem:[#allocation5 + $0xda8] sm:$0xff]
        %v1437 = vld [vmem:[#allocation5 + $0xdb0] sm:$0xff]
        %v1438 = vld [vmem:[#allocation5 + $0xdb8] sm:$0xff]
        %v1439 = vld [vmem:[#allocation5 + $0xdc0] sm:$0xff]
        %v1440 = vld [vmem:[#allocation5 + $0xdc8] sm:$0xff]
        %v1441 = vld [vmem:[#allocation5 + $0xdd0] sm:$0xff]
        %v1442 = vld [vmem:[#allocation5 + $0xdd8] sm:$0xff]
        %v1443 = vld [vmem:[#allocation5 + $0xde0] sm:$0xff]
        %v1444 = vld [vmem:[#allocation5 + $0xde8] sm:$0xff]
        %v1445 = vld [vmem:[#allocation5 + $0xdf0] sm:$0xff]
        %v1446 = vld [vmem:[#allocation5 + $0xdf8] sm:$0xff]
        %v1447 = vld [vmem:[#allocation5 + $0xe00] sm:$0xff]
        %v1448 = vld [vmem:[#allocation5 + $0xe08] sm:$0xff]
        %v1449 = vld [vmem:[#allocation5 + $0xe10] sm:$0xff]
        %v1450 = vld [vmem:[#allocation5 + $0xe18] sm:$0xff]
        %v1451 = vld [vmem:[#allocation5 + $0xe20] sm:$0xff]
        %v1452 = vld [vmem:[#allocation5 + $0xe28] sm:$0xff]
        %v1453 = vld [vmem:[#allocation5 + $0xe30] sm:$0xff]
        %v1454 = vld [vmem:[#allocation5 + $0xe38] sm:$0xff]
        %v1455 = vld [vmem:[#allocation5 + $0xe40] sm:$0xff]
        %v1456 = vld [vmem:[#allocation5 + $0xe48] sm:$0xff]
        %v1457 = vld [vmem:[#allocation5 + $0xe50] sm:$0xff]
        %v1458 = vld [vmem:[#allocation5 + $0xe58] sm:$0xff]
        %v1459 = vld [vmem:[#allocation5 + $0xe60] sm:$0xff]
        %v1460 = vld [vmem:[#allocation5 + $0xe68] sm:$0xff]
        %v1461 = vld [vmem:[#allocation5 + $0xe70] sm:$0xff]
        %v1462 = vld [vmem:[#allocation5 + $0xe78] sm:$0xff]
        %v1463 = vld [vmem:[#allocation5 + $0xe80] sm:$0xff]
        %v1464 = vld [vmem:[#allocation5 + $0xe88] sm:$0xff]
        %v1465 = vld [vmem:[#allocation5 + $0xe90] sm:$0xff]
        %v1466 = vld [vmem:[#allocation5 + $0xe98] sm:$0xff]
        %v1467 = vld [vmem:[#allocation5 + $0xea0] sm:$0xff]
        %v1468 = vld [vmem:[#allocation5 + $0xea8] sm:$0xff]
        %v1469 = vld [vmem:[#allocation5 + $0xeb0] sm:$0xff]
        %v1470 = vld [vmem:[#allocation5 + $0xeb8] sm:$0xff]
        %v1471 = vld [vmem:[#allocation5 + $0xec0] sm:$0xff]
        %v1472 = vld [vmem:[#allocation5 + $0xec8] sm:$0xff]
        %v1473 = vld [vmem:[#allocation5 + $0xed0] sm:$0xff]
        %v1474 = vld [vmem:[#allocation5 + $0xed8] sm:$0xff]
        %v1475 = vld [vmem:[#allocation5 + $0xee0] sm:$0xff]
        %v1476 = vld [vmem:[#allocation5 + $0xee8] sm:$0xff]
        %v1477 = vld [vmem:[#allocation5 + $0xef0] sm:$0xff]
        %v1478 = vld [vmem:[#allocation5 + $0xef8] sm:$0xff]
        %v1479 = vld [vmem:[#allocation5 + $0xf00] sm:$0xff]
        %v1480 = vld [vmem:[#allocation5 + $0xf08] sm:$0xff]
        %v1481 = vld [vmem:[#allocation5 + $0xf10] sm:$0xff]
        %v1482 = vld [vmem:[#allocation5 + $0xf18] sm:$0xff]
        %v1483 = vld [vmem:[#allocation5 + $0xf20] sm:$0xff]
        %v1484 = vld [vmem:[#allocation5 + $0xf28] sm:$0xff]
        %v1485 = vld [vmem:[#allocation5 + $0xf30] sm:$0xff]
        %v1486 = vld [vmem:[#allocation5 + $0xf38] sm:$0xff]
        %v1487 = vld [vmem:[#allocation5 + $0xf40] sm:$0xff]
        %v1488 = vld [vmem:[#allocation5 + $0xf48] sm:$0xff]
        %v1489 = vld [vmem:[#allocation5 + $0xf50] sm:$0xff]
        %v1490 = vld [vmem:[#allocation5 + $0xf58] sm:$0xff]
        %v1491 = vld [vmem:[#allocation5 + $0xf60] sm:$0xff]
        %v1492 = vld [vmem:[#allocation5 + $0xf68] sm:$0xff]
        %v1493 = vld [vmem:[#allocation5 + $0xf70] sm:$0xff]
        %v1494 = vld [vmem:[#allocation5 + $0xf78] sm:$0xff]
        %v1495 = vld [vmem:[#allocation5 + $0xf80] sm:$0xff]
        %v1496 = vld [vmem:[#allocation5 + $0xf88] sm:$0xff]
        %v1497 = vld [vmem:[#allocation5 + $0xf90] sm:$0xff]
        %v1498 = vld [vmem:[#allocation5 + $0xf98] sm:$0xff]
        %v1499 = vld [vmem:[#allocation5 + $0xfa0] sm:$0xff]
        %v1500 = vld [vmem:[#allocation5 + $0xfa8] sm:$0xff]
        %v1501 = vld [vmem:[#allocation5 + $0xfb0] sm:$0xff]
        %v1502 = vld [vmem:[#allocation5 + $0xfb8] sm:$0xff]
        %v1503 = vld [vmem:[#allocation5 + $0xfc0] sm:$0xff]
        %v1504 = vld [vmem:[#allocation5 + $0xfc8] sm:$0xff]
        %v1505 = vld [vmem:[#allocation5 + $0xfd0] sm:$0xff]
        %v1506 = vld [vmem:[#allocation5 + $0xfd8] sm:$0xff]
        %v1507 = vld [vmem:[#allocation5 + $0xfe0] sm:$0xff]
        %v1508 = vld [vmem:[#allocation5 + $0xfe8] sm:$0xff]
        %v1509 = vld [vmem:[#allocation5 + $0xff0] sm:$0xff]
        %v1510 = vld [vmem:[#allocation5 + $0xff8] sm:$0xff]
        %v1511 = vld [vmem:[#allocation7] sm:$0xff]
        %v1513 = vperm.slane %v1511, 0
        %v1514 = vperm.slane %v1511, 1
        %v1515 = vperm.slane %v1511, 2
        %v1516 = vperm.slane %v1511, 3
        %v1517 = vperm.slane %v1511, 4
        %v1518 = vperm.slane %v1511, 5
        %v1519 = vperm.slane %v1511, 6
        %v1520 = vperm.slane %v1511, 7
        %v1593 = vunpack.c.l.b16 %v935
        %v1594 = vunpack.c.l.b16 %v936
        %v1595 = vunpack.c.l.b16 %v937
        %v1596 = vunpack.c.l.b16 %v938
        %v1597 = vunpack.c.l.b16 %v939
        %v1598 = vunpack.c.l.b16 %v940
        %v1599 = vunpack.c.l.b16 %v941
        %v1600 = vunpack.c.l.b16 %v942
        %v1601 = vunpack.c.l.b16 %v943
        %v1602 = vunpack.c.l.b16 %v944
        %v1603 = vunpack.c.l.b16 %v945
        %v1604 = vunpack.c.l.b16 %v946
        %v1605 = vunpack.c.l.b16 %v947
        %v1606 = vunpack.c.l.b16 %v948
        %v1607 = vunpack.c.l.b16 %v949
        %v1608 = vunpack.c.l.b16 %v950
        %v1609 = vunpack.c.l.b16 %v951
        %v1610 = vunpack.c.l.b16 %v952
        %v1611 = vunpack.c.l.b16 %v953
        %v1612 = vunpack.c.l.b16 %v954
        %v1613 = vunpack.c.l.b16 %v955
        %v1614 = vunpack.c.l.b16 %v956
        %v1615 = vunpack.c.l.b16 %v957
        %v1616 = vunpack.c.l.b16 %v958
        %v1617 = vunpack.c.l.b16 %v959
        %v1618 = vunpack.c.l.b16 %v960
        %v1619 = vunpack.c.l.b16 %v961
        %v1620 = vunpack.c.l.b16 %v962
        %v1621 = vunpack.c.l.b16 %v963
        %v1622 = vunpack.c.l.b16 %v964
        %v1623 = vunpack.c.l.b16 %v965
        %v1624 = vunpack.c.l.b16 %v966
        %v1625 = vunpack.c.l.b16 %v967
        %v1626 = vunpack.c.l.b16 %v968
        %v1627 = vunpack.c.l.b16 %v969
        %v1628 = vunpack.c.l.b16 %v970
        %v1629 = vunpack.c.l.b16 %v971
        %v1630 = vunpack.c.l.b16 %v972
        %v1631 = vunpack.c.l.b16 %v973
        %v1632 = vunpack.c.l.b16 %v974
        %v1633 = vunpack.c.l.b16 %v975
        %v1634 = vunpack.c.l.b16 %v976
        %v1635 = vunpack.c.l.b16 %v977
        %v1636 = vunpack.c.l.b16 %v978
        %v1637 = vunpack.c.l.b16 %v979
        %v1638 = vunpack.c.l.b16 %v980
        %v1639 = vunpack.c.l.b16 %v981
        %v1640 = vunpack.c.l.b16 %v982
        %v1641 = vunpack.c.l.b16 %v983
        %v1642 = vunpack.c.l.b16 %v984
        %v1643 = vunpack.c.l.b16 %v985
        %v1644 = vunpack.c.l.b16 %v986
        %v1645 = vunpack.c.l.b16 %v987
        %v1646 = vunpack.c.l.b16 %v988
        %v1647 = vunpack.c.l.b16 %v989
        %v1648 = vunpack.c.l.b16 %v990
        %v1649 = vunpack.c.l.b16 %v991
        %v1650 = vunpack.c.l.b16 %v992
        %v1651 = vunpack.c.l.b16 %v993
        %v1652 = vunpack.c.l.b16 %v994
        %v1653 = vunpack.c.l.b16 %v995
        %v1654 = vunpack.c.l.b16 %v996
        %v1655 = vunpack.c.l.b16 %v997
        %v1656 = vunpack.c.l.b16 %v998
        %vm1657 = vcmask 1041409
        %v1658 = vsel %vm1657, %v1601, %v1593
        %vm1659 = vcmask 1042434
        %v1660 = vsel %vm1659, %v1609, %v1658
        %vm1661 = vcmask 1043459
        %v1662 = vsel %vm1661, %v1617, %v1660
        %vm1663 = vcmask 1044484
        %v1664 = vsel %vm1663, %v1625, %v1662
        %vm1665 = vcmask 1045509
        %v1666 = vsel %vm1665, %v1633, %v1664
        %vm1667 = vcmask 1046534
        %v1668 = vsel %vm1667, %v1641, %v1666
        %vm1669 = vcmask 1047559
        %v1670 = vsel %vm1669, %v1649, %v1668
        %v1671 = vsel %vm1657, %v1602, %v1594
        %v1672 = vsel %vm1659, %v1610, %v1671
        %v1673 = vsel %vm1661, %v1618, %v1672
        %v1674 = vsel %vm1663, %v1626, %v1673
        %v1675 = vsel %vm1665, %v1634, %v1674
        %v1676 = vsel %vm1667, %v1642, %v1675
        %v1677 = vsel %vm1669, %v1650, %v1676
        %v1678 = vsel %vm1657, %v1603, %v1595
        %v1679 = vsel %vm1659, %v1611, %v1678
        %v1680 = vsel %vm1661, %v1619, %v1679
        %v1681 = vsel %vm1663, %v1627, %v1680
        %v1682 = vsel %vm1665, %v1635, %v1681
        %v1683 = vsel %vm1667, %v1643, %v1682
        %v1684 = vsel %vm1669, %v1651, %v1683
        %v1685 = vsel %vm1657, %v1604, %v1596
        %v1686 = vsel %vm1659, %v1612, %v1685
        %v1687 = vsel %vm1661, %v1620, %v1686
        %v1688 = vsel %vm1663, %v1628, %v1687
        %v1689 = vsel %vm1665, %v1636, %v1688
        %v1690 = vsel %vm1667, %v1644, %v1689
        %v1691 = vsel %vm1669, %v1652, %v1690
        %v1692 = vsel %vm1657, %v1605, %v1597
        %v1693 = vsel %vm1659, %v1613, %v1692
        %v1694 = vsel %vm1661, %v1621, %v1693
        %v1695 = vsel %vm1663, %v1629, %v1694
        %v1696 = vsel %vm1665, %v1637, %v1695
        %v1697 = vsel %vm1667, %v1645, %v1696
        %v1698 = vsel %vm1669, %v1653, %v1697
        %v1699 = vsel %vm1657, %v1606, %v1598
        %v1700 = vsel %vm1659, %v1614, %v1699
        %v1701 = vsel %vm1661, %v1622, %v1700
        %v1702 = vsel %vm1663, %v1630, %v1701
        %v1703 = vsel %vm1665, %v1638, %v1702
        %v1704 = vsel %vm1667, %v1646, %v1703
        %v1705 = vsel %vm1669, %v1654, %v1704
        %v1706 = vsel %vm1657, %v1607, %v1599
        %v1707 = vsel %vm1659, %v1615, %v1706
        %v1708 = vsel %vm1661, %v1623, %v1707
        %v1709 = vsel %vm1663, %v1631, %v1708
        %v1710 = vsel %vm1665, %v1639, %v1709
        %v1711 = vsel %vm1667, %v1647, %v1710
        %v1712 = vsel %vm1669, %v1655, %v1711
        %v1713 = vsel %vm1657, %v1608, %v1600
        %v1714 = vsel %vm1659, %v1616, %v1713
        %v1715 = vsel %vm1661, %v1624, %v1714
        %v1716 = vsel %vm1663, %v1632, %v1715
        %v1717 = vsel %vm1665, %v1640, %v1716
        %v1718 = vsel %vm1667, %v1648, %v1717
        %v1719 = vsel %vm1669, %v1656, %v1718
        %v1720 = vpack.c.b16 %v1670, %v1670
        %v1721 = vpack.c.b16 %v1677, %v1677
        %v1722 = vpack.c.b16 %v1684, %v1684
        %v1723 = vpack.c.b16 %v1691, %v1691
        %v1724 = vpack.c.b16 %v1698, %v1698
        %v1725 = vpack.c.b16 %v1705, %v1705
        %v1726 = vpack.c.b16 %v1712, %v1712
        %v1727 = vpack.c.b16 %v1719, %v1719
        %v2248 = vunpack.c.l.b16 %v999
        %v2249 = vunpack.c.h.b16 %v999
        %v2250 = vunpack.c.l.b16 %v1000
        %v2251 = vunpack.c.h.b16 %v1000
        %v2252 = vunpack.c.l.b16 %v1001
        %v2253 = vunpack.c.h.b16 %v1001
        %v2254 = vunpack.c.l.b16 %v1002
        %v2255 = vunpack.c.h.b16 %v1002
        %v2256 = vunpack.c.l.b16 %v1003
        %v2257 = vunpack.c.h.b16 %v1003
        %v2258 = vunpack.c.l.b16 %v1004
        %v2259 = vunpack.c.h.b16 %v1004
        %v2260 = vunpack.c.l.b16 %v1005
        %v2261 = vunpack.c.h.b16 %v1005
        %v2262 = vunpack.c.l.b16 %v1006
        %v2263 = vunpack.c.h.b16 %v1006
        %v2264 = vunpack.c.l.b16 %v1007
        %v2265 = vunpack.c.h.b16 %v1007
        %v2266 = vunpack.c.l.b16 %v1008
        %v2267 = vunpack.c.h.b16 %v1008
        %v2268 = vunpack.c.l.b16 %v1009
        %v2269 = vunpack.c.h.b16 %v1009
        %v2270 = vunpack.c.l.b16 %v1010
        %v2271 = vunpack.c.h.b16 %v1010
        %v2272 = vunpack.c.l.b16 %v1011
        %v2273 = vunpack.c.h.b16 %v1011
        %v2274 = vunpack.c.l.b16 %v1012
        %v2275 = vunpack.c.h.b16 %v1012
        %v2276 = vunpack.c.l.b16 %v1013
        %v2277 = vunpack.c.h.b16 %v1013
        %v2278 = vunpack.c.l.b16 %v1014
        %v2279 = vunpack.c.h.b16 %v1014
        %v2280 = vunpack.c.l.b16 %v1015
        %v2281 = vunpack.c.h.b16 %v1015
        %v2282 = vunpack.c.l.b16 %v1016
        %v2283 = vunpack.c.h.b16 %v1016
        %v2284 = vunpack.c.l.b16 %v1017
        %v2285 = vunpack.c.h.b16 %v1017
        %v2286 = vunpack.c.l.b16 %v1018
        %v2287 = vunpack.c.h.b16 %v1018
        %v2288 = vunpack.c.l.b16 %v1019
        %v2289 = vunpack.c.h.b16 %v1019
        %v2290 = vunpack.c.l.b16 %v1020
        %v2291 = vunpack.c.h.b16 %v1020
        %v2292 = vunpack.c.l.b16 %v1021
        %v2293 = vunpack.c.h.b16 %v1021
        %v2294 = vunpack.c.l.b16 %v1022
        %v2295 = vunpack.c.h.b16 %v1022
        %v2296 = vunpack.c.l.b16 %v1023
        %v2297 = vunpack.c.h.b16 %v1023
        %v2298 = vunpack.c.l.b16 %v1024
        %v2299 = vunpack.c.h.b16 %v1024
        %v2300 = vunpack.c.l.b16 %v1025
        %v2301 = vunpack.c.h.b16 %v1025
        %v2302 = vunpack.c.l.b16 %v1026
        %v2303 = vunpack.c.h.b16 %v1026
        %v2304 = vunpack.c.l.b16 %v1027
        %v2305 = vunpack.c.h.b16 %v1027
        %v2306 = vunpack.c.l.b16 %v1028
        %v2307 = vunpack.c.h.b16 %v1028
        %v2308 = vunpack.c.l.b16 %v1029
        %v2309 = vunpack.c.h.b16 %v1029
        %v2310 = vunpack.c.l.b16 %v1030
        %v2311 = vunpack.c.h.b16 %v1030
        %v2312 = vunpack.c.l.b16 %v1031
        %v2313 = vunpack.c.h.b16 %v1031
        %v2314 = vunpack.c.l.b16 %v1032
        %v2315 = vunpack.c.h.b16 %v1032
        %v2316 = vunpack.c.l.b16 %v1033
        %v2317 = vunpack.c.h.b16 %v1033
        %v2318 = vunpack.c.l.b16 %v1034
        %v2319 = vunpack.c.h.b16 %v1034
        %v2320 = vunpack.c.l.b16 %v1035
        %v2321 = vunpack.c.h.b16 %v1035
        %v2322 = vunpack.c.l.b16 %v1036
        %v2323 = vunpack.c.h.b16 %v1036
        %v2324 = vunpack.c.l.b16 %v1037
        %v2325 = vunpack.c.h.b16 %v1037
        %v2326 = vunpack.c.l.b16 %v1038
        %v2327 = vunpack.c.h.b16 %v1038
        %v2328 = vunpack.c.l.b16 %v1039
        %v2329 = vunpack.c.h.b16 %v1039
        %v2330 = vunpack.c.l.b16 %v1040
        %v2331 = vunpack.c.h.b16 %v1040
        %v2332 = vunpack.c.l.b16 %v1041
        %v2333 = vunpack.c.h.b16 %v1041
        %v2334 = vunpack.c.l.b16 %v1042
        %v2335 = vunpack.c.h.b16 %v1042
        %v2336 = vunpack.c.l.b16 %v1043
        %v2337 = vunpack.c.h.b16 %v1043
        %v2338 = vunpack.c.l.b16 %v1044
        %v2339 = vunpack.c.h.b16 %v1044
        %v2340 = vunpack.c.l.b16 %v1045
        %v2341 = vunpack.c.h.b16 %v1045
        %v2342 = vunpack.c.l.b16 %v1046
        %v2343 = vunpack.c.h.b16 %v1046
        %v2344 = vunpack.c.l.b16 %v1047
        %v2345 = vunpack.c.h.b16 %v1047
        %v2346 = vunpack.c.l.b16 %v1048
        %v2347 = vunpack.c.h.b16 %v1048
        %v2348 = vunpack.c.l.b16 %v1049
        %v2349 = vunpack.c.h.b16 %v1049
        %v2350 = vunpack.c.l.b16 %v1050
        %v2351 = vunpack.c.h.b16 %v1050
        %v2352 = vunpack.c.l.b16 %v1051
        %v2353 = vunpack.c.h.b16 %v1051
        %v2354 = vunpack.c.l.b16 %v1052
        %v2355 = vunpack.c.h.b16 %v1052
        %v2356 = vunpack.c.l.b16 %v1053
        %v2357 = vunpack.c.h.b16 %v1053
        %v2358 = vunpack.c.l.b16 %v1054
        %v2359 = vunpack.c.h.b16 %v1054
        %v2360 = vunpack.c.l.b16 %v1055
        %v2361 = vunpack.c.h.b16 %v1055
        %v2362 = vunpack.c.l.b16 %v1056
        %v2363 = vunpack.c.h.b16 %v1056
        %v2364 = vunpack.c.l.b16 %v1057
        %v2365 = vunpack.c.h.b16 %v1057
        %v2366 = vunpack.c.l.b16 %v1058
        %v2367 = vunpack.c.h.b16 %v1058
        %v2368 = vunpack.c.l.b16 %v1059
        %v2369 = vunpack.c.h.b16 %v1059
        %v2370 = vunpack.c.l.b16 %v1060
        %v2371 = vunpack.c.h.b16 %v1060
        %v2372 = vunpack.c.l.b16 %v1061
        %v2373 = vunpack.c.h.b16 %v1061
        %v2374 = vunpack.c.l.b16 %v1062
        %v2375 = vunpack.c.h.b16 %v1062
        %v2376 = vunpack.c.l.b16 %v1063
        %v2377 = vunpack.c.h.b16 %v1063
        %v2378 = vunpack.c.l.b16 %v1064
        %v2379 = vunpack.c.h.b16 %v1064
        %v2380 = vunpack.c.l.b16 %v1065
        %v2381 = vunpack.c.h.b16 %v1065
        %v2382 = vunpack.c.l.b16 %v1066
        %v2383 = vunpack.c.h.b16 %v1066
        %v2384 = vunpack.c.l.b16 %v1067
        %v2385 = vunpack.c.h.b16 %v1067
        %v2386 = vunpack.c.l.b16 %v1068
        %v2387 = vunpack.c.h.b16 %v1068
        %v2388 = vunpack.c.l.b16 %v1069
        %v2389 = vunpack.c.h.b16 %v1069
        %v2390 = vunpack.c.l.b16 %v1070
        %v2391 = vunpack.c.h.b16 %v1070
        %v2392 = vunpack.c.l.b16 %v1071
        %v2393 = vunpack.c.h.b16 %v1071
        %v2394 = vunpack.c.l.b16 %v1072
        %v2395 = vunpack.c.h.b16 %v1072
        %v2396 = vunpack.c.l.b16 %v1073
        %v2397 = vunpack.c.h.b16 %v1073
        %v2398 = vunpack.c.l.b16 %v1074
        %v2399 = vunpack.c.h.b16 %v1074
        %v2400 = vunpack.c.l.b16 %v1075
        %v2401 = vunpack.c.h.b16 %v1075
        %v2402 = vunpack.c.l.b16 %v1076
        %v2403 = vunpack.c.h.b16 %v1076
        %v2404 = vunpack.c.l.b16 %v1077
        %v2405 = vunpack.c.h.b16 %v1077
        %v2406 = vunpack.c.l.b16 %v1078
        %v2407 = vunpack.c.h.b16 %v1078
        %v2408 = vunpack.c.l.b16 %v1079
        %v2409 = vunpack.c.h.b16 %v1079
        %v2410 = vunpack.c.l.b16 %v1080
        %v2411 = vunpack.c.h.b16 %v1080
        %v2412 = vunpack.c.l.b16 %v1081
        %v2413 = vunpack.c.h.b16 %v1081
        %v2414 = vunpack.c.l.b16 %v1082
        %v2415 = vunpack.c.h.b16 %v1082
        %v2416 = vunpack.c.l.b16 %v1083
        %v2417 = vunpack.c.h.b16 %v1083
        %v2418 = vunpack.c.l.b16 %v1084
        %v2419 = vunpack.c.h.b16 %v1084
        %v2420 = vunpack.c.l.b16 %v1085
        %v2421 = vunpack.c.h.b16 %v1085
        %v2422 = vunpack.c.l.b16 %v1086
        %v2423 = vunpack.c.h.b16 %v1086
        %v2424 = vunpack.c.l.b16 %v1087
        %v2425 = vunpack.c.h.b16 %v1087
        %v2426 = vunpack.c.l.b16 %v1088
        %v2427 = vunpack.c.h.b16 %v1088
        %v2428 = vunpack.c.l.b16 %v1089
        %v2429 = vunpack.c.h.b16 %v1089
        %v2430 = vunpack.c.l.b16 %v1090
        %v2431 = vunpack.c.h.b16 %v1090
        %v2432 = vunpack.c.l.b16 %v1091
        %v2433 = vunpack.c.h.b16 %v1091
        %v2434 = vunpack.c.l.b16 %v1092
        %v2435 = vunpack.c.h.b16 %v1092
        %v2436 = vunpack.c.l.b16 %v1093
        %v2437 = vunpack.c.h.b16 %v1093
        %v2438 = vunpack.c.l.b16 %v1094
        %v2439 = vunpack.c.h.b16 %v1094
        %v2440 = vunpack.c.l.b16 %v1095
        %v2441 = vunpack.c.h.b16 %v1095
        %v2442 = vunpack.c.l.b16 %v1096
        %v2443 = vunpack.c.h.b16 %v1096
        %v2444 = vunpack.c.l.b16 %v1097
        %v2445 = vunpack.c.h.b16 %v1097
        %v2446 = vunpack.c.l.b16 %v1098
        %v2447 = vunpack.c.h.b16 %v1098
        %v2448 = vunpack.c.l.b16 %v1099
        %v2449 = vunpack.c.h.b16 %v1099
        %v2450 = vunpack.c.l.b16 %v1100
        %v2451 = vunpack.c.h.b16 %v1100
        %v2452 = vunpack.c.l.b16 %v1101
        %v2453 = vunpack.c.h.b16 %v1101
        %v2454 = vunpack.c.l.b16 %v1102
        %v2455 = vunpack.c.h.b16 %v1102
        %v2456 = vunpack.c.l.b16 %v1103
        %v2457 = vunpack.c.h.b16 %v1103
        %v2458 = vunpack.c.l.b16 %v1104
        %v2459 = vunpack.c.h.b16 %v1104
        %v2460 = vunpack.c.l.b16 %v1105
        %v2461 = vunpack.c.h.b16 %v1105
        %v2462 = vunpack.c.l.b16 %v1106
        %v2463 = vunpack.c.h.b16 %v1106
        %v2464 = vunpack.c.l.b16 %v1107
        %v2465 = vunpack.c.h.b16 %v1107
        %v2466 = vunpack.c.l.b16 %v1108
        %v2467 = vunpack.c.h.b16 %v1108
        %v2468 = vunpack.c.l.b16 %v1109
        %v2469 = vunpack.c.h.b16 %v1109
        %v2470 = vunpack.c.l.b16 %v1110
        %v2471 = vunpack.c.h.b16 %v1110
        %v2472 = vunpack.c.l.b16 %v1111
        %v2473 = vunpack.c.h.b16 %v1111
        %v2474 = vunpack.c.l.b16 %v1112
        %v2475 = vunpack.c.h.b16 %v1112
        %v2476 = vunpack.c.l.b16 %v1113
        %v2477 = vunpack.c.h.b16 %v1113
        %v2478 = vunpack.c.l.b16 %v1114
        %v2479 = vunpack.c.h.b16 %v1114
        %v2480 = vunpack.c.l.b16 %v1115
        %v2481 = vunpack.c.h.b16 %v1115
        %v2482 = vunpack.c.l.b16 %v1116
        %v2483 = vunpack.c.h.b16 %v1116
        %v2484 = vunpack.c.l.b16 %v1117
        %v2485 = vunpack.c.h.b16 %v1117
        %v2486 = vunpack.c.l.b16 %v1118
        %v2487 = vunpack.c.h.b16 %v1118
        %v2488 = vunpack.c.l.b16 %v1119
        %v2489 = vunpack.c.h.b16 %v1119
        %v2490 = vunpack.c.l.b16 %v1120
        %v2491 = vunpack.c.h.b16 %v1120
        %v2492 = vunpack.c.l.b16 %v1121
        %v2493 = vunpack.c.h.b16 %v1121
        %v2494 = vunpack.c.l.b16 %v1122
        %v2495 = vunpack.c.h.b16 %v1122
        %v2496 = vunpack.c.l.b16 %v1123
        %v2497 = vunpack.c.h.b16 %v1123
        %v2498 = vunpack.c.l.b16 %v1124
        %v2499 = vunpack.c.h.b16 %v1124
        %v2500 = vunpack.c.l.b16 %v1125
        %v2501 = vunpack.c.h.b16 %v1125
        %v2502 = vunpack.c.l.b16 %v1126
        %v2503 = vunpack.c.h.b16 %v1126
        %v2504 = vunpack.c.l.b16 %v1127
        %v2505 = vunpack.c.h.b16 %v1127
        %v2506 = vunpack.c.l.b16 %v1128
        %v2507 = vunpack.c.h.b16 %v1128
        %v2508 = vunpack.c.l.b16 %v1129
        %v2509 = vunpack.c.h.b16 %v1129
        %v2510 = vunpack.c.l.b16 %v1130
        %v2511 = vunpack.c.h.b16 %v1130
        %v2512 = vunpack.c.l.b16 %v1131
        %v2513 = vunpack.c.h.b16 %v1131
        %v2514 = vunpack.c.l.b16 %v1132
        %v2515 = vunpack.c.h.b16 %v1132
        %v2516 = vunpack.c.l.b16 %v1133
        %v2517 = vunpack.c.h.b16 %v1133
        %v2518 = vunpack.c.l.b16 %v1134
        %v2519 = vunpack.c.h.b16 %v1134
        %v2520 = vunpack.c.l.b16 %v1135
        %v2521 = vunpack.c.h.b16 %v1135
        %v2522 = vunpack.c.l.b16 %v1136
        %v2523 = vunpack.c.h.b16 %v1136
        %v2524 = vunpack.c.l.b16 %v1137
        %v2525 = vunpack.c.h.b16 %v1137
        %v2526 = vunpack.c.l.b16 %v1138
        %v2527 = vunpack.c.h.b16 %v1138
        %v2528 = vunpack.c.l.b16 %v1139
        %v2529 = vunpack.c.h.b16 %v1139
        %v2530 = vunpack.c.l.b16 %v1140
        %v2531 = vunpack.c.h.b16 %v1140
        %v2532 = vunpack.c.l.b16 %v1141
        %v2533 = vunpack.c.h.b16 %v1141
        %v2534 = vunpack.c.l.b16 %v1142
        %v2535 = vunpack.c.h.b16 %v1142
        %v2536 = vunpack.c.l.b16 %v1143
        %v2537 = vunpack.c.h.b16 %v1143
        %v2538 = vunpack.c.l.b16 %v1144
        %v2539 = vunpack.c.h.b16 %v1144
        %v2540 = vunpack.c.l.b16 %v1145
        %v2541 = vunpack.c.h.b16 %v1145
        %v2542 = vunpack.c.l.b16 %v1146
        %v2543 = vunpack.c.h.b16 %v1146
        %v2544 = vunpack.c.l.b16 %v1147
        %v2545 = vunpack.c.h.b16 %v1147
        %v2546 = vunpack.c.l.b16 %v1148
        %v2547 = vunpack.c.h.b16 %v1148
        %v2548 = vunpack.c.l.b16 %v1149
        %v2549 = vunpack.c.h.b16 %v1149
        %v2550 = vunpack.c.l.b16 %v1150
        %v2551 = vunpack.c.h.b16 %v1150
        %v2552 = vunpack.c.l.b16 %v1151
        %v2553 = vunpack.c.h.b16 %v1151
        %v2554 = vunpack.c.l.b16 %v1152
        %v2555 = vunpack.c.h.b16 %v1152
        %v2556 = vunpack.c.l.b16 %v1153
        %v2557 = vunpack.c.h.b16 %v1153
        %v2558 = vunpack.c.l.b16 %v1154
        %v2559 = vunpack.c.h.b16 %v1154
        %v2560 = vunpack.c.l.b16 %v1155
        %v2561 = vunpack.c.h.b16 %v1155
        %v2562 = vunpack.c.l.b16 %v1156
        %v2563 = vunpack.c.h.b16 %v1156
        %v2564 = vunpack.c.l.b16 %v1157
        %v2565 = vunpack.c.h.b16 %v1157
        %v2566 = vunpack.c.l.b16 %v1158
        %v2567 = vunpack.c.h.b16 %v1158
        %v2568 = vunpack.c.l.b16 %v1159
        %v2569 = vunpack.c.h.b16 %v1159
        %v2570 = vunpack.c.l.b16 %v1160
        %v2571 = vunpack.c.h.b16 %v1160
        %v2572 = vunpack.c.l.b16 %v1161
        %v2573 = vunpack.c.h.b16 %v1161
        %v2574 = vunpack.c.l.b16 %v1162
        %v2575 = vunpack.c.h.b16 %v1162
        %v2576 = vunpack.c.l.b16 %v1163
        %v2577 = vunpack.c.h.b16 %v1163
        %v2578 = vunpack.c.l.b16 %v1164
        %v2579 = vunpack.c.h.b16 %v1164
        %v2580 = vunpack.c.l.b16 %v1165
        %v2581 = vunpack.c.h.b16 %v1165
        %v2582 = vunpack.c.l.b16 %v1166
        %v2583 = vunpack.c.h.b16 %v1166
        %v2584 = vunpack.c.l.b16 %v1167
        %v2585 = vunpack.c.h.b16 %v1167
        %v2586 = vunpack.c.l.b16 %v1168
        %v2587 = vunpack.c.h.b16 %v1168
        %v2588 = vunpack.c.l.b16 %v1169
        %v2589 = vunpack.c.h.b16 %v1169
        %v2590 = vunpack.c.l.b16 %v1170
        %v2591 = vunpack.c.h.b16 %v1170
        %v2592 = vunpack.c.l.b16 %v1171
        %v2593 = vunpack.c.h.b16 %v1171
        %v2594 = vunpack.c.l.b16 %v1172
        %v2595 = vunpack.c.h.b16 %v1172
        %v2596 = vunpack.c.l.b16 %v1173
        %v2597 = vunpack.c.h.b16 %v1173
        %v2598 = vunpack.c.l.b16 %v1174
        %v2599 = vunpack.c.h.b16 %v1174
        %v2600 = vunpack.c.l.b16 %v1175
        %v2601 = vunpack.c.h.b16 %v1175
        %v2602 = vunpack.c.l.b16 %v1176
        %v2603 = vunpack.c.h.b16 %v1176
        %v2604 = vunpack.c.l.b16 %v1177
        %v2605 = vunpack.c.h.b16 %v1177
        %v2606 = vunpack.c.l.b16 %v1178
        %v2607 = vunpack.c.h.b16 %v1178
        %v2608 = vunpack.c.l.b16 %v1179
        %v2609 = vunpack.c.h.b16 %v1179
        %v2610 = vunpack.c.l.b16 %v1180
        %v2611 = vunpack.c.h.b16 %v1180
        %v2612 = vunpack.c.l.b16 %v1181
        %v2613 = vunpack.c.h.b16 %v1181
        %v2614 = vunpack.c.l.b16 %v1182
        %v2615 = vunpack.c.h.b16 %v1182
        %v2616 = vunpack.c.l.b16 %v1183
        %v2617 = vunpack.c.h.b16 %v1183
        %v2618 = vunpack.c.l.b16 %v1184
        %v2619 = vunpack.c.h.b16 %v1184
        %v2620 = vunpack.c.l.b16 %v1185
        %v2621 = vunpack.c.h.b16 %v1185
        %v2622 = vunpack.c.l.b16 %v1186
        %v2623 = vunpack.c.h.b16 %v1186
        %v2624 = vunpack.c.l.b16 %v1187
        %v2625 = vunpack.c.h.b16 %v1187
        %v2626 = vunpack.c.l.b16 %v1188
        %v2627 = vunpack.c.h.b16 %v1188
        %v2628 = vunpack.c.l.b16 %v1189
        %v2629 = vunpack.c.h.b16 %v1189
        %v2630 = vunpack.c.l.b16 %v1190
        %v2631 = vunpack.c.h.b16 %v1190
        %v2632 = vunpack.c.l.b16 %v1191
        %v2633 = vunpack.c.h.b16 %v1191
        %v2634 = vunpack.c.l.b16 %v1192
        %v2635 = vunpack.c.h.b16 %v1192
        %v2636 = vunpack.c.l.b16 %v1193
        %v2637 = vunpack.c.h.b16 %v1193
        %v2638 = vunpack.c.l.b16 %v1194
        %v2639 = vunpack.c.h.b16 %v1194
        %v2640 = vunpack.c.l.b16 %v1195
        %v2641 = vunpack.c.h.b16 %v1195
        %v2642 = vunpack.c.l.b16 %v1196
        %v2643 = vunpack.c.h.b16 %v1196
        %v2644 = vunpack.c.l.b16 %v1197
        %v2645 = vunpack.c.h.b16 %v1197
        %v2646 = vunpack.c.l.b16 %v1198
        %v2647 = vunpack.c.h.b16 %v1198
        %v2648 = vunpack.c.l.b16 %v1199
        %v2649 = vunpack.c.h.b16 %v1199
        %v2650 = vunpack.c.l.b16 %v1200
        %v2651 = vunpack.c.h.b16 %v1200
        %v2652 = vunpack.c.l.b16 %v1201
        %v2653 = vunpack.c.h.b16 %v1201
        %v2654 = vunpack.c.l.b16 %v1202
        %v2655 = vunpack.c.h.b16 %v1202
        %v2656 = vunpack.c.l.b16 %v1203
        %v2657 = vunpack.c.h.b16 %v1203
        %v2658 = vunpack.c.l.b16 %v1204
        %v2659 = vunpack.c.h.b16 %v1204
        %v2660 = vunpack.c.l.b16 %v1205
        %v2661 = vunpack.c.h.b16 %v1205
        %v2662 = vunpack.c.l.b16 %v1206
        %v2663 = vunpack.c.h.b16 %v1206
        %v2664 = vunpack.c.l.b16 %v1207
        %v2665 = vunpack.c.h.b16 %v1207
        %v2666 = vunpack.c.l.b16 %v1208
        %v2667 = vunpack.c.h.b16 %v1208
        %v2668 = vunpack.c.l.b16 %v1209
        %v2669 = vunpack.c.h.b16 %v1209
        %v2670 = vunpack.c.l.b16 %v1210
        %v2671 = vunpack.c.h.b16 %v1210
        %v2672 = vunpack.c.l.b16 %v1211
        %v2673 = vunpack.c.h.b16 %v1211
        %v2674 = vunpack.c.l.b16 %v1212
        %v2675 = vunpack.c.h.b16 %v1212
        %v2676 = vunpack.c.l.b16 %v1213
        %v2677 = vunpack.c.h.b16 %v1213
        %v2678 = vunpack.c.l.b16 %v1214
        %v2679 = vunpack.c.h.b16 %v1214
        %v2680 = vunpack.c.l.b16 %v1215
        %v2681 = vunpack.c.h.b16 %v1215
        %v2682 = vunpack.c.l.b16 %v1216
        %v2683 = vunpack.c.h.b16 %v1216
        %v2684 = vunpack.c.l.b16 %v1217
        %v2685 = vunpack.c.h.b16 %v1217
        %v2686 = vunpack.c.l.b16 %v1218
        %v2687 = vunpack.c.h.b16 %v1218
        %v2688 = vunpack.c.l.b16 %v1219
        %v2689 = vunpack.c.h.b16 %v1219
        %v2690 = vunpack.c.l.b16 %v1220
        %v2691 = vunpack.c.h.b16 %v1220
        %v2692 = vunpack.c.l.b16 %v1221
        %v2693 = vunpack.c.h.b16 %v1221
        %v2694 = vunpack.c.l.b16 %v1222
        %v2695 = vunpack.c.h.b16 %v1222
        %v2696 = vunpack.c.l.b16 %v1223
        %v2697 = vunpack.c.h.b16 %v1223
        %v2698 = vunpack.c.l.b16 %v1224
        %v2699 = vunpack.c.h.b16 %v1224
        %v2700 = vunpack.c.l.b16 %v1225
        %v2701 = vunpack.c.h.b16 %v1225
        %v2702 = vunpack.c.l.b16 %v1226
        %v2703 = vunpack.c.h.b16 %v1226
        %v2704 = vunpack.c.l.b16 %v1227
        %v2705 = vunpack.c.h.b16 %v1227
        %v2706 = vunpack.c.l.b16 %v1228
        %v2707 = vunpack.c.h.b16 %v1228
        %v2708 = vunpack.c.l.b16 %v1229
        %v2709 = vunpack.c.h.b16 %v1229
        %v2710 = vunpack.c.l.b16 %v1230
        %v2711 = vunpack.c.h.b16 %v1230
        %v2712 = vunpack.c.l.b16 %v1231
        %v2713 = vunpack.c.h.b16 %v1231
        %v2714 = vunpack.c.l.b16 %v1232
        %v2715 = vunpack.c.h.b16 %v1232
        %v2716 = vunpack.c.l.b16 %v1233
        %v2717 = vunpack.c.h.b16 %v1233
        %v2718 = vunpack.c.l.b16 %v1234
        %v2719 = vunpack.c.h.b16 %v1234
        %v2720 = vunpack.c.l.b16 %v1235
        %v2721 = vunpack.c.h.b16 %v1235
        %v2722 = vunpack.c.l.b16 %v1236
        %v2723 = vunpack.c.h.b16 %v1236
        %v2724 = vunpack.c.l.b16 %v1237
        %v2725 = vunpack.c.h.b16 %v1237
        %v2726 = vunpack.c.l.b16 %v1238
        %v2727 = vunpack.c.h.b16 %v1238
        %v2728 = vunpack.c.l.b16 %v1239
        %v2729 = vunpack.c.h.b16 %v1239
        %v2730 = vunpack.c.l.b16 %v1240
        %v2731 = vunpack.c.h.b16 %v1240
        %v2732 = vunpack.c.l.b16 %v1241
        %v2733 = vunpack.c.h.b16 %v1241
        %v2734 = vunpack.c.l.b16 %v1242
        %v2735 = vunpack.c.h.b16 %v1242
        %v2736 = vunpack.c.l.b16 %v1243
        %v2737 = vunpack.c.h.b16 %v1243
        %v2738 = vunpack.c.l.b16 %v1244
        %v2739 = vunpack.c.h.b16 %v1244
        %v2740 = vunpack.c.l.b16 %v1245
        %v2741 = vunpack.c.h.b16 %v1245
        %v2742 = vunpack.c.l.b16 %v1246
        %v2743 = vunpack.c.h.b16 %v1246
        %v2744 = vunpack.c.l.b16 %v1247
        %v2745 = vunpack.c.h.b16 %v1247
        %v2746 = vunpack.c.l.b16 %v1248
        %v2747 = vunpack.c.h.b16 %v1248
        %v2748 = vunpack.c.l.b16 %v1249
        %v2749 = vunpack.c.h.b16 %v1249
        %v2750 = vunpack.c.l.b16 %v1250
        %v2751 = vunpack.c.h.b16 %v1250
        %v2752 = vunpack.c.l.b16 %v1251
        %v2753 = vunpack.c.h.b16 %v1251
        %v2754 = vunpack.c.l.b16 %v1252
        %v2755 = vunpack.c.h.b16 %v1252
        %v2756 = vunpack.c.l.b16 %v1253
        %v2757 = vunpack.c.h.b16 %v1253
        %v2758 = vunpack.c.l.b16 %v1254
        %v2759 = vunpack.c.h.b16 %v1254
        %v2760 = vunpack.c.l.b16 %v1255
        %v2761 = vunpack.c.h.b16 %v1255
        %v2762 = vunpack.c.l.b16 %v1256
        %v2763 = vunpack.c.h.b16 %v1256
        %v2764 = vunpack.c.l.b16 %v1257
        %v2765 = vunpack.c.h.b16 %v1257
        %v2766 = vunpack.c.l.b16 %v1258
        %v2767 = vunpack.c.h.b16 %v1258
        %v2768 = vunpack.c.l.b16 %v1259
        %v2769 = vunpack.c.h.b16 %v1259
        %v2770 = vunpack.c.l.b16 %v1260
        %v2771 = vunpack.c.h.b16 %v1260
        %v2772 = vunpack.c.l.b16 %v1261
        %v2773 = vunpack.c.h.b16 %v1261
        %v2774 = vunpack.c.l.b16 %v1262
        %v2775 = vunpack.c.h.b16 %v1262
        %v2776 = vunpack.c.l.b16 %v1263
        %v2777 = vunpack.c.h.b16 %v1263
        %v2778 = vunpack.c.l.b16 %v1264
        %v2779 = vunpack.c.h.b16 %v1264
        %v2780 = vunpack.c.l.b16 %v1265
        %v2781 = vunpack.c.h.b16 %v1265
        %v2782 = vunpack.c.l.b16 %v1266
        %v2783 = vunpack.c.h.b16 %v1266
        %v2784 = vunpack.c.l.b16 %v1267
        %v2785 = vunpack.c.h.b16 %v1267
        %v2786 = vunpack.c.l.b16 %v1268
        %v2787 = vunpack.c.h.b16 %v1268
        %v2788 = vunpack.c.l.b16 %v1269
        %v2789 = vunpack.c.h.b16 %v1269
        %v2790 = vunpack.c.l.b16 %v1270
        %v2791 = vunpack.c.h.b16 %v1270
        %v2792 = vunpack.c.l.b16 %v1271
        %v2793 = vunpack.c.h.b16 %v1271
        %v2794 = vunpack.c.l.b16 %v1272
        %v2795 = vunpack.c.h.b16 %v1272
        %v2796 = vunpack.c.l.b16 %v1273
        %v2797 = vunpack.c.h.b16 %v1273
        %v2798 = vunpack.c.l.b16 %v1274
        %v2799 = vunpack.c.h.b16 %v1274
        %v2800 = vunpack.c.l.b16 %v1275
        %v2801 = vunpack.c.h.b16 %v1275
        %v2802 = vunpack.c.l.b16 %v1276
        %v2803 = vunpack.c.h.b16 %v1276
        %v2804 = vunpack.c.l.b16 %v1277
        %v2805 = vunpack.c.h.b16 %v1277
        %v2806 = vunpack.c.l.b16 %v1278
        %v2807 = vunpack.c.h.b16 %v1278
        %v2808 = vunpack.c.l.b16 %v1279
        %v2809 = vunpack.c.h.b16 %v1279
        %v2810 = vunpack.c.l.b16 %v1280
        %v2811 = vunpack.c.h.b16 %v1280
        %v2812 = vunpack.c.l.b16 %v1281
        %v2813 = vunpack.c.h.b16 %v1281
        %v2814 = vunpack.c.l.b16 %v1282
        %v2815 = vunpack.c.h.b16 %v1282
        %v2816 = vunpack.c.l.b16 %v1283
        %v2817 = vunpack.c.h.b16 %v1283
        %v2818 = vunpack.c.l.b16 %v1284
        %v2819 = vunpack.c.h.b16 %v1284
        %v2820 = vunpack.c.l.b16 %v1285
        %v2821 = vunpack.c.h.b16 %v1285
        %v2822 = vunpack.c.l.b16 %v1286
        %v2823 = vunpack.c.h.b16 %v1286
        %v2824 = vunpack.c.l.b16 %v1287
        %v2825 = vunpack.c.h.b16 %v1287
        %v2826 = vunpack.c.l.b16 %v1288
        %v2827 = vunpack.c.h.b16 %v1288
        %v2828 = vunpack.c.l.b16 %v1289
        %v2829 = vunpack.c.h.b16 %v1289
        %v2830 = vunpack.c.l.b16 %v1290
        %v2831 = vunpack.c.h.b16 %v1290
        %v2832 = vunpack.c.l.b16 %v1291
        %v2833 = vunpack.c.h.b16 %v1291
        %v2834 = vunpack.c.l.b16 %v1292
        %v2835 = vunpack.c.h.b16 %v1292
        %v2836 = vunpack.c.l.b16 %v1293
        %v2837 = vunpack.c.h.b16 %v1293
        %v2838 = vunpack.c.l.b16 %v1294
        %v2839 = vunpack.c.h.b16 %v1294
        %v2840 = vunpack.c.l.b16 %v1295
        %v2841 = vunpack.c.h.b16 %v1295
        %v2842 = vunpack.c.l.b16 %v1296
        %v2843 = vunpack.c.h.b16 %v1296
        %v2844 = vunpack.c.l.b16 %v1297
        %v2845 = vunpack.c.h.b16 %v1297
        %v2846 = vunpack.c.l.b16 %v1298
        %v2847 = vunpack.c.h.b16 %v1298
        %v2848 = vunpack.c.l.b16 %v1299
        %v2849 = vunpack.c.h.b16 %v1299
        %v2850 = vunpack.c.l.b16 %v1300
        %v2851 = vunpack.c.h.b16 %v1300
        %v2852 = vunpack.c.l.b16 %v1301
        %v2853 = vunpack.c.h.b16 %v1301
        %v2854 = vunpack.c.l.b16 %v1302
        %v2855 = vunpack.c.h.b16 %v1302
        %v2856 = vunpack.c.l.b16 %v1303
        %v2857 = vunpack.c.h.b16 %v1303
        %v2858 = vunpack.c.l.b16 %v1304
        %v2859 = vunpack.c.h.b16 %v1304
        %v2860 = vunpack.c.l.b16 %v1305
        %v2861 = vunpack.c.h.b16 %v1305
        %v2862 = vunpack.c.l.b16 %v1306
        %v2863 = vunpack.c.h.b16 %v1306
        %v2864 = vunpack.c.l.b16 %v1307
        %v2865 = vunpack.c.h.b16 %v1307
        %v2866 = vunpack.c.l.b16 %v1308
        %v2867 = vunpack.c.h.b16 %v1308
        %v2868 = vunpack.c.l.b16 %v1309
        %v2869 = vunpack.c.h.b16 %v1309
        %v2870 = vunpack.c.l.b16 %v1310
        %v2871 = vunpack.c.h.b16 %v1310
        %v2872 = vunpack.c.l.b16 %v1311
        %v2873 = vunpack.c.h.b16 %v1311
        %v2874 = vunpack.c.l.b16 %v1312
        %v2875 = vunpack.c.h.b16 %v1312
        %v2876 = vunpack.c.l.b16 %v1313
        %v2877 = vunpack.c.h.b16 %v1313
        %v2878 = vunpack.c.l.b16 %v1314
        %v2879 = vunpack.c.h.b16 %v1314
        %v2880 = vunpack.c.l.b16 %v1315
        %v2881 = vunpack.c.h.b16 %v1315
        %v2882 = vunpack.c.l.b16 %v1316
        %v2883 = vunpack.c.h.b16 %v1316
        %v2884 = vunpack.c.l.b16 %v1317
        %v2885 = vunpack.c.h.b16 %v1317
        %v2886 = vunpack.c.l.b16 %v1318
        %v2887 = vunpack.c.h.b16 %v1318
        %v2888 = vunpack.c.l.b16 %v1319
        %v2889 = vunpack.c.h.b16 %v1319
        %v2890 = vunpack.c.l.b16 %v1320
        %v2891 = vunpack.c.h.b16 %v1320
        %v2892 = vunpack.c.l.b16 %v1321
        %v2893 = vunpack.c.h.b16 %v1321
        %v2894 = vunpack.c.l.b16 %v1322
        %v2895 = vunpack.c.h.b16 %v1322
        %v2896 = vunpack.c.l.b16 %v1323
        %v2897 = vunpack.c.h.b16 %v1323
        %v2898 = vunpack.c.l.b16 %v1324
        %v2899 = vunpack.c.h.b16 %v1324
        %v2900 = vunpack.c.l.b16 %v1325
        %v2901 = vunpack.c.h.b16 %v1325
        %v2902 = vunpack.c.l.b16 %v1326
        %v2903 = vunpack.c.h.b16 %v1326
        %v2904 = vunpack.c.l.b16 %v1327
        %v2905 = vunpack.c.h.b16 %v1327
        %v2906 = vunpack.c.l.b16 %v1328
        %v2907 = vunpack.c.h.b16 %v1328
        %v2908 = vunpack.c.l.b16 %v1329
        %v2909 = vunpack.c.h.b16 %v1329
        %v2910 = vunpack.c.l.b16 %v1330
        %v2911 = vunpack.c.h.b16 %v1330
        %v2912 = vunpack.c.l.b16 %v1331
        %v2913 = vunpack.c.h.b16 %v1331
        %v2914 = vunpack.c.l.b16 %v1332
        %v2915 = vunpack.c.h.b16 %v1332
        %v2916 = vunpack.c.l.b16 %v1333
        %v2917 = vunpack.c.h.b16 %v1333
        %v2918 = vunpack.c.l.b16 %v1334
        %v2919 = vunpack.c.h.b16 %v1334
        %v2920 = vunpack.c.l.b16 %v1335
        %v2921 = vunpack.c.h.b16 %v1335
        %v2922 = vunpack.c.l.b16 %v1336
        %v2923 = vunpack.c.h.b16 %v1336
        %v2924 = vunpack.c.l.b16 %v1337
        %v2925 = vunpack.c.h.b16 %v1337
        %v2926 = vunpack.c.l.b16 %v1338
        %v2927 = vunpack.c.h.b16 %v1338
        %v2928 = vunpack.c.l.b16 %v1339
        %v2929 = vunpack.c.h.b16 %v1339
        %v2930 = vunpack.c.l.b16 %v1340
        %v2931 = vunpack.c.h.b16 %v1340
        %v2932 = vunpack.c.l.b16 %v1341
        %v2933 = vunpack.c.h.b16 %v1341
        %v2934 = vunpack.c.l.b16 %v1342
        %v2935 = vunpack.c.h.b16 %v1342
        %v2936 = vunpack.c.l.b16 %v1343
        %v2937 = vunpack.c.h.b16 %v1343
        %v2938 = vunpack.c.l.b16 %v1344
        %v2939 = vunpack.c.h.b16 %v1344
        %v2940 = vunpack.c.l.b16 %v1345
        %v2941 = vunpack.c.h.b16 %v1345
        %v2942 = vunpack.c.l.b16 %v1346
        %v2943 = vunpack.c.h.b16 %v1346
        %v2944 = vunpack.c.l.b16 %v1347
        %v2945 = vunpack.c.h.b16 %v1347
        %v2946 = vunpack.c.l.b16 %v1348
        %v2947 = vunpack.c.h.b16 %v1348
        %v2948 = vunpack.c.l.b16 %v1349
        %v2949 = vunpack.c.h.b16 %v1349
        %v2950 = vunpack.c.l.b16 %v1350
        %v2951 = vunpack.c.h.b16 %v1350
        %v2952 = vunpack.c.l.b16 %v1351
        %v2953 = vunpack.c.h.b16 %v1351
        %v2954 = vunpack.c.l.b16 %v1352
        %v2955 = vunpack.c.h.b16 %v1352
        %v2956 = vunpack.c.l.b16 %v1353
        %v2957 = vunpack.c.h.b16 %v1353
        %v2958 = vunpack.c.l.b16 %v1354
        %v2959 = vunpack.c.h.b16 %v1354
        %v2960 = vunpack.c.l.b16 %v1355
        %v2961 = vunpack.c.h.b16 %v1355
        %v2962 = vunpack.c.l.b16 %v1356
        %v2963 = vunpack.c.h.b16 %v1356
        %v2964 = vunpack.c.l.b16 %v1357
        %v2965 = vunpack.c.h.b16 %v1357
        %v2966 = vunpack.c.l.b16 %v1358
        %v2967 = vunpack.c.h.b16 %v1358
        %v2968 = vunpack.c.l.b16 %v1359
        %v2969 = vunpack.c.h.b16 %v1359
        %v2970 = vunpack.c.l.b16 %v1360
        %v2971 = vunpack.c.h.b16 %v1360
        %v2972 = vunpack.c.l.b16 %v1361
        %v2973 = vunpack.c.h.b16 %v1361
        %v2974 = vunpack.c.l.b16 %v1362
        %v2975 = vunpack.c.h.b16 %v1362
        %v2976 = vunpack.c.l.b16 %v1363
        %v2977 = vunpack.c.h.b16 %v1363
        %v2978 = vunpack.c.l.b16 %v1364
        %v2979 = vunpack.c.h.b16 %v1364
        %v2980 = vunpack.c.l.b16 %v1365
        %v2981 = vunpack.c.h.b16 %v1365
        %v2982 = vunpack.c.l.b16 %v1366
        %v2983 = vunpack.c.h.b16 %v1366
        %v2984 = vunpack.c.l.b16 %v1367
        %v2985 = vunpack.c.h.b16 %v1367
        %v2986 = vunpack.c.l.b16 %v1368
        %v2987 = vunpack.c.h.b16 %v1368
        %v2988 = vunpack.c.l.b16 %v1369
        %v2989 = vunpack.c.h.b16 %v1369
        %v2990 = vunpack.c.l.b16 %v1370
        %v2991 = vunpack.c.h.b16 %v1370
        %v2992 = vunpack.c.l.b16 %v1371
        %v2993 = vunpack.c.h.b16 %v1371
        %v2994 = vunpack.c.l.b16 %v1372
        %v2995 = vunpack.c.h.b16 %v1372
        %v2996 = vunpack.c.l.b16 %v1373
        %v2997 = vunpack.c.h.b16 %v1373
        %v2998 = vunpack.c.l.b16 %v1374
        %v2999 = vunpack.c.h.b16 %v1374
        %v3000 = vunpack.c.l.b16 %v1375
        %v3001 = vunpack.c.h.b16 %v1375
        %v3002 = vunpack.c.l.b16 %v1376
        %v3003 = vunpack.c.h.b16 %v1376
        %v3004 = vunpack.c.l.b16 %v1377
        %v3005 = vunpack.c.h.b16 %v1377
        %v3006 = vunpack.c.l.b16 %v1378
        %v3007 = vunpack.c.h.b16 %v1378
        %v3008 = vunpack.c.l.b16 %v1379
        %v3009 = vunpack.c.h.b16 %v1379
        %v3010 = vunpack.c.l.b16 %v1380
        %v3011 = vunpack.c.h.b16 %v1380
        %v3012 = vunpack.c.l.b16 %v1381
        %v3013 = vunpack.c.h.b16 %v1381
        %v3014 = vunpack.c.l.b16 %v1382
        %v3015 = vunpack.c.h.b16 %v1382
        %v3016 = vunpack.c.l.b16 %v1383
        %v3017 = vunpack.c.h.b16 %v1383
        %v3018 = vunpack.c.l.b16 %v1384
        %v3019 = vunpack.c.h.b16 %v1384
        %v3020 = vunpack.c.l.b16 %v1385
        %v3021 = vunpack.c.h.b16 %v1385
        %v3022 = vunpack.c.l.b16 %v1386
        %v3023 = vunpack.c.h.b16 %v1386
        %v3024 = vunpack.c.l.b16 %v1387
        %v3025 = vunpack.c.h.b16 %v1387
        %v3026 = vunpack.c.l.b16 %v1388
        %v3027 = vunpack.c.h.b16 %v1388
        %v3028 = vunpack.c.l.b16 %v1389
        %v3029 = vunpack.c.h.b16 %v1389
        %v3030 = vunpack.c.l.b16 %v1390
        %v3031 = vunpack.c.h.b16 %v1390
        %v3032 = vunpack.c.l.b16 %v1391
        %v3033 = vunpack.c.h.b16 %v1391
        %v3034 = vunpack.c.l.b16 %v1392
        %v3035 = vunpack.c.h.b16 %v1392
        %v3036 = vunpack.c.l.b16 %v1393
        %v3037 = vunpack.c.h.b16 %v1393
        %v3038 = vunpack.c.l.b16 %v1394
        %v3039 = vunpack.c.h.b16 %v1394
        %v3040 = vunpack.c.l.b16 %v1395
        %v3041 = vunpack.c.h.b16 %v1395
        %v3042 = vunpack.c.l.b16 %v1396
        %v3043 = vunpack.c.h.b16 %v1396
        %v3044 = vunpack.c.l.b16 %v1397
        %v3045 = vunpack.c.h.b16 %v1397
        %v3046 = vunpack.c.l.b16 %v1398
        %v3047 = vunpack.c.h.b16 %v1398
        %v3048 = vunpack.c.l.b16 %v1399
        %v3049 = vunpack.c.h.b16 %v1399
        %v3050 = vunpack.c.l.b16 %v1400
        %v3051 = vunpack.c.h.b16 %v1400
        %v3052 = vunpack.c.l.b16 %v1401
        %v3053 = vunpack.c.h.b16 %v1401
        %v3054 = vunpack.c.l.b16 %v1402
        %v3055 = vunpack.c.h.b16 %v1402
        %v3056 = vunpack.c.l.b16 %v1403
        %v3057 = vunpack.c.h.b16 %v1403
        %v3058 = vunpack.c.l.b16 %v1404
        %v3059 = vunpack.c.h.b16 %v1404
        %v3060 = vunpack.c.l.b16 %v1405
        %v3061 = vunpack.c.h.b16 %v1405
        %v3062 = vunpack.c.l.b16 %v1406
        %v3063 = vunpack.c.h.b16 %v1406
        %v3064 = vunpack.c.l.b16 %v1407
        %v3065 = vunpack.c.h.b16 %v1407
        %v3066 = vunpack.c.l.b16 %v1408
        %v3067 = vunpack.c.h.b16 %v1408
        %v3068 = vunpack.c.l.b16 %v1409
        %v3069 = vunpack.c.h.b16 %v1409
        %v3070 = vunpack.c.l.b16 %v1410
        %v3071 = vunpack.c.h.b16 %v1410
        %v3072 = vunpack.c.l.b16 %v1411
        %v3073 = vunpack.c.h.b16 %v1411
        %v3074 = vunpack.c.l.b16 %v1412
        %v3075 = vunpack.c.h.b16 %v1412
        %v3076 = vunpack.c.l.b16 %v1413
        %v3077 = vunpack.c.h.b16 %v1413
        %v3078 = vunpack.c.l.b16 %v1414
        %v3079 = vunpack.c.h.b16 %v1414
        %v3080 = vunpack.c.l.b16 %v1415
        %v3081 = vunpack.c.h.b16 %v1415
        %v3082 = vunpack.c.l.b16 %v1416
        %v3083 = vunpack.c.h.b16 %v1416
        %v3084 = vunpack.c.l.b16 %v1417
        %v3085 = vunpack.c.h.b16 %v1417
        %v3086 = vunpack.c.l.b16 %v1418
        %v3087 = vunpack.c.h.b16 %v1418
        %v3088 = vunpack.c.l.b16 %v1419
        %v3089 = vunpack.c.h.b16 %v1419
        %v3090 = vunpack.c.l.b16 %v1420
        %v3091 = vunpack.c.h.b16 %v1420
        %v3092 = vunpack.c.l.b16 %v1421
        %v3093 = vunpack.c.h.b16 %v1421
        %v3094 = vunpack.c.l.b16 %v1422
        %v3095 = vunpack.c.h.b16 %v1422
        %v3096 = vunpack.c.l.b16 %v1423
        %v3097 = vunpack.c.h.b16 %v1423
        %v3098 = vunpack.c.l.b16 %v1424
        %v3099 = vunpack.c.h.b16 %v1424
        %v3100 = vunpack.c.l.b16 %v1425
        %v3101 = vunpack.c.h.b16 %v1425
        %v3102 = vunpack.c.l.b16 %v1426
        %v3103 = vunpack.c.h.b16 %v1426
        %v3104 = vunpack.c.l.b16 %v1427
        %v3105 = vunpack.c.h.b16 %v1427
        %v3106 = vunpack.c.l.b16 %v1428
        %v3107 = vunpack.c.h.b16 %v1428
        %v3108 = vunpack.c.l.b16 %v1429
        %v3109 = vunpack.c.h.b16 %v1429
        %v3110 = vunpack.c.l.b16 %v1430
        %v3111 = vunpack.c.h.b16 %v1430
        %v3112 = vunpack.c.l.b16 %v1431
        %v3113 = vunpack.c.h.b16 %v1431
        %v3114 = vunpack.c.l.b16 %v1432
        %v3115 = vunpack.c.h.b16 %v1432
        %v3116 = vunpack.c.l.b16 %v1433
        %v3117 = vunpack.c.h.b16 %v1433
        %v3118 = vunpack.c.l.b16 %v1434
        %v3119 = vunpack.c.h.b16 %v1434
        %v3120 = vunpack.c.l.b16 %v1435
        %v3121 = vunpack.c.h.b16 %v1435
        %v3122 = vunpack.c.l.b16 %v1436
        %v3123 = vunpack.c.h.b16 %v1436
        %v3124 = vunpack.c.l.b16 %v1437
        %v3125 = vunpack.c.h.b16 %v1437
        %v3126 = vunpack.c.l.b16 %v1438
        %v3127 = vunpack.c.h.b16 %v1438
        %v3128 = vunpack.c.l.b16 %v1439
        %v3129 = vunpack.c.h.b16 %v1439
        %v3130 = vunpack.c.l.b16 %v1440
        %v3131 = vunpack.c.h.b16 %v1440
        %v3132 = vunpack.c.l.b16 %v1441
        %v3133 = vunpack.c.h.b16 %v1441
        %v3134 = vunpack.c.l.b16 %v1442
        %v3135 = vunpack.c.h.b16 %v1442
        %v3136 = vunpack.c.l.b16 %v1443
        %v3137 = vunpack.c.h.b16 %v1443
        %v3138 = vunpack.c.l.b16 %v1444
        %v3139 = vunpack.c.h.b16 %v1444
        %v3140 = vunpack.c.l.b16 %v1445
        %v3141 = vunpack.c.h.b16 %v1445
        %v3142 = vunpack.c.l.b16 %v1446
        %v3143 = vunpack.c.h.b16 %v1446
        %v3144 = vunpack.c.l.b16 %v1447
        %v3145 = vunpack.c.h.b16 %v1447
        %v3146 = vunpack.c.l.b16 %v1448
        %v3147 = vunpack.c.h.b16 %v1448
        %v3148 = vunpack.c.l.b16 %v1449
        %v3149 = vunpack.c.h.b16 %v1449
        %v3150 = vunpack.c.l.b16 %v1450
        %v3151 = vunpack.c.h.b16 %v1450
        %v3152 = vunpack.c.l.b16 %v1451
        %v3153 = vunpack.c.h.b16 %v1451
        %v3154 = vunpack.c.l.b16 %v1452
        %v3155 = vunpack.c.h.b16 %v1452
        %v3156 = vunpack.c.l.b16 %v1453
        %v3157 = vunpack.c.h.b16 %v1453
        %v3158 = vunpack.c.l.b16 %v1454
        %v3159 = vunpack.c.h.b16 %v1454
        %v3160 = vunpack.c.l.b16 %v1455
        %v3161 = vunpack.c.h.b16 %v1455
        %v3162 = vunpack.c.l.b16 %v1456
        %v3163 = vunpack.c.h.b16 %v1456
        %v3164 = vunpack.c.l.b16 %v1457
        %v3165 = vunpack.c.h.b16 %v1457
        %v3166 = vunpack.c.l.b16 %v1458
        %v3167 = vunpack.c.h.b16 %v1458
        %v3168 = vunpack.c.l.b16 %v1459
        %v3169 = vunpack.c.h.b16 %v1459
        %v3170 = vunpack.c.l.b16 %v1460
        %v3171 = vunpack.c.h.b16 %v1460
        %v3172 = vunpack.c.l.b16 %v1461
        %v3173 = vunpack.c.h.b16 %v1461
        %v3174 = vunpack.c.l.b16 %v1462
        %v3175 = vunpack.c.h.b16 %v1462
        %v3176 = vunpack.c.l.b16 %v1463
        %v3177 = vunpack.c.h.b16 %v1463
        %v3178 = vunpack.c.l.b16 %v1464
        %v3179 = vunpack.c.h.b16 %v1464
        %v3180 = vunpack.c.l.b16 %v1465
        %v3181 = vunpack.c.h.b16 %v1465
        %v3182 = vunpack.c.l.b16 %v1466
        %v3183 = vunpack.c.h.b16 %v1466
        %v3184 = vunpack.c.l.b16 %v1467
        %v3185 = vunpack.c.h.b16 %v1467
        %v3186 = vunpack.c.l.b16 %v1468
        %v3187 = vunpack.c.h.b16 %v1468
        %v3188 = vunpack.c.l.b16 %v1469
        %v3189 = vunpack.c.h.b16 %v1469
        %v3190 = vunpack.c.l.b16 %v1470
        %v3191 = vunpack.c.h.b16 %v1470
        %v3192 = vunpack.c.l.b16 %v1471
        %v3193 = vunpack.c.h.b16 %v1471
        %v3194 = vunpack.c.l.b16 %v1472
        %v3195 = vunpack.c.h.b16 %v1472
        %v3196 = vunpack.c.l.b16 %v1473
        %v3197 = vunpack.c.h.b16 %v1473
        %v3198 = vunpack.c.l.b16 %v1474
        %v3199 = vunpack.c.h.b16 %v1474
        %v3200 = vunpack.c.l.b16 %v1475
        %v3201 = vunpack.c.h.b16 %v1475
        %v3202 = vunpack.c.l.b16 %v1476
        %v3203 = vunpack.c.h.b16 %v1476
        %v3204 = vunpack.c.l.b16 %v1477
        %v3205 = vunpack.c.h.b16 %v1477
        %v3206 = vunpack.c.l.b16 %v1478
        %v3207 = vunpack.c.h.b16 %v1478
        %v3208 = vunpack.c.l.b16 %v1479
        %v3209 = vunpack.c.h.b16 %v1479
        %v3210 = vunpack.c.l.b16 %v1480
        %v3211 = vunpack.c.h.b16 %v1480
        %v3212 = vunpack.c.l.b16 %v1481
        %v3213 = vunpack.c.h.b16 %v1481
        %v3214 = vunpack.c.l.b16 %v1482
        %v3215 = vunpack.c.h.b16 %v1482
        %v3216 = vunpack.c.l.b16 %v1483
        %v3217 = vunpack.c.h.b16 %v1483
        %v3218 = vunpack.c.l.b16 %v1484
        %v3219 = vunpack.c.h.b16 %v1484
        %v3220 = vunpack.c.l.b16 %v1485
        %v3221 = vunpack.c.h.b16 %v1485
        %v3222 = vunpack.c.l.b16 %v1486
        %v3223 = vunpack.c.h.b16 %v1486
        %v3224 = vunpack.c.l.b16 %v1487
        %v3225 = vunpack.c.h.b16 %v1487
        %v3226 = vunpack.c.l.b16 %v1488
        %v3227 = vunpack.c.h.b16 %v1488
        %v3228 = vunpack.c.l.b16 %v1489
        %v3229 = vunpack.c.h.b16 %v1489
        %v3230 = vunpack.c.l.b16 %v1490
        %v3231 = vunpack.c.h.b16 %v1490
        %v3232 = vunpack.c.l.b16 %v1491
        %v3233 = vunpack.c.h.b16 %v1491
        %v3234 = vunpack.c.l.b16 %v1492
        %v3235 = vunpack.c.h.b16 %v1492
        %v3236 = vunpack.c.l.b16 %v1493
        %v3237 = vunpack.c.h.b16 %v1493
        %v3238 = vunpack.c.l.b16 %v1494
        %v3239 = vunpack.c.h.b16 %v1494
        %v3240 = vunpack.c.l.b16 %v1495
        %v3241 = vunpack.c.h.b16 %v1495
        %v3242 = vunpack.c.l.b16 %v1496
        %v3243 = vunpack.c.h.b16 %v1496
        %v3244 = vunpack.c.l.b16 %v1497
        %v3245 = vunpack.c.h.b16 %v1497
        %v3246 = vunpack.c.l.b16 %v1498
        %v3247 = vunpack.c.h.b16 %v1498
        %v3248 = vunpack.c.l.b16 %v1499
        %v3249 = vunpack.c.h.b16 %v1499
        %v3250 = vunpack.c.l.b16 %v1500
        %v3251 = vunpack.c.h.b16 %v1500
        %v3252 = vunpack.c.l.b16 %v1501
        %v3253 = vunpack.c.h.b16 %v1501
        %v3254 = vunpack.c.l.b16 %v1502
        %v3255 = vunpack.c.h.b16 %v1502
        %v3256 = vunpack.c.l.b16 %v1503
        %v3257 = vunpack.c.h.b16 %v1503
        %v3258 = vunpack.c.l.b16 %v1504
        %v3259 = vunpack.c.h.b16 %v1504
        %v3260 = vunpack.c.l.b16 %v1505
        %v3261 = vunpack.c.h.b16 %v1505
        %v3262 = vunpack.c.l.b16 %v1506
        %v3263 = vunpack.c.h.b16 %v1506
        %v3264 = vunpack.c.l.b16 %v1507
        %v3265 = vunpack.c.h.b16 %v1507
        %v3266 = vunpack.c.l.b16 %v1508
        %v3267 = vunpack.c.h.b16 %v1508
        %v3268 = vunpack.c.l.b16 %v1509
        %v3269 = vunpack.c.h.b16 %v1509
        %v3270 = vunpack.c.l.b16 %v1510
        %v3271 = vunpack.c.h.b16 %v1510
        %v3272 = vpack.c.b16 %v2256, %v2248
        %v3273 = vpack.c.b16 %v2257, %v2249
        %v3274 = vpack.c.b16 %v2258, %v2250
        %v3275 = vpack.c.b16 %v2259, %v2251
        %v3276 = vpack.c.b16 %v2260, %v2252
        %v3277 = vpack.c.b16 %v2261, %v2253
        %v3278 = vpack.c.b16 %v2262, %v2254
        %v3279 = vpack.c.b16 %v2263, %v2255
        %v3280 = vpack.c.b16 %v2272, %v2264
        %v3281 = vpack.c.b16 %v2273, %v2265
        %v3282 = vpack.c.b16 %v2274, %v2266
        %v3283 = vpack.c.b16 %v2275, %v2267
        %v3284 = vpack.c.b16 %v2276, %v2268
        %v3285 = vpack.c.b16 %v2277, %v2269
        %v3286 = vpack.c.b16 %v2278, %v2270
        %v3287 = vpack.c.b16 %v2279, %v2271
        %v3288 = vpack.c.b16 %v2288, %v2280
        %v3289 = vpack.c.b16 %v2289, %v2281
        %v3290 = vpack.c.b16 %v2290, %v2282
        %v3291 = vpack.c.b16 %v2291, %v2283
        %v3292 = vpack.c.b16 %v2292, %v2284
        %v3293 = vpack.c.b16 %v2293, %v2285
        %v3294 = vpack.c.b16 %v2294, %v2286
        %v3295 = vpack.c.b16 %v2295, %v2287
        %v3296 = vpack.c.b16 %v2304, %v2296
        %v3297 = vpack.c.b16 %v2305, %v2297
        %v3298 = vpack.c.b16 %v2306, %v2298
        %v3299 = vpack.c.b16 %v2307, %v2299
        %v3300 = vpack.c.b16 %v2308, %v2300
        %v3301 = vpack.c.b16 %v2309, %v2301
        %v3302 = vpack.c.b16 %v2310, %v2302
        %v3303 = vpack.c.b16 %v2311, %v2303
        %v3304 = vpack.c.b16 %v2320, %v2312
        %v3305 = vpack.c.b16 %v2321, %v2313
        %v3306 = vpack.c.b16 %v2322, %v2314
        %v3307 = vpack.c.b16 %v2323, %v2315
        %v3308 = vpack.c.b16 %v2324, %v2316
        %v3309 = vpack.c.b16 %v2325, %v2317
        %v3310 = vpack.c.b16 %v2326, %v2318
        %v3311 = vpack.c.b16 %v2327, %v2319
        %v3312 = vpack.c.b16 %v2336, %v2328
        %v3313 = vpack.c.b16 %v2337, %v2329
        %v3314 = vpack.c.b16 %v2338, %v2330
        %v3315 = vpack.c.b16 %v2339, %v2331
        %v3316 = vpack.c.b16 %v2340, %v2332
        %v3317 = vpack.c.b16 %v2341, %v2333
        %v3318 = vpack.c.b16 %v2342, %v2334
        %v3319 = vpack.c.b16 %v2343, %v2335
        %v3320 = vpack.c.b16 %v2352, %v2344
        %v3321 = vpack.c.b16 %v2353, %v2345
        %v3322 = vpack.c.b16 %v2354, %v2346
        %v3323 = vpack.c.b16 %v2355, %v2347
        %v3324 = vpack.c.b16 %v2356, %v2348
        %v3325 = vpack.c.b16 %v2357, %v2349
        %v3326 = vpack.c.b16 %v2358, %v2350
        %v3327 = vpack.c.b16 %v2359, %v2351
        %v3328 = vpack.c.b16 %v2368, %v2360
        %v3329 = vpack.c.b16 %v2369, %v2361
        %v3330 = vpack.c.b16 %v2370, %v2362
        %v3331 = vpack.c.b16 %v2371, %v2363
        %v3332 = vpack.c.b16 %v2372, %v2364
        %v3333 = vpack.c.b16 %v2373, %v2365
        %v3334 = vpack.c.b16 %v2374, %v2366
        %v3335 = vpack.c.b16 %v2375, %v2367
        %v3336 = vpack.c.b16 %v2384, %v2376
        %v3337 = vpack.c.b16 %v2385, %v2377
        %v3338 = vpack.c.b16 %v2386, %v2378
        %v3339 = vpack.c.b16 %v2387, %v2379
        %v3340 = vpack.c.b16 %v2388, %v2380
        %v3341 = vpack.c.b16 %v2389, %v2381
        %v3342 = vpack.c.b16 %v2390, %v2382
        %v3343 = vpack.c.b16 %v2391, %v2383
        %v3344 = vpack.c.b16 %v2400, %v2392
        %v3345 = vpack.c.b16 %v2401, %v2393
        %v3346 = vpack.c.b16 %v2402, %v2394
        %v3347 = vpack.c.b16 %v2403, %v2395
        %v3348 = vpack.c.b16 %v2404, %v2396
        %v3349 = vpack.c.b16 %v2405, %v2397
        %v3350 = vpack.c.b16 %v2406, %v2398
        %v3351 = vpack.c.b16 %v2407, %v2399
        %v3352 = vpack.c.b16 %v2416, %v2408
        %v3353 = vpack.c.b16 %v2417, %v2409
        %v3354 = vpack.c.b16 %v2418, %v2410
        %v3355 = vpack.c.b16 %v2419, %v2411
        %v3356 = vpack.c.b16 %v2420, %v2412
        %v3357 = vpack.c.b16 %v2421, %v2413
        %v3358 = vpack.c.b16 %v2422, %v2414
        %v3359 = vpack.c.b16 %v2423, %v2415
        %v3360 = vpack.c.b16 %v2432, %v2424
        %v3361 = vpack.c.b16 %v2433, %v2425
        %v3362 = vpack.c.b16 %v2434, %v2426
        %v3363 = vpack.c.b16 %v2435, %v2427
        %v3364 = vpack.c.b16 %v2436, %v2428
        %v3365 = vpack.c.b16 %v2437, %v2429
        %v3366 = vpack.c.b16 %v2438, %v2430
        %v3367 = vpack.c.b16 %v2439, %v2431
        %v3368 = vpack.c.b16 %v2448, %v2440
        %v3369 = vpack.c.b16 %v2449, %v2441
        %v3370 = vpack.c.b16 %v2450, %v2442
        %v3371 = vpack.c.b16 %v2451, %v2443
        %v3372 = vpack.c.b16 %v2452, %v2444
        %v3373 = vpack.c.b16 %v2453, %v2445
        %v3374 = vpack.c.b16 %v2454, %v2446
        %v3375 = vpack.c.b16 %v2455, %v2447
        %v3376 = vpack.c.b16 %v2464, %v2456
        %v3377 = vpack.c.b16 %v2465, %v2457
        %v3378 = vpack.c.b16 %v2466, %v2458
        %v3379 = vpack.c.b16 %v2467, %v2459
        %v3380 = vpack.c.b16 %v2468, %v2460
        %v3381 = vpack.c.b16 %v2469, %v2461
        %v3382 = vpack.c.b16 %v2470, %v2462
        %v3383 = vpack.c.b16 %v2471, %v2463
        %v3384 = vpack.c.b16 %v2480, %v2472
        %v3385 = vpack.c.b16 %v2481, %v2473
        %v3386 = vpack.c.b16 %v2482, %v2474
        %v3387 = vpack.c.b16 %v2483, %v2475
        %v3388 = vpack.c.b16 %v2484, %v2476
        %v3389 = vpack.c.b16 %v2485, %v2477
        %v3390 = vpack.c.b16 %v2486, %v2478
        %v3391 = vpack.c.b16 %v2487, %v2479
        %v3392 = vpack.c.b16 %v2496, %v2488
        %v3393 = vpack.c.b16 %v2497, %v2489
        %v3394 = vpack.c.b16 %v2498, %v2490
        %v3395 = vpack.c.b16 %v2499, %v2491
        %v3396 = vpack.c.b16 %v2500, %v2492
        %v3397 = vpack.c.b16 %v2501, %v2493
        %v3398 = vpack.c.b16 %v2502, %v2494
        %v3399 = vpack.c.b16 %v2503, %v2495
        %v3400 = vpack.c.b16 %v2512, %v2504
        %v3401 = vpack.c.b16 %v2513, %v2505
        %v3402 = vpack.c.b16 %v2514, %v2506
        %v3403 = vpack.c.b16 %v2515, %v2507
        %v3404 = vpack.c.b16 %v2516, %v2508
        %v3405 = vpack.c.b16 %v2517, %v2509
        %v3406 = vpack.c.b16 %v2518, %v2510
        %v3407 = vpack.c.b16 %v2519, %v2511
        %v3408 = vpack.c.b16 %v2528, %v2520
        %v3409 = vpack.c.b16 %v2529, %v2521
        %v3410 = vpack.c.b16 %v2530, %v2522
        %v3411 = vpack.c.b16 %v2531, %v2523
        %v3412 = vpack.c.b16 %v2532, %v2524
        %v3413 = vpack.c.b16 %v2533, %v2525
        %v3414 = vpack.c.b16 %v2534, %v2526
        %v3415 = vpack.c.b16 %v2535, %v2527
        %v3416 = vpack.c.b16 %v2544, %v2536
        %v3417 = vpack.c.b16 %v2545, %v2537
        %v3418 = vpack.c.b16 %v2546, %v2538
        %v3419 = vpack.c.b16 %v2547, %v2539
        %v3420 = vpack.c.b16 %v2548, %v2540
        %v3421 = vpack.c.b16 %v2549, %v2541
        %v3422 = vpack.c.b16 %v2550, %v2542
        %v3423 = vpack.c.b16 %v2551, %v2543
        %v3424 = vpack.c.b16 %v2560, %v2552
        %v3425 = vpack.c.b16 %v2561, %v2553
        %v3426 = vpack.c.b16 %v2562, %v2554
        %v3427 = vpack.c.b16 %v2563, %v2555
        %v3428 = vpack.c.b16 %v2564, %v2556
        %v3429 = vpack.c.b16 %v2565, %v2557
        %v3430 = vpack.c.b16 %v2566, %v2558
        %v3431 = vpack.c.b16 %v2567, %v2559
        %v3432 = vpack.c.b16 %v2576, %v2568
        %v3433 = vpack.c.b16 %v2577, %v2569
        %v3434 = vpack.c.b16 %v2578, %v2570
        %v3435 = vpack.c.b16 %v2579, %v2571
        %v3436 = vpack.c.b16 %v2580, %v2572
        %v3437 = vpack.c.b16 %v2581, %v2573
        %v3438 = vpack.c.b16 %v2582, %v2574
        %v3439 = vpack.c.b16 %v2583, %v2575
        %v3440 = vpack.c.b16 %v2592, %v2584
        %v3441 = vpack.c.b16 %v2593, %v2585
        %v3442 = vpack.c.b16 %v2594, %v2586
        %v3443 = vpack.c.b16 %v2595, %v2587
        %v3444 = vpack.c.b16 %v2596, %v2588
        %v3445 = vpack.c.b16 %v2597, %v2589
        %v3446 = vpack.c.b16 %v2598, %v2590
        %v3447 = vpack.c.b16 %v2599, %v2591
        %v3448 = vpack.c.b16 %v2608, %v2600
        %v3449 = vpack.c.b16 %v2609, %v2601
        %v3450 = vpack.c.b16 %v2610, %v2602
        %v3451 = vpack.c.b16 %v2611, %v2603
        %v3452 = vpack.c.b16 %v2612, %v2604
        %v3453 = vpack.c.b16 %v2613, %v2605
        %v3454 = vpack.c.b16 %v2614, %v2606
        %v3455 = vpack.c.b16 %v2615, %v2607
        %v3456 = vpack.c.b16 %v2624, %v2616
        %v3457 = vpack.c.b16 %v2625, %v2617
        %v3458 = vpack.c.b16 %v2626, %v2618
        %v3459 = vpack.c.b16 %v2627, %v2619
        %v3460 = vpack.c.b16 %v2628, %v2620
        %v3461 = vpack.c.b16 %v2629, %v2621
        %v3462 = vpack.c.b16 %v2630, %v2622
        %v3463 = vpack.c.b16 %v2631, %v2623
        %v3464 = vpack.c.b16 %v2640, %v2632
        %v3465 = vpack.c.b16 %v2641, %v2633
        %v3466 = vpack.c.b16 %v2642, %v2634
        %v3467 = vpack.c.b16 %v2643, %v2635
        %v3468 = vpack.c.b16 %v2644, %v2636
        %v3469 = vpack.c.b16 %v2645, %v2637
        %v3470 = vpack.c.b16 %v2646, %v2638
        %v3471 = vpack.c.b16 %v2647, %v2639
        %v3472 = vpack.c.b16 %v2656, %v2648
        %v3473 = vpack.c.b16 %v2657, %v2649
        %v3474 = vpack.c.b16 %v2658, %v2650
        %v3475 = vpack.c.b16 %v2659, %v2651
        %v3476 = vpack.c.b16 %v2660, %v2652
        %v3477 = vpack.c.b16 %v2661, %v2653
        %v3478 = vpack.c.b16 %v2662, %v2654
        %v3479 = vpack.c.b16 %v2663, %v2655
        %v3480 = vpack.c.b16 %v2672, %v2664
        %v3481 = vpack.c.b16 %v2673, %v2665
        %v3482 = vpack.c.b16 %v2674, %v2666
        %v3483 = vpack.c.b16 %v2675, %v2667
        %v3484 = vpack.c.b16 %v2676, %v2668
        %v3485 = vpack.c.b16 %v2677, %v2669
        %v3486 = vpack.c.b16 %v2678, %v2670
        %v3487 = vpack.c.b16 %v2679, %v2671
        %v3488 = vpack.c.b16 %v2688, %v2680
        %v3489 = vpack.c.b16 %v2689, %v2681
        %v3490 = vpack.c.b16 %v2690, %v2682
        %v3491 = vpack.c.b16 %v2691, %v2683
        %v3492 = vpack.c.b16 %v2692, %v2684
        %v3493 = vpack.c.b16 %v2693, %v2685
        %v3494 = vpack.c.b16 %v2694, %v2686
        %v3495 = vpack.c.b16 %v2695, %v2687
        %v3496 = vpack.c.b16 %v2704, %v2696
        %v3497 = vpack.c.b16 %v2705, %v2697
        %v3498 = vpack.c.b16 %v2706, %v2698
        %v3499 = vpack.c.b16 %v2707, %v2699
        %v3500 = vpack.c.b16 %v2708, %v2700
        %v3501 = vpack.c.b16 %v2709, %v2701
        %v3502 = vpack.c.b16 %v2710, %v2702
        %v3503 = vpack.c.b16 %v2711, %v2703
        %v3504 = vpack.c.b16 %v2720, %v2712
        %v3505 = vpack.c.b16 %v2721, %v2713
        %v3506 = vpack.c.b16 %v2722, %v2714
        %v3507 = vpack.c.b16 %v2723, %v2715
        %v3508 = vpack.c.b16 %v2724, %v2716
        %v3509 = vpack.c.b16 %v2725, %v2717
        %v3510 = vpack.c.b16 %v2726, %v2718
        %v3511 = vpack.c.b16 %v2727, %v2719
        %v3512 = vpack.c.b16 %v2736, %v2728
        %v3513 = vpack.c.b16 %v2737, %v2729
        %v3514 = vpack.c.b16 %v2738, %v2730
        %v3515 = vpack.c.b16 %v2739, %v2731
        %v3516 = vpack.c.b16 %v2740, %v2732
        %v3517 = vpack.c.b16 %v2741, %v2733
        %v3518 = vpack.c.b16 %v2742, %v2734
        %v3519 = vpack.c.b16 %v2743, %v2735
        %v3520 = vpack.c.b16 %v2752, %v2744
        %v3521 = vpack.c.b16 %v2753, %v2745
        %v3522 = vpack.c.b16 %v2754, %v2746
        %v3523 = vpack.c.b16 %v2755, %v2747
        %v3524 = vpack.c.b16 %v2756, %v2748
        %v3525 = vpack.c.b16 %v2757, %v2749
        %v3526 = vpack.c.b16 %v2758, %v2750
        %v3527 = vpack.c.b16 %v2759, %v2751
        %v3528 = vpack.c.b16 %v2768, %v2760
        %v3529 = vpack.c.b16 %v2769, %v2761
        %v3530 = vpack.c.b16 %v2770, %v2762
        %v3531 = vpack.c.b16 %v2771, %v2763
        %v3532 = vpack.c.b16 %v2772, %v2764
        %v3533 = vpack.c.b16 %v2773, %v2765
        %v3534 = vpack.c.b16 %v2774, %v2766
        %v3535 = vpack.c.b16 %v2775, %v2767
        %v3536 = vpack.c.b16 %v2784, %v2776
        %v3537 = vpack.c.b16 %v2785, %v2777
        %v3538 = vpack.c.b16 %v2786, %v2778
        %v3539 = vpack.c.b16 %v2787, %v2779
        %v3540 = vpack.c.b16 %v2788, %v2780
        %v3541 = vpack.c.b16 %v2789, %v2781
        %v3542 = vpack.c.b16 %v2790, %v2782
        %v3543 = vpack.c.b16 %v2791, %v2783
        %v3544 = vpack.c.b16 %v2800, %v2792
        %v3545 = vpack.c.b16 %v2801, %v2793
        %v3546 = vpack.c.b16 %v2802, %v2794
        %v3547 = vpack.c.b16 %v2803, %v2795
        %v3548 = vpack.c.b16 %v2804, %v2796
        %v3549 = vpack.c.b16 %v2805, %v2797
        %v3550 = vpack.c.b16 %v2806, %v2798
        %v3551 = vpack.c.b16 %v2807, %v2799
        %v3552 = vpack.c.b16 %v2816, %v2808
        %v3553 = vpack.c.b16 %v2817, %v2809
        %v3554 = vpack.c.b16 %v2818, %v2810
        %v3555 = vpack.c.b16 %v2819, %v2811
        %v3556 = vpack.c.b16 %v2820, %v2812
        %v3557 = vpack.c.b16 %v2821, %v2813
        %v3558 = vpack.c.b16 %v2822, %v2814
        %v3559 = vpack.c.b16 %v2823, %v2815
        %v3560 = vpack.c.b16 %v2832, %v2824
        %v3561 = vpack.c.b16 %v2833, %v2825
        %v3562 = vpack.c.b16 %v2834, %v2826
        %v3563 = vpack.c.b16 %v2835, %v2827
        %v3564 = vpack.c.b16 %v2836, %v2828
        %v3565 = vpack.c.b16 %v2837, %v2829
        %v3566 = vpack.c.b16 %v2838, %v2830
        %v3567 = vpack.c.b16 %v2839, %v2831
        %v3568 = vpack.c.b16 %v2848, %v2840
        %v3569 = vpack.c.b16 %v2849, %v2841
        %v3570 = vpack.c.b16 %v2850, %v2842
        %v3571 = vpack.c.b16 %v2851, %v2843
        %v3572 = vpack.c.b16 %v2852, %v2844
        %v3573 = vpack.c.b16 %v2853, %v2845
        %v3574 = vpack.c.b16 %v2854, %v2846
        %v3575 = vpack.c.b16 %v2855, %v2847
        %v3576 = vpack.c.b16 %v2864, %v2856
        %v3577 = vpack.c.b16 %v2865, %v2857
        %v3578 = vpack.c.b16 %v2866, %v2858
        %v3579 = vpack.c.b16 %v2867, %v2859
        %v3580 = vpack.c.b16 %v2868, %v2860
        %v3581 = vpack.c.b16 %v2869, %v2861
        %v3582 = vpack.c.b16 %v2870, %v2862
        %v3583 = vpack.c.b16 %v2871, %v2863
        %v3584 = vpack.c.b16 %v2880, %v2872
        %v3585 = vpack.c.b16 %v2881, %v2873
        %v3586 = vpack.c.b16 %v2882, %v2874
        %v3587 = vpack.c.b16 %v2883, %v2875
        %v3588 = vpack.c.b16 %v2884, %v2876
        %v3589 = vpack.c.b16 %v2885, %v2877
        %v3590 = vpack.c.b16 %v2886, %v2878
        %v3591 = vpack.c.b16 %v2887, %v2879
        %v3592 = vpack.c.b16 %v2896, %v2888
        %v3593 = vpack.c.b16 %v2897, %v2889
        %v3594 = vpack.c.b16 %v2898, %v2890
        %v3595 = vpack.c.b16 %v2899, %v2891
        %v3596 = vpack.c.b16 %v2900, %v2892
        %v3597 = vpack.c.b16 %v2901, %v2893
        %v3598 = vpack.c.b16 %v2902, %v2894
        %v3599 = vpack.c.b16 %v2903, %v2895
        %v3600 = vpack.c.b16 %v2912, %v2904
        %v3601 = vpack.c.b16 %v2913, %v2905
        %v3602 = vpack.c.b16 %v2914, %v2906
        %v3603 = vpack.c.b16 %v2915, %v2907
        %v3604 = vpack.c.b16 %v2916, %v2908
        %v3605 = vpack.c.b16 %v2917, %v2909
        %v3606 = vpack.c.b16 %v2918, %v2910
        %v3607 = vpack.c.b16 %v2919, %v2911
        %v3608 = vpack.c.b16 %v2928, %v2920
        %v3609 = vpack.c.b16 %v2929, %v2921
        %v3610 = vpack.c.b16 %v2930, %v2922
        %v3611 = vpack.c.b16 %v2931, %v2923
        %v3612 = vpack.c.b16 %v2932, %v2924
        %v3613 = vpack.c.b16 %v2933, %v2925
        %v3614 = vpack.c.b16 %v2934, %v2926
        %v3615 = vpack.c.b16 %v2935, %v2927
        %v3616 = vpack.c.b16 %v2944, %v2936
        %v3617 = vpack.c.b16 %v2945, %v2937
        %v3618 = vpack.c.b16 %v2946, %v2938
        %v3619 = vpack.c.b16 %v2947, %v2939
        %v3620 = vpack.c.b16 %v2948, %v2940
        %v3621 = vpack.c.b16 %v2949, %v2941
        %v3622 = vpack.c.b16 %v2950, %v2942
        %v3623 = vpack.c.b16 %v2951, %v2943
        %v3624 = vpack.c.b16 %v2960, %v2952
        %v3625 = vpack.c.b16 %v2961, %v2953
        %v3626 = vpack.c.b16 %v2962, %v2954
        %v3627 = vpack.c.b16 %v2963, %v2955
        %v3628 = vpack.c.b16 %v2964, %v2956
        %v3629 = vpack.c.b16 %v2965, %v2957
        %v3630 = vpack.c.b16 %v2966, %v2958
        %v3631 = vpack.c.b16 %v2967, %v2959
        %v3632 = vpack.c.b16 %v2976, %v2968
        %v3633 = vpack.c.b16 %v2977, %v2969
        %v3634 = vpack.c.b16 %v2978, %v2970
        %v3635 = vpack.c.b16 %v2979, %v2971
        %v3636 = vpack.c.b16 %v2980, %v2972
        %v3637 = vpack.c.b16 %v2981, %v2973
        %v3638 = vpack.c.b16 %v2982, %v2974
        %v3639 = vpack.c.b16 %v2983, %v2975
        %v3640 = vpack.c.b16 %v2992, %v2984
        %v3641 = vpack.c.b16 %v2993, %v2985
        %v3642 = vpack.c.b16 %v2994, %v2986
        %v3643 = vpack.c.b16 %v2995, %v2987
        %v3644 = vpack.c.b16 %v2996, %v2988
        %v3645 = vpack.c.b16 %v2997, %v2989
        %v3646 = vpack.c.b16 %v2998, %v2990
        %v3647 = vpack.c.b16 %v2999, %v2991
        %v3648 = vpack.c.b16 %v3008, %v3000
        %v3649 = vpack.c.b16 %v3009, %v3001
        %v3650 = vpack.c.b16 %v3010, %v3002
        %v3651 = vpack.c.b16 %v3011, %v3003
        %v3652 = vpack.c.b16 %v3012, %v3004
        %v3653 = vpack.c.b16 %v3013, %v3005
        %v3654 = vpack.c.b16 %v3014, %v3006
        %v3655 = vpack.c.b16 %v3015, %v3007
        %v3656 = vpack.c.b16 %v3024, %v3016
        %v3657 = vpack.c.b16 %v3025, %v3017
        %v3658 = vpack.c.b16 %v3026, %v3018
        %v3659 = vpack.c.b16 %v3027, %v3019
        %v3660 = vpack.c.b16 %v3028, %v3020
        %v3661 = vpack.c.b16 %v3029, %v3021
        %v3662 = vpack.c.b16 %v3030, %v3022
        %v3663 = vpack.c.b16 %v3031, %v3023
        %v3664 = vpack.c.b16 %v3040, %v3032
        %v3665 = vpack.c.b16 %v3041, %v3033
        %v3666 = vpack.c.b16 %v3042, %v3034
        %v3667 = vpack.c.b16 %v3043, %v3035
        %v3668 = vpack.c.b16 %v3044, %v3036
        %v3669 = vpack.c.b16 %v3045, %v3037
        %v3670 = vpack.c.b16 %v3046, %v3038
        %v3671 = vpack.c.b16 %v3047, %v3039
        %v3672 = vpack.c.b16 %v3056, %v3048
        %v3673 = vpack.c.b16 %v3057, %v3049
        %v3674 = vpack.c.b16 %v3058, %v3050
        %v3675 = vpack.c.b16 %v3059, %v3051
        %v3676 = vpack.c.b16 %v3060, %v3052
        %v3677 = vpack.c.b16 %v3061, %v3053
        %v3678 = vpack.c.b16 %v3062, %v3054
        %v3679 = vpack.c.b16 %v3063, %v3055
        %v3680 = vpack.c.b16 %v3072, %v3064
        %v3681 = vpack.c.b16 %v3073, %v3065
        %v3682 = vpack.c.b16 %v3074, %v3066
        %v3683 = vpack.c.b16 %v3075, %v3067
        %v3684 = vpack.c.b16 %v3076, %v3068
        %v3685 = vpack.c.b16 %v3077, %v3069
        %v3686 = vpack.c.b16 %v3078, %v3070
        %v3687 = vpack.c.b16 %v3079, %v3071
        %v3688 = vpack.c.b16 %v3088, %v3080
        %v3689 = vpack.c.b16 %v3089, %v3081
        %v3690 = vpack.c.b16 %v3090, %v3082
        %v3691 = vpack.c.b16 %v3091, %v3083
        %v3692 = vpack.c.b16 %v3092, %v3084
        %v3693 = vpack.c.b16 %v3093, %v3085
        %v3694 = vpack.c.b16 %v3094, %v3086
        %v3695 = vpack.c.b16 %v3095, %v3087
        %v3696 = vpack.c.b16 %v3104, %v3096
        %v3697 = vpack.c.b16 %v3105, %v3097
        %v3698 = vpack.c.b16 %v3106, %v3098
        %v3699 = vpack.c.b16 %v3107, %v3099
        %v3700 = vpack.c.b16 %v3108, %v3100
        %v3701 = vpack.c.b16 %v3109, %v3101
        %v3702 = vpack.c.b16 %v3110, %v3102
        %v3703 = vpack.c.b16 %v3111, %v3103
        %v3704 = vpack.c.b16 %v3120, %v3112
        %v3705 = vpack.c.b16 %v3121, %v3113
        %v3706 = vpack.c.b16 %v3122, %v3114
        %v3707 = vpack.c.b16 %v3123, %v3115
        %v3708 = vpack.c.b16 %v3124, %v3116
        %v3709 = vpack.c.b16 %v3125, %v3117
        %v3710 = vpack.c.b16 %v3126, %v3118
        %v3711 = vpack.c.b16 %v3127, %v3119
        %v3712 = vpack.c.b16 %v3136, %v3128
        %v3713 = vpack.c.b16 %v3137, %v3129
        %v3714 = vpack.c.b16 %v3138, %v3130
        %v3715 = vpack.c.b16 %v3139, %v3131
        %v3716 = vpack.c.b16 %v3140, %v3132
        %v3717 = vpack.c.b16 %v3141, %v3133
        %v3718 = vpack.c.b16 %v3142, %v3134
        %v3719 = vpack.c.b16 %v3143, %v3135
        %v3720 = vpack.c.b16 %v3152, %v3144
        %v3721 = vpack.c.b16 %v3153, %v3145
        %v3722 = vpack.c.b16 %v3154, %v3146
        %v3723 = vpack.c.b16 %v3155, %v3147
        %v3724 = vpack.c.b16 %v3156, %v3148
        %v3725 = vpack.c.b16 %v3157, %v3149
        %v3726 = vpack.c.b16 %v3158, %v3150
        %v3727 = vpack.c.b16 %v3159, %v3151
        %v3728 = vpack.c.b16 %v3168, %v3160
        %v3729 = vpack.c.b16 %v3169, %v3161
        %v3730 = vpack.c.b16 %v3170, %v3162
        %v3731 = vpack.c.b16 %v3171, %v3163
        %v3732 = vpack.c.b16 %v3172, %v3164
        %v3733 = vpack.c.b16 %v3173, %v3165
        %v3734 = vpack.c.b16 %v3174, %v3166
        %v3735 = vpack.c.b16 %v3175, %v3167
        %v3736 = vpack.c.b16 %v3184, %v3176
        %v3737 = vpack.c.b16 %v3185, %v3177
        %v3738 = vpack.c.b16 %v3186, %v3178
        %v3739 = vpack.c.b16 %v3187, %v3179
        %v3740 = vpack.c.b16 %v3188, %v3180
        %v3741 = vpack.c.b16 %v3189, %v3181
        %v3742 = vpack.c.b16 %v3190, %v3182
        %v3743 = vpack.c.b16 %v3191, %v3183
        %v3744 = vpack.c.b16 %v3200, %v3192
        %v3745 = vpack.c.b16 %v3201, %v3193
        %v3746 = vpack.c.b16 %v3202, %v3194
        %v3747 = vpack.c.b16 %v3203, %v3195
        %v3748 = vpack.c.b16 %v3204, %v3196
        %v3749 = vpack.c.b16 %v3205, %v3197
        %v3750 = vpack.c.b16 %v3206, %v3198
        %v3751 = vpack.c.b16 %v3207, %v3199
        %v3752 = vpack.c.b16 %v3216, %v3208
        %v3753 = vpack.c.b16 %v3217, %v3209
        %v3754 = vpack.c.b16 %v3218, %v3210
        %v3755 = vpack.c.b16 %v3219, %v3211
        %v3756 = vpack.c.b16 %v3220, %v3212
        %v3757 = vpack.c.b16 %v3221, %v3213
        %v3758 = vpack.c.b16 %v3222, %v3214
        %v3759 = vpack.c.b16 %v3223, %v3215
        %v3760 = vpack.c.b16 %v3232, %v3224
        %v3761 = vpack.c.b16 %v3233, %v3225
        %v3762 = vpack.c.b16 %v3234, %v3226
        %v3763 = vpack.c.b16 %v3235, %v3227
        %v3764 = vpack.c.b16 %v3236, %v3228
        %v3765 = vpack.c.b16 %v3237, %v3229
        %v3766 = vpack.c.b16 %v3238, %v3230
        %v3767 = vpack.c.b16 %v3239, %v3231
        %v3768 = vpack.c.b16 %v3248, %v3240
        %v3769 = vpack.c.b16 %v3249, %v3241
        %v3770 = vpack.c.b16 %v3250, %v3242
        %v3771 = vpack.c.b16 %v3251, %v3243
        %v3772 = vpack.c.b16 %v3252, %v3244
        %v3773 = vpack.c.b16 %v3253, %v3245
        %v3774 = vpack.c.b16 %v3254, %v3246
        %v3775 = vpack.c.b16 %v3255, %v3247
        %v3776 = vpack.c.b16 %v3264, %v3256
        %v3777 = vpack.c.b16 %v3265, %v3257
        %v3778 = vpack.c.b16 %v3266, %v3258
        %v3779 = vpack.c.b16 %v3267, %v3259
        %v3780 = vpack.c.b16 %v3268, %v3260
        %v3781 = vpack.c.b16 %v3269, %v3261
        %v3782 = vpack.c.b16 %v3270, %v3262
        %v3783 = vpack.c.b16 %v3271, %v3263
        %4296 = vmatpush.bf16.msra.mxu0 %v3328
        %4297 = vmatpush.bf16.msra.mxu0 %v3320
        %4298 = vmatpush.bf16.msra.mxu0 %v3312
        %4299 = vmatpush.bf16.msra.mxu0 %v3304
        %4300 = vmatpush.bf16.msra.mxu0 %v3296
        %4301 = vmatpush.bf16.msra.mxu0 %v3288
        %4302 = vmatpush.bf16.msra.mxu0 %v3280
        %4303 = vmatpush.bf16.msra.mxu0 %v3272
        %4304 = vmatmul.bf16.gmra.mxu0 %v1720
        %v4305 = vpop.f32.mrf.mxu0
        %v4306 = vadd.f32 %v1513, %v4305
        %v4307 = vpop.f32.mrf.mxu0
        %4308 = vdwg.mxu0
        %4309 = vmatpush.bf16.msra.mxu0 %v3392
        %4310 = vmatpush.bf16.msra.mxu0 %v3384
        %4311 = vmatpush.bf16.msra.mxu0 %v3376
        %4312 = vmatpush.bf16.msra.mxu0 %v3368
        %4313 = vmatpush.bf16.msra.mxu0 %v3360
        %4314 = vmatpush.bf16.msra.mxu0 %v3352
        %4315 = vmatpush.bf16.msra.mxu0 %v3344
        %4316 = vmatpush.bf16.msra.mxu0 %v3336
        %4317 = vmatmul.bf16.gmra.mxu0 %v1721
        %v4318 = vpop.f32.mrf.mxu0
        %v4319 = vadd.f32 %v4306, %v4318
        %v4320 = vpop.f32.mrf.mxu0
        %4321 = vdwg.mxu0
        %4322 = vmatpush.bf16.msra.mxu0 %v3456
        %4323 = vmatpush.bf16.msra.mxu0 %v3448
        %4324 = vmatpush.bf16.msra.mxu0 %v3440
        %4325 = vmatpush.bf16.msra.mxu0 %v3432
        %4326 = vmatpush.bf16.msra.mxu0 %v3424
        %4327 = vmatpush.bf16.msra.mxu0 %v3416
        %4328 = vmatpush.bf16.msra.mxu0 %v3408
        %4329 = vmatpush.bf16.msra.mxu0 %v3400
        %4330 = vmatmul.bf16.gmra.mxu0 %v1722
        %v4331 = vpop.f32.mrf.mxu0
        %v4332 = vadd.f32 %v4319, %v4331
        %v4333 = vpop.f32.mrf.mxu0
        %4334 = vdwg.mxu0
        %4335 = vmatpush.bf16.msra.mxu0 %v3520
        %4336 = vmatpush.bf16.msra.mxu0 %v3512
        %4337 = vmatpush.bf16.msra.mxu0 %v3504
        %4338 = vmatpush.bf16.msra.mxu0 %v3496
        %4339 = vmatpush.bf16.msra.mxu0 %v3488
        %4340 = vmatpush.bf16.msra.mxu0 %v3480
        %4341 = vmatpush.bf16.msra.mxu0 %v3472
        %4342 = vmatpush.bf16.msra.mxu0 %v3464
        %4343 = vmatmul.bf16.gmra.mxu0 %v1723
        %v4344 = vpop.f32.mrf.mxu0
        %v4345 = vadd.f32 %v4332, %v4344
        %v4346 = vpop.f32.mrf.mxu0
        %4347 = vdwg.mxu0
        %4348 = vmatpush.bf16.msra.mxu0 %v3584
        %4349 = vmatpush.bf16.msra.mxu0 %v3576
        %4350 = vmatpush.bf16.msra.mxu0 %v3568
        %4351 = vmatpush.bf16.msra.mxu0 %v3560
        %4352 = vmatpush.bf16.msra.mxu0 %v3552
        %4353 = vmatpush.bf16.msra.mxu0 %v3544
        %4354 = vmatpush.bf16.msra.mxu0 %v3536
        %4355 = vmatpush.bf16.msra.mxu0 %v3528
        %4356 = vmatmul.bf16.gmra.mxu0 %v1724
        %v4357 = vpop.f32.mrf.mxu0
        %v4358 = vadd.f32 %v4345, %v4357
        %v4359 = vpop.f32.mrf.mxu0
        %4360 = vdwg.mxu0
        %4361 = vmatpush.bf16.msra.mxu0 %v3648
        %4362 = vmatpush.bf16.msra.mxu0 %v3640
        %4363 = vmatpush.bf16.msra.mxu0 %v3632
        %4364 = vmatpush.bf16.msra.mxu0 %v3624
        %4365 = vmatpush.bf16.msra.mxu0 %v3616
        %4366 = vmatpush.bf16.msra.mxu0 %v3608
        %4367 = vmatpush.bf16.msra.mxu0 %v3600
        %4368 = vmatpush.bf16.msra.mxu0 %v3592
        %4369 = vmatmul.bf16.gmra.mxu0 %v1725
        %v4370 = vpop.f32.mrf.mxu0
        %v4371 = vadd.f32 %v4358, %v4370
        %v4372 = vpop.f32.mrf.mxu0
        %4373 = vdwg.mxu0
        %4374 = vmatpush.bf16.msra.mxu0 %v3712
        %4375 = vmatpush.bf16.msra.mxu0 %v3704
        %4376 = vmatpush.bf16.msra.mxu0 %v3696
        %4377 = vmatpush.bf16.msra.mxu0 %v3688
        %4378 = vmatpush.bf16.msra.mxu0 %v3680
        %4379 = vmatpush.bf16.msra.mxu0 %v3672
        %4380 = vmatpush.bf16.msra.mxu0 %v3664
        %4381 = vmatpush.bf16.msra.mxu0 %v3656
        %4382 = vmatmul.bf16.gmra.mxu0 %v1726
        %v4383 = vpop.f32.mrf.mxu0
        %v4384 = vadd.f32 %v4371, %v4383
        %v4385 = vpop.f32.mrf.mxu0
        %4386 = vdwg.mxu0
        %4387 = vmatpush.bf16.msra.mxu0 %v3776
        %4388 = vmatpush.bf16.msra.mxu0 %v3768
        %4389 = vmatpush.bf16.msra.mxu0 %v3760
        %4390 = vmatpush.bf16.msra.mxu0 %v3752
        %4391 = vmatpush.bf16.msra.mxu0 %v3744
        %4392 = vmatpush.bf16.msra.mxu0 %v3736
        %4393 = vmatpush.bf16.msra.mxu0 %v3728
        %4394 = vmatpush.bf16.msra.mxu0 %v3720
        %4395 = vmatmul.bf16.gmra.mxu0 %v1727
        %v4396 = vpop.f32.mrf.mxu0
        %v4397 = vadd.f32 %v4384, %v4396
        %v4398 = vpop.f32.mrf.mxu0
        %4399 = vdwg.mxu0
        %4400 = vmatpush.bf16.msra.mxu0 %v3329
        %4401 = vmatpush.bf16.msra.mxu0 %v3321
        %4402 = vmatpush.bf16.msra.mxu0 %v3313
        %4403 = vmatpush.bf16.msra.mxu0 %v3305
        %4404 = vmatpush.bf16.msra.mxu0 %v3297
        %4405 = vmatpush.bf16.msra.mxu0 %v3289
        %4406 = vmatpush.bf16.msra.mxu0 %v3281
        %4407 = vmatpush.bf16.msra.mxu0 %v3273
        %4408 = vmatmul.bf16.gmra.mxu0 %v1720
        %v4409 = vpop.f32.mrf.mxu0
        %v4410 = vadd.f32 %v1514, %v4409
        %v4411 = vpop.f32.mrf.mxu0
        %4412 = vdwg.mxu0
        %4413 = vmatpush.bf16.msra.mxu0 %v3393
        %4414 = vmatpush.bf16.msra.mxu0 %v3385
        %4415 = vmatpush.bf16.msra.mxu0 %v3377
        %4416 = vmatpush.bf16.msra.mxu0 %v3369
        %4417 = vmatpush.bf16.msra.mxu0 %v3361
        %4418 = vmatpush.bf16.msra.mxu0 %v3353
        %4419 = vmatpush.bf16.msra.mxu0 %v3345
        %4420 = vmatpush.bf16.msra.mxu0 %v3337
        %4421 = vmatmul.bf16.gmra.mxu0 %v1721
        %v4422 = vpop.f32.mrf.mxu0
        %v4423 = vadd.f32 %v4410, %v4422
        %v4424 = vpop.f32.mrf.mxu0
        %4425 = vdwg.mxu0
        %4426 = vmatpush.bf16.msra.mxu0 %v3457
        %4427 = vmatpush.bf16.msra.mxu0 %v3449
        %4428 = vmatpush.bf16.msra.mxu0 %v3441
        %4429 = vmatpush.bf16.msra.mxu0 %v3433
        %4430 = vmatpush.bf16.msra.mxu0 %v3425
        %4431 = vmatpush.bf16.msra.mxu0 %v3417
        %4432 = vmatpush.bf16.msra.mxu0 %v3409
        %4433 = vmatpush.bf16.msra.mxu0 %v3401
        %4434 = vmatmul.bf16.gmra.mxu0 %v1722
        %v4435 = vpop.f32.mrf.mxu0
        %v4436 = vadd.f32 %v4423, %v4435
        %v4437 = vpop.f32.mrf.mxu0
        %4438 = vdwg.mxu0
        %4439 = vmatpush.bf16.msra.mxu0 %v3521
        %4440 = vmatpush.bf16.msra.mxu0 %v3513
        %4441 = vmatpush.bf16.msra.mxu0 %v3505
        %4442 = vmatpush.bf16.msra.mxu0 %v3497
        %4443 = vmatpush.bf16.msra.mxu0 %v3489
        %4444 = vmatpush.bf16.msra.mxu0 %v3481
        %4445 = vmatpush.bf16.msra.mxu0 %v3473
        %4446 = vmatpush.bf16.msra.mxu0 %v3465
        %4447 = vmatmul.bf16.gmra.mxu0 %v1723
        %v4448 = vpop.f32.mrf.mxu0
        %v4449 = vadd.f32 %v4436, %v4448
        %v4450 = vpop.f32.mrf.mxu0
        %4451 = vdwg.mxu0
        %4452 = vmatpush.bf16.msra.mxu0 %v3585
        %4453 = vmatpush.bf16.msra.mxu0 %v3577
        %4454 = vmatpush.bf16.msra.mxu0 %v3569
        %4455 = vmatpush.bf16.msra.mxu0 %v3561
        %4456 = vmatpush.bf16.msra.mxu0 %v3553
        %4457 = vmatpush.bf16.msra.mxu0 %v3545
        %4458 = vmatpush.bf16.msra.mxu0 %v3537
        %4459 = vmatpush.bf16.msra.mxu0 %v3529
        %4460 = vmatmul.bf16.gmra.mxu0 %v1724
        %v4461 = vpop.f32.mrf.mxu0
        %v4462 = vadd.f32 %v4449, %v4461
        %v4463 = vpop.f32.mrf.mxu0
        %4464 = vdwg.mxu0
        %4465 = vmatpush.bf16.msra.mxu0 %v3649
        %4466 = vmatpush.bf16.msra.mxu0 %v3641
        %4467 = vmatpush.bf16.msra.mxu0 %v3633
        %4468 = vmatpush.bf16.msra.mxu0 %v3625
        %4469 = vmatpush.bf16.msra.mxu0 %v3617
        %4470 = vmatpush.bf16.msra.mxu0 %v3609
        %4471 = vmatpush.bf16.msra.mxu0 %v3601
        %4472 = vmatpush.bf16.msra.mxu0 %v3593
        %4473 = vmatmul.bf16.gmra.mxu0 %v1725
        %v4474 = vpop.f32.mrf.mxu0
        %v4475 = vadd.f32 %v4462, %v4474
        %v4476 = vpop.f32.mrf.mxu0
        %4477 = vdwg.mxu0
        %4478 = vmatpush.bf16.msra.mxu0 %v3713
        %4479 = vmatpush.bf16.msra.mxu0 %v3705
        %4480 = vmatpush.bf16.msra.mxu0 %v3697
        %4481 = vmatpush.bf16.msra.mxu0 %v3689
        %4482 = vmatpush.bf16.msra.mxu0 %v3681
        %4483 = vmatpush.bf16.msra.mxu0 %v3673
        %4484 = vmatpush.bf16.msra.mxu0 %v3665
        %4485 = vmatpush.bf16.msra.mxu0 %v3657
        %4486 = vmatmul.bf16.gmra.mxu0 %v1726
        %v4487 = vpop.f32.mrf.mxu0
        %v4488 = vadd.f32 %v4475, %v4487
        %v4489 = vpop.f32.mrf.mxu0
        %4490 = vdwg.mxu0
        %4491 = vmatpush.bf16.msra.mxu0 %v3777
        %4492 = vmatpush.bf16.msra.mxu0 %v3769
        %4493 = vmatpush.bf16.msra.mxu0 %v3761
        %4494 = vmatpush.bf16.msra.mxu0 %v3753
        %4495 = vmatpush.bf16.msra.mxu0 %v3745
        %4496 = vmatpush.bf16.msra.mxu0 %v3737
        %4497 = vmatpush.bf16.msra.mxu0 %v3729
        %4498 = vmatpush.bf16.msra.mxu0 %v3721
        %4499 = vmatmul.bf16.gmra.mxu0 %v1727
        %v4500 = vpop.f32.mrf.mxu0
        %v4501 = vadd.f32 %v4488, %v4500
        %v4502 = vpop.f32.mrf.mxu0
        %4503 = vdwg.mxu0
        %4504 = vmatpush.bf16.msra.mxu0 %v3330
        %4505 = vmatpush.bf16.msra.mxu0 %v3322
        %4506 = vmatpush.bf16.msra.mxu0 %v3314
        %4507 = vmatpush.bf16.msra.mxu0 %v3306
        %4508 = vmatpush.bf16.msra.mxu0 %v3298
        %4509 = vmatpush.bf16.msra.mxu0 %v3290
        %4510 = vmatpush.bf16.msra.mxu0 %v3282
        %4511 = vmatpush.bf16.msra.mxu0 %v3274
        %4512 = vmatmul.bf16.gmra.mxu0 %v1720
        %v4513 = vpop.f32.mrf.mxu0
        %v4514 = vadd.f32 %v1515, %v4513
        %v4515 = vpop.f32.mrf.mxu0
        %4516 = vdwg.mxu0
        %4517 = vmatpush.bf16.msra.mxu0 %v3394
        %4518 = vmatpush.bf16.msra.mxu0 %v3386
        %4519 = vmatpush.bf16.msra.mxu0 %v3378
        %4520 = vmatpush.bf16.msra.mxu0 %v3370
        %4521 = vmatpush.bf16.msra.mxu0 %v3362
        %4522 = vmatpush.bf16.msra.mxu0 %v3354
        %4523 = vmatpush.bf16.msra.mxu0 %v3346
        %4524 = vmatpush.bf16.msra.mxu0 %v3338
        %4525 = vmatmul.bf16.gmra.mxu0 %v1721
        %v4526 = vpop.f32.mrf.mxu0
        %v4527 = vadd.f32 %v4514, %v4526
        %v4528 = vpop.f32.mrf.mxu0
        %4529 = vdwg.mxu0
        %4530 = vmatpush.bf16.msra.mxu0 %v3458
        %4531 = vmatpush.bf16.msra.mxu0 %v3450
        %4532 = vmatpush.bf16.msra.mxu0 %v3442
        %4533 = vmatpush.bf16.msra.mxu0 %v3434
        %4534 = vmatpush.bf16.msra.mxu0 %v3426
        %4535 = vmatpush.bf16.msra.mxu0 %v3418
        %4536 = vmatpush.bf16.msra.mxu0 %v3410
        %4537 = vmatpush.bf16.msra.mxu0 %v3402
        %4538 = vmatmul.bf16.gmra.mxu0 %v1722
        %v4539 = vpop.f32.mrf.mxu0
        %v4540 = vadd.f32 %v4527, %v4539
        %v4541 = vpop.f32.mrf.mxu0
        %4542 = vdwg.mxu0
        %4543 = vmatpush.bf16.msra.mxu0 %v3522
        %4544 = vmatpush.bf16.msra.mxu0 %v3514
        %4545 = vmatpush.bf16.msra.mxu0 %v3506
        %4546 = vmatpush.bf16.msra.mxu0 %v3498
        %4547 = vmatpush.bf16.msra.mxu0 %v3490
        %4548 = vmatpush.bf16.msra.mxu0 %v3482
        %4549 = vmatpush.bf16.msra.mxu0 %v3474
        %4550 = vmatpush.bf16.msra.mxu0 %v3466
        %4551 = vmatmul.bf16.gmra.mxu0 %v1723
        %v4552 = vpop.f32.mrf.mxu0
        %v4553 = vadd.f32 %v4540, %v4552
        %v4554 = vpop.f32.mrf.mxu0
        %4555 = vdwg.mxu0
        %4556 = vmatpush.bf16.msra.mxu0 %v3586
        %4557 = vmatpush.bf16.msra.mxu0 %v3578
        %4558 = vmatpush.bf16.msra.mxu0 %v3570
        %4559 = vmatpush.bf16.msra.mxu0 %v3562
        %4560 = vmatpush.bf16.msra.mxu0 %v3554
        %4561 = vmatpush.bf16.msra.mxu0 %v3546
        %4562 = vmatpush.bf16.msra.mxu0 %v3538
        %4563 = vmatpush.bf16.msra.mxu0 %v3530
        %4564 = vmatmul.bf16.gmra.mxu0 %v1724
        %v4565 = vpop.f32.mrf.mxu0
        %v4566 = vadd.f32 %v4553, %v4565
        %v4567 = vpop.f32.mrf.mxu0
        %4568 = vdwg.mxu0
        %4569 = vmatpush.bf16.msra.mxu0 %v3650
        %4570 = vmatpush.bf16.msra.mxu0 %v3642
        %4571 = vmatpush.bf16.msra.mxu0 %v3634
        %4572 = vmatpush.bf16.msra.mxu0 %v3626
        %4573 = vmatpush.bf16.msra.mxu0 %v3618
        %4574 = vmatpush.bf16.msra.mxu0 %v3610
        %4575 = vmatpush.bf16.msra.mxu0 %v3602
        %4576 = vmatpush.bf16.msra.mxu0 %v3594
        %4577 = vmatmul.bf16.gmra.mxu0 %v1725
        %v4578 = vpop.f32.mrf.mxu0
        %v4579 = vadd.f32 %v4566, %v4578
        %v4580 = vpop.f32.mrf.mxu0
        %4581 = vdwg.mxu0
        %4582 = vmatpush.bf16.msra.mxu0 %v3714
        %4583 = vmatpush.bf16.msra.mxu0 %v3706
        %4584 = vmatpush.bf16.msra.mxu0 %v3698
        %4585 = vmatpush.bf16.msra.mxu0 %v3690
        %4586 = vmatpush.bf16.msra.mxu0 %v3682
        %4587 = vmatpush.bf16.msra.mxu0 %v3674
        %4588 = vmatpush.bf16.msra.mxu0 %v3666
        %4589 = vmatpush.bf16.msra.mxu0 %v3658
        %4590 = vmatmul.bf16.gmra.mxu0 %v1726
        %v4591 = vpop.f32.mrf.mxu0
        %v4592 = vadd.f32 %v4579, %v4591
        %v4593 = vpop.f32.mrf.mxu0
        %4594 = vdwg.mxu0
        %4595 = vmatpush.bf16.msra.mxu0 %v3778
        %4596 = vmatpush.bf16.msra.mxu0 %v3770
        %4597 = vmatpush.bf16.msra.mxu0 %v3762
        %4598 = vmatpush.bf16.msra.mxu0 %v3754
        %4599 = vmatpush.bf16.msra.mxu0 %v3746
        %4600 = vmatpush.bf16.msra.mxu0 %v3738
        %4601 = vmatpush.bf16.msra.mxu0 %v3730
        %4602 = vmatpush.bf16.msra.mxu0 %v3722
        %4603 = vmatmul.bf16.gmra.mxu0 %v1727
        %v4604 = vpop.f32.mrf.mxu0
        %v4605 = vadd.f32 %v4592, %v4604
        %v4606 = vpop.f32.mrf.mxu0
        %4607 = vdwg.mxu0
        %4608 = vmatpush.bf16.msra.mxu0 %v3331
        %4609 = vmatpush.bf16.msra.mxu0 %v3323
        %4610 = vmatpush.bf16.msra.mxu0 %v3315
        %4611 = vmatpush.bf16.msra.mxu0 %v3307
        %4612 = vmatpush.bf16.msra.mxu0 %v3299
        %4613 = vmatpush.bf16.msra.mxu0 %v3291
        %4614 = vmatpush.bf16.msra.mxu0 %v3283
        %4615 = vmatpush.bf16.msra.mxu0 %v3275
        %4616 = vmatmul.bf16.gmra.mxu0 %v1720
        %v4617 = vpop.f32.mrf.mxu0
        %v4618 = vadd.f32 %v1516, %v4617
        %v4619 = vpop.f32.mrf.mxu0
        %4620 = vdwg.mxu0
        %4621 = vmatpush.bf16.msra.mxu0 %v3395
        %4622 = vmatpush.bf16.msra.mxu0 %v3387
        %4623 = vmatpush.bf16.msra.mxu0 %v3379
        %4624 = vmatpush.bf16.msra.mxu0 %v3371
        %4625 = vmatpush.bf16.msra.mxu0 %v3363
        %4626 = vmatpush.bf16.msra.mxu0 %v3355
        %4627 = vmatpush.bf16.msra.mxu0 %v3347
        %4628 = vmatpush.bf16.msra.mxu0 %v3339
        %4629 = vmatmul.bf16.gmra.mxu0 %v1721
        %v4630 = vpop.f32.mrf.mxu0
        %v4631 = vadd.f32 %v4618, %v4630
        %v4632 = vpop.f32.mrf.mxu0
        %4633 = vdwg.mxu0
        %4634 = vmatpush.bf16.msra.mxu0 %v3459
        %4635 = vmatpush.bf16.msra.mxu0 %v3451
        %4636 = vmatpush.bf16.msra.mxu0 %v3443
        %4637 = vmatpush.bf16.msra.mxu0 %v3435
        %4638 = vmatpush.bf16.msra.mxu0 %v3427
        %4639 = vmatpush.bf16.msra.mxu0 %v3419
        %4640 = vmatpush.bf16.msra.mxu0 %v3411
        %4641 = vmatpush.bf16.msra.mxu0 %v3403
        %4642 = vmatmul.bf16.gmra.mxu0 %v1722
        %v4643 = vpop.f32.mrf.mxu0
        %v4644 = vadd.f32 %v4631, %v4643
        %v4645 = vpop.f32.mrf.mxu0
        %4646 = vdwg.mxu0
        %4647 = vmatpush.bf16.msra.mxu0 %v3523
        %4648 = vmatpush.bf16.msra.mxu0 %v3515
        %4649 = vmatpush.bf16.msra.mxu0 %v3507
        %4650 = vmatpush.bf16.msra.mxu0 %v3499
        %4651 = vmatpush.bf16.msra.mxu0 %v3491
        %4652 = vmatpush.bf16.msra.mxu0 %v3483
        %4653 = vmatpush.bf16.msra.mxu0 %v3475
        %4654 = vmatpush.bf16.msra.mxu0 %v3467
        %4655 = vmatmul.bf16.gmra.mxu0 %v1723
        %v4656 = vpop.f32.mrf.mxu0
        %v4657 = vadd.f32 %v4644, %v4656
        %v4658 = vpop.f32.mrf.mxu0
        %4659 = vdwg.mxu0
        %4660 = vmatpush.bf16.msra.mxu0 %v3587
        %4661 = vmatpush.bf16.msra.mxu0 %v3579
        %4662 = vmatpush.bf16.msra.mxu0 %v3571
        %4663 = vmatpush.bf16.msra.mxu0 %v3563
        %4664 = vmatpush.bf16.msra.mxu0 %v3555
        %4665 = vmatpush.bf16.msra.mxu0 %v3547
        %4666 = vmatpush.bf16.msra.mxu0 %v3539
        %4667 = vmatpush.bf16.msra.mxu0 %v3531
        %4668 = vmatmul.bf16.gmra.mxu0 %v1724
        %v4669 = vpop.f32.mrf.mxu0
        %v4670 = vadd.f32 %v4657, %v4669
        %v4671 = vpop.f32.mrf.mxu0
        %4672 = vdwg.mxu0
        %4673 = vmatpush.bf16.msra.mxu0 %v3651
        %4674 = vmatpush.bf16.msra.mxu0 %v3643
        %4675 = vmatpush.bf16.msra.mxu0 %v3635
        %4676 = vmatpush.bf16.msra.mxu0 %v3627
        %4677 = vmatpush.bf16.msra.mxu0 %v3619
        %4678 = vmatpush.bf16.msra.mxu0 %v3611
        %4679 = vmatpush.bf16.msra.mxu0 %v3603
        %4680 = vmatpush.bf16.msra.mxu0 %v3595
        %4681 = vmatmul.bf16.gmra.mxu0 %v1725
        %v4682 = vpop.f32.mrf.mxu0
        %v4683 = vadd.f32 %v4670, %v4682
        %v4684 = vpop.f32.mrf.mxu0
        %4685 = vdwg.mxu0
        %4686 = vmatpush.bf16.msra.mxu0 %v3715
        %4687 = vmatpush.bf16.msra.mxu0 %v3707
        %4688 = vmatpush.bf16.msra.mxu0 %v3699
        %4689 = vmatpush.bf16.msra.mxu0 %v3691
        %4690 = vmatpush.bf16.msra.mxu0 %v3683
        %4691 = vmatpush.bf16.msra.mxu0 %v3675
        %4692 = vmatpush.bf16.msra.mxu0 %v3667
        %4693 = vmatpush.bf16.msra.mxu0 %v3659
        %4694 = vmatmul.bf16.gmra.mxu0 %v1726
        %v4695 = vpop.f32.mrf.mxu0
        %v4696 = vadd.f32 %v4683, %v4695
        %v4697 = vpop.f32.mrf.mxu0
        %4698 = vdwg.mxu0
        %4699 = vmatpush.bf16.msra.mxu0 %v3779
        %4700 = vmatpush.bf16.msra.mxu0 %v3771
        %4701 = vmatpush.bf16.msra.mxu0 %v3763
        %4702 = vmatpush.bf16.msra.mxu0 %v3755
        %4703 = vmatpush.bf16.msra.mxu0 %v3747
        %4704 = vmatpush.bf16.msra.mxu0 %v3739
        %4705 = vmatpush.bf16.msra.mxu0 %v3731
        %4706 = vmatpush.bf16.msra.mxu0 %v3723
        %4707 = vmatmul.bf16.gmra.mxu0 %v1727
        %v4708 = vpop.f32.mrf.mxu0
        %v4709 = vadd.f32 %v4696, %v4708
        %v4710 = vpop.f32.mrf.mxu0
        %4711 = vdwg.mxu0
        %4712 = vmatpush.bf16.msra.mxu0 %v3332
        %4713 = vmatpush.bf16.msra.mxu0 %v3324
        %4714 = vmatpush.bf16.msra.mxu0 %v3316
        %4715 = vmatpush.bf16.msra.mxu0 %v3308
        %4716 = vmatpush.bf16.msra.mxu0 %v3300
        %4717 = vmatpush.bf16.msra.mxu0 %v3292
        %4718 = vmatpush.bf16.msra.mxu0 %v3284
        %4719 = vmatpush.bf16.msra.mxu0 %v3276
        %4720 = vmatmul.bf16.gmra.mxu0 %v1720
        %v4721 = vpop.f32.mrf.mxu0
        %v4722 = vadd.f32 %v1517, %v4721
        %v4723 = vpop.f32.mrf.mxu0
        %4724 = vdwg.mxu0
        %4725 = vmatpush.bf16.msra.mxu0 %v3396
        %4726 = vmatpush.bf16.msra.mxu0 %v3388
        %4727 = vmatpush.bf16.msra.mxu0 %v3380
        %4728 = vmatpush.bf16.msra.mxu0 %v3372
        %4729 = vmatpush.bf16.msra.mxu0 %v3364
        %4730 = vmatpush.bf16.msra.mxu0 %v3356
        %4731 = vmatpush.bf16.msra.mxu0 %v3348
        %4732 = vmatpush.bf16.msra.mxu0 %v3340
        %4733 = vmatmul.bf16.gmra.mxu0 %v1721
        %v4734 = vpop.f32.mrf.mxu0
        %v4735 = vadd.f32 %v4722, %v4734
        %v4736 = vpop.f32.mrf.mxu0
        %4737 = vdwg.mxu0
        %4738 = vmatpush.bf16.msra.mxu0 %v3460
        %4739 = vmatpush.bf16.msra.mxu0 %v3452
        %4740 = vmatpush.bf16.msra.mxu0 %v3444
        %4741 = vmatpush.bf16.msra.mxu0 %v3436
        %4742 = vmatpush.bf16.msra.mxu0 %v3428
        %4743 = vmatpush.bf16.msra.mxu0 %v3420
        %4744 = vmatpush.bf16.msra.mxu0 %v3412
        %4745 = vmatpush.bf16.msra.mxu0 %v3404
        %4746 = vmatmul.bf16.gmra.mxu0 %v1722
        %v4747 = vpop.f32.mrf.mxu0
        %v4748 = vadd.f32 %v4735, %v4747
        %v4749 = vpop.f32.mrf.mxu0
        %4750 = vdwg.mxu0
        %4751 = vmatpush.bf16.msra.mxu0 %v3524
        %4752 = vmatpush.bf16.msra.mxu0 %v3516
        %4753 = vmatpush.bf16.msra.mxu0 %v3508
        %4754 = vmatpush.bf16.msra.mxu0 %v3500
        %4755 = vmatpush.bf16.msra.mxu0 %v3492
        %4756 = vmatpush.bf16.msra.mxu0 %v3484
        %4757 = vmatpush.bf16.msra.mxu0 %v3476
        %4758 = vmatpush.bf16.msra.mxu0 %v3468
        %4759 = vmatmul.bf16.gmra.mxu0 %v1723
        %v4760 = vpop.f32.mrf.mxu0
        %v4761 = vadd.f32 %v4748, %v4760
        %v4762 = vpop.f32.mrf.mxu0
        %4763 = vdwg.mxu0
        %4764 = vmatpush.bf16.msra.mxu0 %v3588
        %4765 = vmatpush.bf16.msra.mxu0 %v3580
        %4766 = vmatpush.bf16.msra.mxu0 %v3572
        %4767 = vmatpush.bf16.msra.mxu0 %v3564
        %4768 = vmatpush.bf16.msra.mxu0 %v3556
        %4769 = vmatpush.bf16.msra.mxu0 %v3548
        %4770 = vmatpush.bf16.msra.mxu0 %v3540
        %4771 = vmatpush.bf16.msra.mxu0 %v3532
        %4772 = vmatmul.bf16.gmra.mxu0 %v1724
        %v4773 = vpop.f32.mrf.mxu0
        %v4774 = vadd.f32 %v4761, %v4773
        %v4775 = vpop.f32.mrf.mxu0
        %4776 = vdwg.mxu0
        %4777 = vmatpush.bf16.msra.mxu0 %v3652
        %4778 = vmatpush.bf16.msra.mxu0 %v3644
        %4779 = vmatpush.bf16.msra.mxu0 %v3636
        %4780 = vmatpush.bf16.msra.mxu0 %v3628
        %4781 = vmatpush.bf16.msra.mxu0 %v3620
        %4782 = vmatpush.bf16.msra.mxu0 %v3612
        %4783 = vmatpush.bf16.msra.mxu0 %v3604
        %4784 = vmatpush.bf16.msra.mxu0 %v3596
        %4785 = vmatmul.bf16.gmra.mxu0 %v1725
        %v4786 = vpop.f32.mrf.mxu0
        %v4787 = vadd.f32 %v4774, %v4786
        %v4788 = vpop.f32.mrf.mxu0
        %4789 = vdwg.mxu0
        %4790 = vmatpush.bf16.msra.mxu0 %v3716
        %4791 = vmatpush.bf16.msra.mxu0 %v3708
        %4792 = vmatpush.bf16.msra.mxu0 %v3700
        %4793 = vmatpush.bf16.msra.mxu0 %v3692
        %4794 = vmatpush.bf16.msra.mxu0 %v3684
        %4795 = vmatpush.bf16.msra.mxu0 %v3676
        %4796 = vmatpush.bf16.msra.mxu0 %v3668
        %4797 = vmatpush.bf16.msra.mxu0 %v3660
        %4798 = vmatmul.bf16.gmra.mxu0 %v1726
        %v4799 = vpop.f32.mrf.mxu0
        %v4800 = vadd.f32 %v4787, %v4799
        %v4801 = vpop.f32.mrf.mxu0
        %4802 = vdwg.mxu0
        %4803 = vmatpush.bf16.msra.mxu0 %v3780
        %4804 = vmatpush.bf16.msra.mxu0 %v3772
        %4805 = vmatpush.bf16.msra.mxu0 %v3764
        %4806 = vmatpush.bf16.msra.mxu0 %v3756
        %4807 = vmatpush.bf16.msra.mxu0 %v3748
        %4808 = vmatpush.bf16.msra.mxu0 %v3740
        %4809 = vmatpush.bf16.msra.mxu0 %v3732
        %4810 = vmatpush.bf16.msra.mxu0 %v3724
        %4811 = vmatmul.bf16.gmra.mxu0 %v1727
        %v4812 = vpop.f32.mrf.mxu0
        %v4813 = vadd.f32 %v4800, %v4812
        %v4814 = vpop.f32.mrf.mxu0
        %4815 = vdwg.mxu0
        %4816 = vmatpush.bf16.msra.mxu0 %v3333
        %4817 = vmatpush.bf16.msra.mxu0 %v3325
        %4818 = vmatpush.bf16.msra.mxu0 %v3317
        %4819 = vmatpush.bf16.msra.mxu0 %v3309
        %4820 = vmatpush.bf16.msra.mxu0 %v3301
        %4821 = vmatpush.bf16.msra.mxu0 %v3293
        %4822 = vmatpush.bf16.msra.mxu0 %v3285
        %4823 = vmatpush.bf16.msra.mxu0 %v3277
        %4824 = vmatmul.bf16.gmra.mxu0 %v1720
        %v4825 = vpop.f32.mrf.mxu0
        %v4826 = vadd.f32 %v1518, %v4825
        %v4827 = vpop.f32.mrf.mxu0
        %4828 = vdwg.mxu0
        %4829 = vmatpush.bf16.msra.mxu0 %v3397
        %4830 = vmatpush.bf16.msra.mxu0 %v3389
        %4831 = vmatpush.bf16.msra.mxu0 %v3381
        %4832 = vmatpush.bf16.msra.mxu0 %v3373
        %4833 = vmatpush.bf16.msra.mxu0 %v3365
        %4834 = vmatpush.bf16.msra.mxu0 %v3357
        %4835 = vmatpush.bf16.msra.mxu0 %v3349
        %4836 = vmatpush.bf16.msra.mxu0 %v3341
        %4837 = vmatmul.bf16.gmra.mxu0 %v1721
        %v4838 = vpop.f32.mrf.mxu0
        %v4839 = vadd.f32 %v4826, %v4838
        %v4840 = vpop.f32.mrf.mxu0
        %4841 = vdwg.mxu0
        %4842 = vmatpush.bf16.msra.mxu0 %v3461
        %4843 = vmatpush.bf16.msra.mxu0 %v3453
        %4844 = vmatpush.bf16.msra.mxu0 %v3445
        %4845 = vmatpush.bf16.msra.mxu0 %v3437
        %4846 = vmatpush.bf16.msra.mxu0 %v3429
        %4847 = vmatpush.bf16.msra.mxu0 %v3421
        %4848 = vmatpush.bf16.msra.mxu0 %v3413
        %4849 = vmatpush.bf16.msra.mxu0 %v3405
        %4850 = vmatmul.bf16.gmra.mxu0 %v1722
        %v4851 = vpop.f32.mrf.mxu0
        %v4852 = vadd.f32 %v4839, %v4851
        %v4853 = vpop.f32.mrf.mxu0
        %4854 = vdwg.mxu0
        %4855 = vmatpush.bf16.msra.mxu0 %v3525
        %4856 = vmatpush.bf16.msra.mxu0 %v3517
        %4857 = vmatpush.bf16.msra.mxu0 %v3509
        %4858 = vmatpush.bf16.msra.mxu0 %v3501
        %4859 = vmatpush.bf16.msra.mxu0 %v3493
        %4860 = vmatpush.bf16.msra.mxu0 %v3485
        %4861 = vmatpush.bf16.msra.mxu0 %v3477
        %4862 = vmatpush.bf16.msra.mxu0 %v3469
        %4863 = vmatmul.bf16.gmra.mxu0 %v1723
        %v4864 = vpop.f32.mrf.mxu0
        %v4865 = vadd.f32 %v4852, %v4864
        %v4866 = vpop.f32.mrf.mxu0
        %4867 = vdwg.mxu0
        %4868 = vmatpush.bf16.msra.mxu0 %v3589
        %4869 = vmatpush.bf16.msra.mxu0 %v3581
        %4870 = vmatpush.bf16.msra.mxu0 %v3573
        %4871 = vmatpush.bf16.msra.mxu0 %v3565
        %4872 = vmatpush.bf16.msra.mxu0 %v3557
        %4873 = vmatpush.bf16.msra.mxu0 %v3549
        %4874 = vmatpush.bf16.msra.mxu0 %v3541
        %4875 = vmatpush.bf16.msra.mxu0 %v3533
        %4876 = vmatmul.bf16.gmra.mxu0 %v1724
        %v4877 = vpop.f32.mrf.mxu0
        %v4878 = vadd.f32 %v4865, %v4877
        %v4879 = vpop.f32.mrf.mxu0
        %4880 = vdwg.mxu0
        %4881 = vmatpush.bf16.msra.mxu0 %v3653
        %4882 = vmatpush.bf16.msra.mxu0 %v3645
        %4883 = vmatpush.bf16.msra.mxu0 %v3637
        %4884 = vmatpush.bf16.msra.mxu0 %v3629
        %4885 = vmatpush.bf16.msra.mxu0 %v3621
        %4886 = vmatpush.bf16.msra.mxu0 %v3613
        %4887 = vmatpush.bf16.msra.mxu0 %v3605
        %4888 = vmatpush.bf16.msra.mxu0 %v3597
        %4889 = vmatmul.bf16.gmra.mxu0 %v1725
        %v4890 = vpop.f32.mrf.mxu0
        %v4891 = vadd.f32 %v4878, %v4890
        %v4892 = vpop.f32.mrf.mxu0
        %4893 = vdwg.mxu0
        %4894 = vmatpush.bf16.msra.mxu0 %v3717
        %4895 = vmatpush.bf16.msra.mxu0 %v3709
        %4896 = vmatpush.bf16.msra.mxu0 %v3701
        %4897 = vmatpush.bf16.msra.mxu0 %v3693
        %4898 = vmatpush.bf16.msra.mxu0 %v3685
        %4899 = vmatpush.bf16.msra.mxu0 %v3677
        %4900 = vmatpush.bf16.msra.mxu0 %v3669
        %4901 = vmatpush.bf16.msra.mxu0 %v3661
        %4902 = vmatmul.bf16.gmra.mxu0 %v1726
        %v4903 = vpop.f32.mrf.mxu0
        %v4904 = vadd.f32 %v4891, %v4903
        %v4905 = vpop.f32.mrf.mxu0
        %4906 = vdwg.mxu0
        %4907 = vmatpush.bf16.msra.mxu0 %v3781
        %4908 = vmatpush.bf16.msra.mxu0 %v3773
        %4909 = vmatpush.bf16.msra.mxu0 %v3765
        %4910 = vmatpush.bf16.msra.mxu0 %v3757
        %4911 = vmatpush.bf16.msra.mxu0 %v3749
        %4912 = vmatpush.bf16.msra.mxu0 %v3741
        %4913 = vmatpush.bf16.msra.mxu0 %v3733
        %4914 = vmatpush.bf16.msra.mxu0 %v3725
        %4915 = vmatmul.bf16.gmra.mxu0 %v1727
        %v4916 = vpop.f32.mrf.mxu0
        %v4917 = vadd.f32 %v4904, %v4916
        %v4918 = vpop.f32.mrf.mxu0
        %4919 = vdwg.mxu0
        %4920 = vmatpush.bf16.msra.mxu0 %v3334
        %4921 = vmatpush.bf16.msra.mxu0 %v3326
        %4922 = vmatpush.bf16.msra.mxu0 %v3318
        %4923 = vmatpush.bf16.msra.mxu0 %v3310
        %4924 = vmatpush.bf16.msra.mxu0 %v3302
        %4925 = vmatpush.bf16.msra.mxu0 %v3294
        %4926 = vmatpush.bf16.msra.mxu0 %v3286
        %4927 = vmatpush.bf16.msra.mxu0 %v3278
        %4928 = vmatmul.bf16.gmra.mxu0 %v1720
        %v4929 = vpop.f32.mrf.mxu0
        %v4930 = vadd.f32 %v1519, %v4929
        %v4931 = vpop.f32.mrf.mxu0
        %4932 = vdwg.mxu0
        %4933 = vmatpush.bf16.msra.mxu0 %v3398
        %4934 = vmatpush.bf16.msra.mxu0 %v3390
        %4935 = vmatpush.bf16.msra.mxu0 %v3382
        %4936 = vmatpush.bf16.msra.mxu0 %v3374
        %4937 = vmatpush.bf16.msra.mxu0 %v3366
        %4938 = vmatpush.bf16.msra.mxu0 %v3358
        %4939 = vmatpush.bf16.msra.mxu0 %v3350
        %4940 = vmatpush.bf16.msra.mxu0 %v3342
        %4941 = vmatmul.bf16.gmra.mxu0 %v1721
        %v4942 = vpop.f32.mrf.mxu0
        %v4943 = vadd.f32 %v4930, %v4942
        %v4944 = vpop.f32.mrf.mxu0
        %4945 = vdwg.mxu0
        %4946 = vmatpush.bf16.msra.mxu0 %v3462
        %4947 = vmatpush.bf16.msra.mxu0 %v3454
        %4948 = vmatpush.bf16.msra.mxu0 %v3446
        %4949 = vmatpush.bf16.msra.mxu0 %v3438
        %4950 = vmatpush.bf16.msra.mxu0 %v3430
        %4951 = vmatpush.bf16.msra.mxu0 %v3422
        %4952 = vmatpush.bf16.msra.mxu0 %v3414
        %4953 = vmatpush.bf16.msra.mxu0 %v3406
        %4954 = vmatmul.bf16.gmra.mxu0 %v1722
        %v4955 = vpop.f32.mrf.mxu0
        %v4956 = vadd.f32 %v4943, %v4955
        %v4957 = vpop.f32.mrf.mxu0
        %4958 = vdwg.mxu0
        %4959 = vmatpush.bf16.msra.mxu0 %v3526
        %4960 = vmatpush.bf16.msra.mxu0 %v3518
        %4961 = vmatpush.bf16.msra.mxu0 %v3510
        %4962 = vmatpush.bf16.msra.mxu0 %v3502
        %4963 = vmatpush.bf16.msra.mxu0 %v3494
        %4964 = vmatpush.bf16.msra.mxu0 %v3486
        %4965 = vmatpush.bf16.msra.mxu0 %v3478
        %4966 = vmatpush.bf16.msra.mxu0 %v3470
        %4967 = vmatmul.bf16.gmra.mxu0 %v1723
        %v4968 = vpop.f32.mrf.mxu0
        %v4969 = vadd.f32 %v4956, %v4968
        %v4970 = vpop.f32.mrf.mxu0
        %4971 = vdwg.mxu0
        %4972 = vmatpush.bf16.msra.mxu0 %v3590
        %4973 = vmatpush.bf16.msra.mxu0 %v3582
        %4974 = vmatpush.bf16.msra.mxu0 %v3574
        %4975 = vmatpush.bf16.msra.mxu0 %v3566
        %4976 = vmatpush.bf16.msra.mxu0 %v3558
        %4977 = vmatpush.bf16.msra.mxu0 %v3550
        %4978 = vmatpush.bf16.msra.mxu0 %v3542
        %4979 = vmatpush.bf16.msra.mxu0 %v3534
        %4980 = vmatmul.bf16.gmra.mxu0 %v1724
        %v4981 = vpop.f32.mrf.mxu0
        %v4982 = vadd.f32 %v4969, %v4981
        %v4983 = vpop.f32.mrf.mxu0
        %4984 = vdwg.mxu0
        %4985 = vmatpush.bf16.msra.mxu0 %v3654
        %4986 = vmatpush.bf16.msra.mxu0 %v3646
        %4987 = vmatpush.bf16.msra.mxu0 %v3638
        %4988 = vmatpush.bf16.msra.mxu0 %v3630
        %4989 = vmatpush.bf16.msra.mxu0 %v3622
        %4990 = vmatpush.bf16.msra.mxu0 %v3614
        %4991 = vmatpush.bf16.msra.mxu0 %v3606
        %4992 = vmatpush.bf16.msra.mxu0 %v3598
        %4993 = vmatmul.bf16.gmra.mxu0 %v1725
        %v4994 = vpop.f32.mrf.mxu0
        %v4995 = vadd.f32 %v4982, %v4994
        %v4996 = vpop.f32.mrf.mxu0
        %4997 = vdwg.mxu0
        %4998 = vmatpush.bf16.msra.mxu0 %v3718
        %4999 = vmatpush.bf16.msra.mxu0 %v3710
        %5000 = vmatpush.bf16.msra.mxu0 %v3702
        %5001 = vmatpush.bf16.msra.mxu0 %v3694
        %5002 = vmatpush.bf16.msra.mxu0 %v3686
        %5003 = vmatpush.bf16.msra.mxu0 %v3678
        %5004 = vmatpush.bf16.msra.mxu0 %v3670
        %5005 = vmatpush.bf16.msra.mxu0 %v3662
        %5006 = vmatmul.bf16.gmra.mxu0 %v1726
        %v5007 = vpop.f32.mrf.mxu0
        %v5008 = vadd.f32 %v4995, %v5007
        %v5009 = vpop.f32.mrf.mxu0
        %5010 = vdwg.mxu0
        %5011 = vmatpush.bf16.msra.mxu0 %v3782
        %5012 = vmatpush.bf16.msra.mxu0 %v3774
        %5013 = vmatpush.bf16.msra.mxu0 %v3766
        %5014 = vmatpush.bf16.msra.mxu0 %v3758
        %5015 = vmatpush.bf16.msra.mxu0 %v3750
        %5016 = vmatpush.bf16.msra.mxu0 %v3742
        %5017 = vmatpush.bf16.msra.mxu0 %v3734
        %5018 = vmatpush.bf16.msra.mxu0 %v3726
        %5019 = vmatmul.bf16.gmra.mxu0 %v1727
        %v5020 = vpop.f32.mrf.mxu0
        %v5021 = vadd.f32 %v5008, %v5020
        %v5022 = vpop.f32.mrf.mxu0
        %5023 = vdwg.mxu0
        %5024 = vmatpush.bf16.msra.mxu0 %v3335
        %5025 = vmatpush.bf16.msra.mxu0 %v3327
        %5026 = vmatpush.bf16.msra.mxu0 %v3319
        %5027 = vmatpush.bf16.msra.mxu0 %v3311
        %5028 = vmatpush.bf16.msra.mxu0 %v3303
        %5029 = vmatpush.bf16.msra.mxu0 %v3295
        %5030 = vmatpush.bf16.msra.mxu0 %v3287
        %5031 = vmatpush.bf16.msra.mxu0 %v3279
        %5032 = vmatmul.bf16.gmra.mxu0 %v1720
        %v5033 = vpop.f32.mrf.mxu0
        %v5034 = vadd.f32 %v1520, %v5033
        %v5035 = vpop.f32.mrf.mxu0
        %5036 = vdwg.mxu0
        %5037 = vmatpush.bf16.msra.mxu0 %v3399
        %5038 = vmatpush.bf16.msra.mxu0 %v3391
        %5039 = vmatpush.bf16.msra.mxu0 %v3383
        %5040 = vmatpush.bf16.msra.mxu0 %v3375
        %5041 = vmatpush.bf16.msra.mxu0 %v3367
        %5042 = vmatpush.bf16.msra.mxu0 %v3359
        %5043 = vmatpush.bf16.msra.mxu0 %v3351
        %5044 = vmatpush.bf16.msra.mxu0 %v3343
        %5045 = vmatmul.bf16.gmra.mxu0 %v1721
        %v5046 = vpop.f32.mrf.mxu0
        %v5047 = vadd.f32 %v5034, %v5046
        %v5048 = vpop.f32.mrf.mxu0
        %5049 = vdwg.mxu0
        %5050 = vmatpush.bf16.msra.mxu0 %v3463
        %5051 = vmatpush.bf16.msra.mxu0 %v3455
        %5052 = vmatpush.bf16.msra.mxu0 %v3447
        %5053 = vmatpush.bf16.msra.mxu0 %v3439
        %5054 = vmatpush.bf16.msra.mxu0 %v3431
        %5055 = vmatpush.bf16.msra.mxu0 %v3423
        %5056 = vmatpush.bf16.msra.mxu0 %v3415
        %5057 = vmatpush.bf16.msra.mxu0 %v3407
        %5058 = vmatmul.bf16.gmra.mxu0 %v1722
        %v5059 = vpop.f32.mrf.mxu0
        %v5060 = vadd.f32 %v5047, %v5059
        %v5061 = vpop.f32.mrf.mxu0
        %5062 = vdwg.mxu0
        %5063 = vmatpush.bf16.msra.mxu0 %v3527
        %5064 = vmatpush.bf16.msra.mxu0 %v3519
        %5065 = vmatpush.bf16.msra.mxu0 %v3511
        %5066 = vmatpush.bf16.msra.mxu0 %v3503
        %5067 = vmatpush.bf16.msra.mxu0 %v3495
        %5068 = vmatpush.bf16.msra.mxu0 %v3487
        %5069 = vmatpush.bf16.msra.mxu0 %v3479
        %5070 = vmatpush.bf16.msra.mxu0 %v3471
        %5071 = vmatmul.bf16.gmra.mxu0 %v1723
        %v5072 = vpop.f32.mrf.mxu0
        %v5073 = vadd.f32 %v5060, %v5072
        %v5074 = vpop.f32.mrf.mxu0
        %5075 = vdwg.mxu0
        %5076 = vmatpush.bf16.msra.mxu0 %v3591
        %5077 = vmatpush.bf16.msra.mxu0 %v3583
        %5078 = vmatpush.bf16.msra.mxu0 %v3575
        %5079 = vmatpush.bf16.msra.mxu0 %v3567
        %5080 = vmatpush.bf16.msra.mxu0 %v3559
        %5081 = vmatpush.bf16.msra.mxu0 %v3551
        %5082 = vmatpush.bf16.msra.mxu0 %v3543
        %5083 = vmatpush.bf16.msra.mxu0 %v3535
        %5084 = vmatmul.bf16.gmra.mxu0 %v1724
        %v5085 = vpop.f32.mrf.mxu0
        %v5086 = vadd.f32 %v5073, %v5085
        %v5087 = vpop.f32.mrf.mxu0
        %5088 = vdwg.mxu0
        %5089 = vmatpush.bf16.msra.mxu0 %v3655
        %5090 = vmatpush.bf16.msra.mxu0 %v3647
        %5091 = vmatpush.bf16.msra.mxu0 %v3639
        %5092 = vmatpush.bf16.msra.mxu0 %v3631
        %5093 = vmatpush.bf16.msra.mxu0 %v3623
        %5094 = vmatpush.bf16.msra.mxu0 %v3615
        %5095 = vmatpush.bf16.msra.mxu0 %v3607
        %5096 = vmatpush.bf16.msra.mxu0 %v3599
        %5097 = vmatmul.bf16.gmra.mxu0 %v1725
        %v5098 = vpop.f32.mrf.mxu0
        %v5099 = vadd.f32 %v5086, %v5098
        %v5100 = vpop.f32.mrf.mxu0
        %5101 = vdwg.mxu0
        %5102 = vmatpush.bf16.msra.mxu0 %v3719
        %5103 = vmatpush.bf16.msra.mxu0 %v3711
        %5104 = vmatpush.bf16.msra.mxu0 %v3703
        %5105 = vmatpush.bf16.msra.mxu0 %v3695
        %5106 = vmatpush.bf16.msra.mxu0 %v3687
        %5107 = vmatpush.bf16.msra.mxu0 %v3679
        %5108 = vmatpush.bf16.msra.mxu0 %v3671
        %5109 = vmatpush.bf16.msra.mxu0 %v3663
        %5110 = vmatmul.bf16.gmra.mxu0 %v1726
        %v5111 = vpop.f32.mrf.mxu0
        %v5112 = vadd.f32 %v5099, %v5111
        %v5113 = vpop.f32.mrf.mxu0
        %5114 = vdwg.mxu0
        %5115 = vmatpush.bf16.msra.mxu0 %v3783
        %5116 = vmatpush.bf16.msra.mxu0 %v3775
        %5117 = vmatpush.bf16.msra.mxu0 %v3767
        %5118 = vmatpush.bf16.msra.mxu0 %v3759
        %5119 = vmatpush.bf16.msra.mxu0 %v3751
        %5120 = vmatpush.bf16.msra.mxu0 %v3743
        %5121 = vmatpush.bf16.msra.mxu0 %v3735
        %5122 = vmatpush.bf16.msra.mxu0 %v3727
        %5123 = vmatmul.bf16.gmra.mxu0 %v1727
        %v5124 = vpop.f32.mrf.mxu0
        %v5125 = vadd.f32 %v5112, %v5124
        %v5126 = vpop.f32.mrf.mxu0
        %5127 = vdwg.mxu0
        %v5128 = vmul.f32 %v4397, %v4397
        %v5129 = vmul.f32 %v4501, %v4501
        %v5130 = vmul.f32 %v4605, %v4605
        %v5131 = vmul.f32 %v4709, %v4709
        %v5132 = vmul.f32 %v4813, %v4813
        %v5133 = vmul.f32 %v4917, %v4917
        %v5134 = vmul.f32 %v5021, %v5021
        %v5135 = vmul.f32 %v5125, %v5125
        %v5136 = vadd.f32 %v5128, %v5129
        %v5137 = vadd.f32 %v5136, %v5130
        %v5138 = vadd.f32 %v5137, %v5131
        %v5139 = vadd.f32 %v5138, %v5132
        %v5140 = vadd.f32 %v5139, %v5133
        %v5141 = vadd.f32 %v5140, %v5134
        %v5142 = vadd.f32 %v5141, %v5135
        %5143 = vadd.xlane.f32.xlu0 %v5142
        %v5144 = vpop.xlane.xlu0 %5143
        %v5145 = vrsqrt.pop %v5144
        %v5146 = vmul.f32 %v5145, %v5144
        %v5147 = vmul.f32 %v5146, %v5145
        %v5148 = vmul.f32 0.5, %v5147
        %v5149 = vsub.f32 1.5, %v5148
        %v5150 = vmul.f32 %v5145, %v5149
        %vm5151 = vweird.f32 %v5144
        %vm5152 = vweird.f32 %v5145
        %vm5153 = vmor %vm5151, %vm5152
        %v5154 = vsel %vm5153, %v5145, %v5150
        %v5155 = vmul.f32 %v4397, %v5154
        %v5156 = vmul.f32 %v4501, %v5154
        %v5157 = vmul.f32 %v4605, %v5154
        %v5158 = vmul.f32 %v4709, %v5154
        %v5159 = vmul.f32 %v4813, %v5154
        %v5160 = vmul.f32 %v4917, %v5154
        %v5161 = vmul.f32 %v5021, %v5154
        %v5162 = vmul.f32 %v5125, %v5154
        %5163 = vst [vmem:[%s222] sm:$0xff] %v5155
        %5164 = vst [vmem:[%s222 + $0x8] sm:$0xff] %v5156
        %5165 = vst [vmem:[%s222 + $0x10] sm:$0xff] %v5157
        %5166 = vst [vmem:[%s222 + $0x18] sm:$0xff] %v5158
        %5167 = vst [vmem:[%s222 + $0x20] sm:$0xff] %v5159
        %5168 = vst [vmem:[%s222 + $0x28] sm:$0xff] %v5160
        %5169 = vst [vmem:[%s222 + $0x30] sm:$0xff] %v5161
        %5170 = vst [vmem:[%s222 + $0x38] sm:$0xff] %v5162
        %s5171 = sand.u32 %s97, 1
        %s5172 = scalar_lea.sflag [#allocation4], %s5171
        %s5173 = sand.u32 %s97, 1
        %s5174 = smul.addr %s5173, 64
        %s5175 = scalar_lea.vmem [#allocation8], %s5174
        // Predicated region
        $region45: #{tpu_custom_call.1} parent=31 // pred_check
          %p5176 = pneg %p107
        $region46: #{tpu_custom_call.1} parent=31 // pred_check_branch
          %5178 = sbr.rel (%p5176) target = $region48
        $region47: #{tpu_custom_call.1} parent=31 // pred_region
          %5180 = vsyncadd %s5172, 0
          %s5181 = smul.addr %s21, 8
          %s5182 = smul.addr %s5181, 8
          %s5183 = scalar_lea.hbm %s3, %s5182
          %s5185 = sshll.u32 %s5175, 4
          %s5186 = int_to_ptr.vmem [resolvable:$true] %s5185
          %s5187 = sshll.u32 %s5183, 4
          %s5188 = int_to_ptr.hbm [resolvable:$true] %s5187
          %5190 = dma.vmem_to_hbm [thread:$0]  %s5186, 1024, %s5188, %s5172
        $region48: #{tpu_custom_call.1} parent=31 // pred_fallthru
          _
      $region32: #{tpu_custom_call.1} parent=5 // pred_fallthru
        _
      %p5191 = scmp.le.s32.totalorder 2, %s16
      // Predicated region
      $region49: #{tpu_custom_call.1} parent=5 // pred_check
        %p5192 = pneg %p5191
      $region50: #{tpu_custom_call.1} parent=5 // pred_check_branch
        %5194 = sbr.rel (%p5192) target = $region52
      $region51: #{tpu_custom_call.1} parent=5 // pred_region
        %s5195 = ssub.s32 %s16, 2
        // Predicated region
        $region53: #{tpu_custom_call.1} parent=51 // pred_check
          %p5196 = pneg %p113
        $region54: #{tpu_custom_call.1} parent=51 // pred_check_branch
          %5198 = sbr.rel (%p5196) target = $region56
        $region55: #{tpu_custom_call.1} parent=51 // pred_region
          %s5199 = sand.u32 %s98, 1
          %s5200 = scalar_lea.sflag [#allocation4], %s5199
          %s5201 = sand.u32 %s98, 1
          %s5202 = smul.addr %s5201, 64
          %s5203 = scalar_lea.vmem [#allocation8], %s5202
          %5205 = dma.done %s5200, 1024
        $region56: #{tpu_custom_call.1} parent=51 // pred_fallthru
          _
      $region52: #{tpu_custom_call.1} parent=5 // pred_fallthru
        _
    $region6: #{tpu_custom_call.1} parent=1 // loop_footer
      %s20 = sadd.s32 1, %s16
    $region7: #{tpu_custom_call.1} parent=1 // loop_footer_branch
      %15 = sbr.rel target = $region3
    $region8: #{tpu_custom_call.1} parent=1 // loop_exit
      _
    %5206 = vsyncpa [#allocation3], 1
    %s5207 = scalar_lea.sflag [#allocation3], 1
    %5208 = vsyncpa %s5207, 1
    %5209 = vsyncpa [#allocation6], 1
    %5210 = vsyncpa [#allocation4], 1
    %s5211 = scalar_lea.sflag [#allocation4], 1
    %5212 = vsyncpa %s5211, 1

</llo_original>
